<compile_context>
chip_gen: v5e
topology: v5e:2x2
jax: 0.10.0
libtpu: 0.0.40
codegen_flags: <defaults>
</compile_context>

<pallas_src>
import functools
import math

import jax
import jax.numpy as jnp
import numpy as np
from jax.experimental import pallas as pl
from jax.experimental.pallas import tpu as pltpu


def _attn_block_kernel(x_hbm_ref, x_q_ref, consts_ref, gmat_ref,
                       wq_ref, wk_ref, wv_ref, wp_ref,
                       out_ref,
                       k_t_scratch, v_scratch, gn_scale_s, gn_shift_s,
                       x_buf, x_sem, m_s, l_s, acc_s,
                       *, num_groups, eps, tkv, kv_unroll):
    TQ, C = out_ref.shape
    L = x_hbm_ref.shape[1]
    num_kv = L // tkv
    b = pl.program_id(0)
    qi = pl.program_id(1)

    def _fetch(j, slot):
        start = pl.multiple_of(j * tkv, tkv)
        pltpu.make_async_copy(x_hbm_ref.at[b, pl.ds(start, tkv), :],
                              x_buf.at[slot], x_sem.at[slot]).start()

    def _wait(j, slot):
        start = pl.multiple_of(j * tkv, tkv)
        pltpu.make_async_copy(x_hbm_ref.at[b, pl.ds(start, tkv), :],
                              x_buf.at[slot], x_sem.at[slot]).wait()

    # ---------------- prologue: once per batch element (qi == 0) ----------------
    @pl.when(qi == 0)
    def _prologue():
        gamma = consts_ref[0:1, :]
        beta = consts_ref[1:2, :]
        bk = consts_ref[3:4, :]
        bv = consts_ref[4:5, :]

        # Pass 1: stream x from HBM in (TKV, C) tiles, accumulate per-channel sums.
        _fetch(0, 0)

        def stats_step(j, carry):
            s1, s2 = carry
            slot = j & 1
            _wait(j, slot)

            @pl.when(j + 1 < num_kv)
            def _():
                _fetch(j + 1, 1 - slot)

            @pl.when(j + 1 == num_kv)
            def _():
                # Prefetch tile 0 again for the K/V pass; it lands in the slot
                # consumed one iteration ago, so it is always safe.
                _fetch(0, 1 - slot)

            xt = x_buf[slot]
            return (s1 + jnp.sum(xt, axis=0, keepdims=True),
                    s2 + jnp.sum(xt * xt, axis=0, keepdims=True))

        zero = jnp.zeros((1, C), jnp.float32)
        sum_c, sumsq_c = jax.lax.fori_loop(0, num_kv, stats_step, (zero, zero))

        # Host-precomputed group-mixing matrix turns per-channel sums into
        # per-group sums broadcast back per channel (no in-kernel iota temps).
        inv_cnt = 1.0 / float(L * (C // num_groups))
        mean_c = jnp.dot(sum_c, gmat_ref[...],
                         preferred_element_type=jnp.float32) * inv_cnt
        mnsq_c = jnp.dot(sumsq_c, gmat_ref[...],
                         preferred_element_type=jnp.float32) * inv_cnt
        # NOTE: single-pass E[x^2]-E[x]^2 in f32 (PyTorch GroupNorm biased var).
        var_c = mnsq_c - mean_c * mean_c
        inv_c = jax.lax.rsqrt(var_c + eps)
        scale_c = inv_c * gamma
        shift_c = beta - mean_c * scale_c
        gn_scale_s[...] = scale_c
        gn_shift_s[...] = shift_c

        # Pass 2: stream x again; K/V projections into resident bf16 VMEM scratch.
        @pl.loop(0, num_kv)
        def _kv_proj(j):
            slot = (num_kv + j) & 1
            _wait(j, slot)

            @pl.when(j + 1 < num_kv)
            def _():
                _fetch(j + 1, 1 - slot)

            start = pl.multiple_of(j * tkv, tkv)
            ht = (x_buf[slot] * scale_c + shift_c).astype(jnp.bfloat16)
            kt = jnp.dot(ht, wk_ref[...], preferred_element_type=jnp.float32) + bk
            vt = jnp.dot(ht, wv_ref[...], preferred_element_type=jnp.float32) + bv
            # K stored transposed once per batch element -> score matmul below is
            # a native (TQ,C)x(C,TKV) contraction; the transpose cost is amortized
            # over all query tiles.
            k_t_scratch[:, pl.ds(start, tkv)] = kt.T.astype(jnp.bfloat16)
            v_scratch[pl.ds(start, tkv), :] = vt.astype(jnp.bfloat16)

    # ---------------- per query tile ----------------
    scale_c = gn_scale_s[...]
    shift_c = gn_shift_s[...]
    h_q = (x_q_ref[...] * scale_c + shift_c).astype(jnp.bfloat16)
    bq = consts_ref[2:3, :]                      # 1/sqrt(C) already folded in
    q = jnp.dot(h_q, wq_ref[...], preferred_element_type=jnp.float32) + bq
    q_bf = q.astype(jnp.bfloat16)

    # Flash attention with VMEM-scratch accumulators (no big fori_loop carry).
    m_s[...] = jnp.full((TQ, 1), -jnp.inf, jnp.float32)
    l_s[...] = jnp.zeros((TQ, 1), jnp.float32)
    acc_s[...] = jnp.zeros((TQ, C), jnp.float32)

    def kv_step(j, carry):
        start = pl.multiple_of(j * tkv, tkv)
        k_t = k_t_scratch[:, pl.ds(start, tkv)]          # (C, tkv) bf16
        v_t = v_scratch[pl.ds(start, tkv), :]            # (tkv, C) bf16
        s = jnp.dot(q_bf, k_t, preferred_element_type=jnp.float32)   # (TQ, tkv)
        m_prev = m_s[...]
        m_new = jnp.maximum(m_prev, jnp.max(s, axis=-1, keepdims=True))
        alpha = jnp.exp(m_prev - m_new)
        p = jnp.exp(s - m_new)
        l_s[...] = alpha * l_s[...] + jnp.sum(p, axis=-1, keepdims=True)
        acc_s[...] = alpha * acc_s[...] + jnp.dot(p.astype(jnp.bfloat16), v_t,
                                                  preferred_element_type=jnp.float32)
        m_s[...] = m_new
        return carry

    unroll = kv_unroll if (kv_unroll > 1 and num_kv > kv_unroll
                           and num_kv % kv_unroll == 0) else 1
    jax.lax.fori_loop(0, num_kv, kv_step, 0, unroll=unroll)

    # Normalize after the PV matmul: (TQ, C) multiplies, EUP reciprocal.
    o = acc_s[...] * pl.reciprocal(l_s[...], approx=True)
    bp = consts_ref[5:6, :]
    proj = jnp.dot(o.astype(jnp.bfloat16), wp_ref[...],
                   preferred_element_type=jnp.float32) + bp
    # Re-read the x tile for the residual instead of holding it live across the loop.
    out_ref[...] = x_q_ref[...] + proj


def _pick_tile(length, target):
    """Largest multiple of 8 <= target that divides length (fallback: full length)."""
    if length <= target:
        return length
    t = (target // 8) * 8
    while t >= 8:
        if length % t == 0:
            return t
        t -= 8
    return length


def _default_tiles():
    # v5e's MXU is 4x(128x128): a 128-row query tile loses no MXU efficiency
    # while halving score-tile / accumulator pressure (v5e also has 1 vst slot).
    try:
        kind = jax.devices()[0].device_kind.lower()
    except Exception:
        kind = ""
    if "v5" in kind:
        return 128, 256
    return 256, 512


def _vmem_limit_bytes(L, C, TQ, TKV):
    try:
        cap = int(pltpu.get_tpu_info().vmem_capacity_bytes)
    except Exception:
        cap = 64 << 20            # conservative: v7x physical VMEM per TensorCore
    est = (
        2 * 2 * TQ * C * 4        # x q-tile + out tile (double-buffered)
        + 2 * 8 * C * 4           # packed gamma/beta/biases
        + 2 * C * C * 4           # group-mix matrix
        + 2 * 4 * C * C * 2       # q/k/v/proj weights (worst case double-buffered)
        + 2 * L * C * 2           # K^T and V scratch (bf16)
        + 2 * TKV * C * 4         # streamed x double buffer
        + TQ * C * 4              # flash acc scratch
        + 2 * TQ * 128 * 4        # flash m / l scratch (lane padded)
        + 6 * TQ * max(TKV, C) * 4  # score / prob / temporaries
        + (4 << 20)               # compiler scratch / spill headroom
    )
    return int(min(max(est, 32 << 20), int(0.9 * cap)))


def attn_block_forward_nlc(x_lc, params, num_groups=32, eps=1e-6,
                           tq=None, tkv=None, kv_unroll=2):
    """AttnBlock forward on channels-last activations: (N, L, C) -> (N, L, C)."""
    N, L, C = x_lc.shape
    assert C % num_groups == 0, "GroupNorm requires C divisible by num_groups"
    if tq is None or tkv is None:
        d_tq, d_tkv = _default_tiles()
        tq = tq if tq is not None else d_tq
        tkv = tkv if tkv is not None else d_tkv
    TQ = _pick_tile(L, tq)
    TKV = _pick_tile(L, tkv)
    num_q = L // TQ

    f32 = jnp.float32
    scale = 1.0 / math.sqrt(C)
    # Fold the 1/sqrt(C) attention scale into the q projection; bf16 MXU weights.
    wq = (params["wq"].astype(f32).T * scale).astype(jnp.bfloat16)
    wk = params["wk"].astype(f32).T.astype(jnp.bfloat16)
    wv = params["wv"].astype(f32).T.astype(jnp.bfloat16)
    wp = params["wp"].astype(f32).T.astype(jnp.bfloat16)

    # gamma/beta + 4 biases packed into a single (8, C) constant (one sublane each).
    consts = jnp.stack([
        params["gamma"].astype(f32),
        params["beta"].astype(f32),
        params["bq"].astype(f32) * scale,
        params["bk"].astype(f32),
        params["bv"].astype(f32),
        params["bp"].astype(f32),
        jnp.zeros((C,), f32),
        jnp.zeros((C,), f32),
    ], axis=0)

    # GroupNorm group-mixing matrix precomputed on the host (exact 0/1 entries).
    gidx = np.arange(C) // (C // num_groups)
    gmat = jnp.asarray((gidx[:, None] == gidx[None, :]).astype(np.float32))

    x_lc = x_lc.astype(f32)

    kernel = functools.partial(_attn_block_kernel, num_groups=num_groups,
                               eps=float(eps), tkv=TKV, kv_unroll=kv_unroll)
    vmem_limit = _vmem_limit_bytes(L, C, TQ, TKV)

    def run(const_pipeline_mode):
        def const_spec(shape):
            # Grid-constant blocks: single-buffer them when supported.
            return pl.BlockSpec(shape, lambda b, qi: (0, 0),
                                pipeline_mode=const_pipeline_mode)

        grid_spec = pltpu.PrefetchScalarGridSpec(
            num_scalar_prefetch=0,
            grid=(N, num_q),
            in_specs=[
                pl.BlockSpec(memory_space=pl.ANY),                       # x in HBM (prologue streams it)
                pl.BlockSpec((None, TQ, C), lambda b, qi: (b, qi, 0)),   # x per q-tile (Q proj + residual)
                const_spec((8, C)),                                      # gamma/beta/biases
                const_spec((C, C)),                                      # group-mix matrix (f32)
                const_spec((C, C)), const_spec((C, C)),                  # Wq^T*scale, Wk^T
                const_spec((C, C)), const_spec((C, C)),                  # Wv^T, Wproj^T
            ],
            out_specs=pl.BlockSpec((None, TQ, C), lambda b, qi: (b, qi, 0)),
            scratch_shapes=[
                pltpu.VMEM((C, L), jnp.bfloat16),        # K^T (resident per batch element)
                pltpu.VMEM((L, C), jnp.bfloat16),        # V
                pltpu.VMEM((1, C), jnp.float32),         # GroupNorm per-channel scale
                pltpu.VMEM((1, C), jnp.float32),         # GroupNorm per-channel shift
                pltpu.VMEM((2, TKV, C), jnp.float32),    # streamed x double buffer
                pltpu.SemaphoreType.DMA((2,)),           # DMA completion semaphores
                pltpu.VMEM((TQ, 1), jnp.float32),        # flash m
                pltpu.VMEM((TQ, 1), jnp.float32),        # flash l
                pltpu.VMEM((TQ, C), jnp.float32),        # flash acc
            ],
        )
        return pl.pallas_call(
            kernel,
            out_shape=jax.ShapeDtypeStruct((N, L, C), jnp.float32),
            grid_spec=grid_spec,
            compiler_params=pltpu.CompilerParams(
                dimension_semantics=("parallel", "arbitrary"),
                vmem_limit_bytes=vmem_limit),
        )(x_lc, x_lc, consts, gmat, wq, wk, wv, wp)

    try:
        return run(pl.Buffered(1))      # single-buffer the never-changing inputs
    except Exception:
        return run(None)                # fall back to default double-buffering


def attn_block_forward(x_nchw, params, num_groups=32, eps=1e-6,
                       tq=None, tkv=None, kv_unroll=2):
    """PyTorch-parity NCHW boundary. Callers holding NLC activations should use
    attn_block_forward_nlc directly and skip the two full-tensor transposes."""
    N, C, H, W = x_nchw.shape
    L = H * W
    x_lc = jnp.transpose(x_nchw.reshape(N, C, L), (0, 2, 1))
    out_lc = attn_block_forward_nlc(x_lc, params, num_groups=num_groups, eps=eps,
                                    tq=tq, tkv=tkv, kv_unroll=kv_unroll)
    return jnp.transpose(out_lc, (0, 2, 1)).reshape(N, C, H, W)


def attn_block_ref(x, params, num_groups=32, eps=1e-6):
    """Pure-JAX (f32) reference of the PyTorch forward, for validation."""
    N, C, H, W = x.shape
    G = num_groups
    xg = x.reshape(N, G, C // G, H, W)
    mean = xg.mean(axis=(2, 3, 4), keepdims=True)
    var = ((xg - mean) ** 2).mean(axis=(2, 3, 4), keepdims=True)
    xn = ((xg - mean) / jnp.sqrt(var + eps)).reshape(N, C, H, W)
    h = xn * params["gamma"][None, :, None, None] + params["beta"][None, :, None, None]
    h = jnp.transpose(h.reshape(N, C, H * W), (0, 2, 1))            # (N, L, C)
    q = h @ params["wq"].T + params["bq"]
    k = h @ params["wk"].T + params["bk"]
    v = h @ params["wv"].T + params["bv"]
    s = (q @ jnp.swapaxes(k, -1, -2)) / math.sqrt(C)
    p = jax.nn.softmax(s, axis=-1)
    o = p @ v
    proj = o @ params["wp"].T + params["bp"]
    return x + jnp.transpose(proj, (0, 2, 1)).reshape(N, C, H, W)


if __name__ == "__main__":
    # Small shapes consistent with the module: C must be a multiple of 32
    # (GroupNorm with 32 groups); C=128 keeps channels lane-dense.  L = 16*16 = 256
    # with tq=tkv=128 exercises multiple query tiles, the streamed two-pass
    # prologue (num_kv=2) and the online-softmax KV loop.
    N, C, H, W = 2, 128, 16, 16
    key = jax.random.PRNGKey(0)
    keys = jax.random.split(key, 11)
    x = jax.random.normal(keys[0], (N, C, H, W), jnp.float32)
    sc = 1.0 / math.sqrt(C)
    params = dict(
        gamma=1.0 + 0.1 * jax.random.normal(keys[1], (C,), jnp.float32),
        beta=0.1 * jax.random.normal(keys[2], (C,), jnp.float32),
        wq=sc * jax.random.normal(keys[3], (C, C), jnp.float32),
        bq=0.1 * jax.random.normal(keys[4], (C,), jnp.float32),
        wk=sc * jax.random.normal(keys[5], (C, C), jnp.float32),
        bk=0.1 * jax.random.normal(keys[6], (C,), jnp.float32),
        wv=sc * jax.random.normal(keys[7], (C, C), jnp.float32),
        bv=0.1 * jax.random.normal(keys[8], (C,), jnp.float32),
        wp=sc * jax.random.normal(keys[9], (C, C), jnp.float32),
        bp=0.1 * jax.random.normal(keys[10], (C,), jnp.float32),
    )

    out = jax.block_until_ready(attn_block_forward(x, params, tq=128, tkv=128))
    ref = jax.block_until_ready(attn_block_ref(x, params))
    # bf16 MXU operands (f32 accumulation) vs. an all-f32 reference -> loose tolerance.
    np.testing.assert_allclose(np.asarray(out), np.asarray(ref), rtol=5e-2, atol=5e-2)
    print("KERNEL_OK")
</pallas_src>

<mosaic_0001>
module attributes {stable_mosaic.version = 11 : i64} {
  func.func @_attn_block_kernel(%arg0: i32, %arg1: i32, %arg2: memref<2x256x128xf32, #tpu.memory_space<any>>, %arg3: memref<1x128x128xf32, #tpu.memory_space<vmem>>, %arg4: memref<8x128xf32, #tpu.memory_space<vmem>>, %arg5: memref<128x128xf32, #tpu.memory_space<vmem>>, %arg6: memref<128x128xbf16, #tpu.memory_space<vmem>>, %arg7: memref<128x128xbf16, #tpu.memory_space<vmem>>, %arg8: memref<128x128xbf16, #tpu.memory_space<vmem>>, %arg9: memref<128x128xbf16, #tpu.memory_space<vmem>>, %arg10: memref<1x128x128xf32, #tpu.memory_space<vmem>>, %arg11: memref<128x256xbf16, #tpu.memory_space<vmem>>, %arg12: memref<256x128xbf16, #tpu.memory_space<vmem>>, %arg13: memref<1x128xf32, #tpu.memory_space<vmem>>, %arg14: memref<1x128xf32, #tpu.memory_space<vmem>>, %arg15: memref<2x128x128xf32, #tpu.memory_space<vmem>>, %arg16: memref<2x!tpu.dma_semaphore, #tpu.memory_space<semaphore_mem>>, %arg17: memref<128x1xf32, #tpu.memory_space<vmem>>, %arg18: memref<128x1xf32, #tpu.memory_space<vmem>>, %arg19: memref<128x128xf32, #tpu.memory_space<vmem>>) attributes {dimension_semantics = [#tpu.dimension_semantics<parallel>, #tpu.dimension_semantics<arbitrary>], iteration_bounds = array<i64: 2, 2>, scalar_prefetch = 0 : i64, scratch_operands = 9 : i64, tpu.core_type = #tpu.core_type<tc>, window_params = [{}, {transform_indices = @transform_1, window_bounds = array<i64: 1, 128, 128>}, {pipeline_mode = #tpu.pipeline_mode<synchronous>, transform_indices = @transform_2, window_bounds = array<i64: 8, 128>}, {pipeline_mode = #tpu.pipeline_mode<synchronous>, transform_indices = @transform_3, window_bounds = array<i64: 128, 128>}, {pipeline_mode = #tpu.pipeline_mode<synchronous>, transform_indices = @transform_4, window_bounds = array<i64: 128, 128>}, {pipeline_mode = #tpu.pipeline_mode<synchronous>, transform_indices = @transform_5, window_bounds = array<i64: 128, 128>}, {pipeline_mode = #tpu.pipeline_mode<synchronous>, transform_indices = @transform_6, window_bounds = array<i64: 128, 128>}, {pipeline_mode = #tpu.pipeline_mode<synchronous>, transform_indices = @transform_7, window_bounds = array<i64: 128, 128>}, {transform_indices = @transform_8, window_bounds = array<i64: 1, 128, 128>}]} {
    %c0_i32 = arith.constant 0 : i32
    %0 = arith.cmpi eq, %arg1, %c0_i32 : i32
    %1 = arith.extui %0 : i1 to i32
    %c0_i32_0 = arith.constant 0 : i32
    %2 = arith.cmpi ne, %1, %c0_i32_0 : i32
    scf.if %2 {
      %c0_35 = arith.constant 0 : index
      %c0_36 = arith.constant 0 : index
      %42 = vector.load %arg4[%c0_35, %c0_36] : memref<8x128xf32, #tpu.memory_space<vmem>>, vector<1x128xf32>
      %c1 = arith.constant 1 : index
      %c0_37 = arith.constant 0 : index
      %43 = vector.load %arg4[%c1, %c0_37] : memref<8x128xf32, #tpu.memory_space<vmem>>, vector<1x128xf32>
      %c3 = arith.constant 3 : index
      %c0_38 = arith.constant 0 : index
      %44 = vector.load %arg4[%c3, %c0_38] : memref<8x128xf32, #tpu.memory_space<vmem>>, vector<1x128xf32>
      %c4 = arith.constant 4 : index
      %c0_39 = arith.constant 0 : index
      %45 = vector.load %arg4[%c4, %c0_39] : memref<8x128xf32, #tpu.memory_space<vmem>>, vector<1x128xf32>
      %c0_i32_40 = arith.constant 0 : i32
      %46 = tpu.assume_multiple %c0_i32_40, 128 : i32
      %c0_i32_41 = arith.constant 0 : i32
      %c0_i32_42 = arith.constant 0 : i32
      %c0_i32_43 = arith.constant 0 : i32
      %47 = tpu.memref_slice %arg2[%arg0, %46, %c0_i32_43] : memref<2x256x128xf32, #tpu.memory_space<any>> -> memref<1x128x128xf32, #tpu.memory_space<any>>
      %48 = tpu.memref_squeeze %47 : memref<1x128x128xf32, #tpu.memory_space<any>> -> memref<128x128xf32, #tpu.memory_space<any>>
      %c0_i32_44 = arith.constant 0 : i32
      %c0_i32_45 = arith.constant 0 : i32
      %49 = tpu.memref_slice %arg15[%c0_i32_41, %c0_i32_44, %c0_i32_45] : memref<2x128x128xf32, #tpu.memory_space<vmem>> -> memref<1x128x128xf32, #tpu.memory_space<vmem>>
      %50 = tpu.memref_squeeze %49 : memref<1x128x128xf32, #tpu.memory_space<vmem>> -> memref<128x128xf32, #tpu.memory_space<vmem>>
      %51 = tpu.memref_slice %arg16[%c0_i32_42] : memref<2x!tpu.dma_semaphore, #tpu.memory_space<semaphore_mem>> -> memref<1x!tpu.dma_semaphore, #tpu.memory_space<semaphore_mem>>
      %52 = tpu.memref_squeeze %51 : memref<1x!tpu.dma_semaphore, #tpu.memory_space<semaphore_mem>> -> memref<!tpu.dma_semaphore, #tpu.memory_space<semaphore_mem>>
      tpu.enqueue_dma source(%48 : memref<128x128xf32, #tpu.memory_space<any>>) target(%50 : memref<128x128xf32, #tpu.memory_space<vmem>>) target_semaphore(%52 : memref<!tpu.dma_semaphore, #tpu.memory_space<semaphore_mem>>)
      %cst_46 = arith.constant 0.000000e+00 : f32
      %53 = vector.broadcast %cst_46 : f32 to vector<1x128xf32>
      %c0_i32_47 = arith.constant 0 : i32
      %c2_i32_48 = arith.constant 2 : i32
      %54 = arith.addi %c0_i32_47, %c2_i32_48 : i32
      %c1_i32_49 = arith.constant 1 : i32
      %55:2 = scf.for %arg20 = %c0_i32_47 to %54 step %c1_i32_49 iter_args(%arg21 = %53, %arg22 = %53) -> (vector<1x128xf32>, vector<1x128xf32>)  : i32 {
        %c1_i32_68 = arith.constant 1 : i32
        %75 = arith.andi %arg20, %c1_i32_68 : i32
        %c128_i32 = arith.constant 128 : i32
        %76 = arith.muli %arg20, %c128_i32 : i32
        %77 = tpu.assume_multiple %76, 128 : i32
        %c0_i32_69 = arith.constant 0 : i32
        %78 = tpu.memref_slice %arg2[%arg0, %77, %c0_i32_69] : memref<2x256x128xf32, #tpu.memory_space<any>> -> memref<1x128x128xf32, #tpu.memory_space<any>>
        %79 = tpu.memref_squeeze %78 : memref<1x128x128xf32, #tpu.memory_space<any>> -> memref<128x128xf32, #tpu.memory_space<any>>
        %c0_i32_70 = arith.constant 0 : i32
        %c0_i32_71 = arith.constant 0 : i32
        %80 = tpu.memref_slice %arg15[%75, %c0_i32_70, %c0_i32_71] : memref<2x128x128xf32, #tpu.memory_space<vmem>> -> memref<1x128x128xf32, #tpu.memory_space<vmem>>
        %81 = tpu.memref_squeeze %80 : memref<1x128x128xf32, #tpu.memory_space<vmem>> -> memref<128x128xf32, #tpu.memory_space<vmem>>
        %82 = tpu.memref_slice %arg16[%75] : memref<2x!tpu.dma_semaphore, #tpu.memory_space<semaphore_mem>> -> memref<1x!tpu.dma_semaphore, #tpu.memory_space<semaphore_mem>>
        %83 = tpu.memref_squeeze %82 : memref<1x!tpu.dma_semaphore, #tpu.memory_space<semaphore_mem>> -> memref<!tpu.dma_semaphore, #tpu.memory_space<semaphore_mem>>
        tpu.wait_dma2 semaphore(%83 : memref<!tpu.dma_semaphore, #tpu.memory_space<semaphore_mem>>) src(%79 : memref<128x128xf32, #tpu.memory_space<any>>) dst(%81 : memref<128x128xf32, #tpu.memory_space<vmem>>)
        %c1_i32_72 = arith.constant 1 : i32
        %84 = arith.addi %arg20, %c1_i32_72 : i32
        %c2_i32_73 = arith.constant 2 : i32
        %85 = arith.cmpi slt, %84, %c2_i32_73 : i32
        %86 = arith.extui %85 : i1 to i32
        %c0_i32_74 = arith.constant 0 : i32
        %87 = arith.cmpi ne, %86, %c0_i32_74 : i32
        scf.if %87 {
          %c1_i32_82 = arith.constant 1 : i32
          %102 = arith.addi %arg20, %c1_i32_82 : i32
          %c1_i32_83 = arith.constant 1 : i32
          %103 = arith.subi %c1_i32_83, %75 : i32
          %c128_i32_84 = arith.constant 128 : i32
          %104 = arith.muli %102, %c128_i32_84 : i32
          %105 = tpu.assume_multiple %104, 128 : i32
          %c0_i32_85 = arith.constant 0 : i32
          %106 = tpu.memref_slice %arg2[%arg0, %105, %c0_i32_85] : memref<2x256x128xf32, #tpu.memory_space<any>> -> memref<1x128x128xf32, #tpu.memory_space<any>>
          %107 = tpu.memref_squeeze %106 : memref<1x128x128xf32, #tpu.memory_space<any>> -> memref<128x128xf32, #tpu.memory_space<any>>
          %c0_i32_86 = arith.constant 0 : i32
          %c0_i32_87 = arith.constant 0 : i32
          %108 = tpu.memref_slice %arg15[%103, %c0_i32_86, %c0_i32_87] : memref<2x128x128xf32, #tpu.memory_space<vmem>> -> memref<1x128x128xf32, #tpu.memory_space<vmem>>
          %109 = tpu.memref_squeeze %108 : memref<1x128x128xf32, #tpu.memory_space<vmem>> -> memref<128x128xf32, #tpu.memory_space<vmem>>
          %110 = tpu.memref_slice %arg16[%103] : memref<2x!tpu.dma_semaphore, #tpu.memory_space<semaphore_mem>> -> memref<1x!tpu.dma_semaphore, #tpu.memory_space<semaphore_mem>>
          %111 = tpu.memref_squeeze %110 : memref<1x!tpu.dma_semaphore, #tpu.memory_space<semaphore_mem>> -> memref<!tpu.dma_semaphore, #tpu.memory_space<semaphore_mem>>
          tpu.enqueue_dma source(%107 : memref<128x128xf32, #tpu.memory_space<any>>) target(%109 : memref<128x128xf32, #tpu.memory_space<vmem>>) target_semaphore(%111 : memref<!tpu.dma_semaphore, #tpu.memory_space<semaphore_mem>>)
        } else {
        }
        %c1_i32_75 = arith.constant 1 : i32
        %88 = arith.addi %arg20, %c1_i32_75 : i32
        %c2_i32_76 = arith.constant 2 : i32
        %89 = arith.cmpi eq, %88, %c2_i32_76 : i32
        %90 = arith.extui %89 : i1 to i32
        %c0_i32_77 = arith.constant 0 : i32
        %91 = arith.cmpi ne, %90, %c0_i32_77 : i32
        scf.if %91 {
          %c1_i32_82 = arith.constant 1 : i32
          %102 = arith.subi %c1_i32_82, %75 : i32
          %c0_i32_83 = arith.constant 0 : i32
          %103 = tpu.assume_multiple %c0_i32_83, 128 : i32
          %c0_i32_84 = arith.constant 0 : i32
          %104 = tpu.memref_slice %arg2[%arg0, %103, %c0_i32_84] : memref<2x256x128xf32, #tpu.memory_space<any>> -> memref<1x128x128xf32, #tpu.memory_space<any>>
          %105 = tpu.memref_squeeze %104 : memref<1x128x128xf32, #tpu.memory_space<any>> -> memref<128x128xf32, #tpu.memory_space<any>>
          %c0_i32_85 = arith.constant 0 : i32
          %c0_i32_86 = arith.constant 0 : i32
          %106 = tpu.memref_slice %arg15[%102, %c0_i32_85, %c0_i32_86] : memref<2x128x128xf32, #tpu.memory_space<vmem>> -> memref<1x128x128xf32, #tpu.memory_space<vmem>>
          %107 = tpu.memref_squeeze %106 : memref<1x128x128xf32, #tpu.memory_space<vmem>> -> memref<128x128xf32, #tpu.memory_space<vmem>>
          %108 = tpu.memref_slice %arg16[%102] : memref<2x!tpu.dma_semaphore, #tpu.memory_space<semaphore_mem>> -> memref<1x!tpu.dma_semaphore, #tpu.memory_space<semaphore_mem>>
          %109 = tpu.memref_squeeze %108 : memref<1x!tpu.dma_semaphore, #tpu.memory_space<semaphore_mem>> -> memref<!tpu.dma_semaphore, #tpu.memory_space<semaphore_mem>>
          tpu.enqueue_dma source(%105 : memref<128x128xf32, #tpu.memory_space<any>>) target(%107 : memref<128x128xf32, #tpu.memory_space<vmem>>) target_semaphore(%109 : memref<!tpu.dma_semaphore, #tpu.memory_space<semaphore_mem>>)
        } else {
        }
        %92 = arith.index_cast %75 : i32 to index
        %c0_78 = arith.constant 0 : index
        %c0_79 = arith.constant 0 : index
        %93 = vector.load %arg15[%92, %c0_78, %c0_79] : memref<2x128x128xf32, #tpu.memory_space<vmem>>, vector<1x128x128xf32>
        %94 = vector.shape_cast %93 : vector<1x128x128xf32> to vector<128x128xf32>
        %cst_80 = arith.constant dense<0.000000e+00> : vector<128xf32>
        %95 = vector.multi_reduction <add>, %94, %cst_80 [0] : vector<128x128xf32> to vector<128xf32>
        %96 = vector.shape_cast %95 : vector<128xf32> to vector<1x128xf32>
        %97 = arith.addf %arg21, %96 : vector<1x128xf32>
        %98 = arith.mulf %94, %94 : vector<128x128xf32>
        %cst_81 = arith.constant dense<0.000000e+00> : vector<128xf32>
        %99 = vector.multi_reduction <add>, %98, %cst_81 [0] : vector<128x128xf32> to vector<128xf32>
        %100 = vector.shape_cast %99 : vector<128xf32> to vector<1x128xf32>
        %101 = arith.addf %arg22, %100 : vector<1x128xf32>
        scf.yield %97, %101 : vector<1x128xf32>, vector<1x128xf32>
      }
      %c2_i32_50 = arith.constant 2 : i32
      %c0_51 = arith.constant 0 : index
      %c0_52 = arith.constant 0 : index
      %56 = vector.load %arg5[%c0_51, %c0_52] : memref<128x128xf32, #tpu.memory_space<vmem>>, vector<128x128xf32>
      %cst_53 = arith.constant dense<0.000000e+00> : vector<1x128xf32>
      %57 = tpu.matmul %55#0, %56, %cst_53 {dimension_numbers = #tpu.dot_dimension_numbers<[1], [0], [0], [1], [0, 0, 1, 1], [], []>} : vector<1x128xf32>, vector<128x128xf32>, vector<1x128xf32> -> vector<1x128xf32>
      %cst_54 = arith.constant 9.765625E-4 : f32
      %58 = vector.broadcast %cst_54 : f32 to vector<1x128xf32>
      %59 = arith.mulf %57, %58 : vector<1x128xf32>
      %c0_55 = arith.constant 0 : index
      %c0_56 = arith.constant 0 : index
      %60 = vector.load %arg5[%c0_55, %c0_56] : memref<128x128xf32, #tpu.memory_space<vmem>>, vector<128x128xf32>
      %cst_57 = arith.constant dense<0.000000e+00> : vector<1x128xf32>
      %61 = tpu.matmul %55#1, %60, %cst_57 {dimension_numbers = #tpu.dot_dimension_numbers<[1], [0], [0], [1], [0, 0, 1, 1], [], []>} : vector<1x128xf32>, vector<128x128xf32>, vector<1x128xf32> -> vector<1x128xf32>
      %cst_58 = arith.constant 9.765625E-4 : f32
      %62 = vector.broadcast %cst_58 : f32 to vector<1x128xf32>
      %63 = arith.mulf %61, %62 : vector<1x128xf32>
      %64 = arith.mulf %59, %59 : vector<1x128xf32>
      %65 = arith.subf %63, %64 : vector<1x128xf32>
      %cst_59 = arith.constant 9.99999997E-7 : f32
      %66 = vector.broadcast %cst_59 : f32 to vector<1x128xf32>
      %67 = arith.addf %65, %66 : vector<1x128xf32>
      %68 = math.rsqrt %67 : vector<1x128xf32>
      %69 = arith.mulf %68, %42 : vector<1x128xf32>
      %70 = arith.mulf %59, %69 : vector<1x128xf32>
      %71 = arith.subf %43, %70 : vector<1x128xf32>
      %c0_60 = arith.constant 0 : index
      %c0_61 = arith.constant 0 : index
      %72 = vector.load %arg13[%c0_60, %c0_61] : memref<1x128xf32, #tpu.memory_space<vmem>>, vector<1x128xf32>
      tpu.vector_store %arg13[%c0_60, %c0_61], %69 {strides = array<i32>} : memref<1x128xf32, #tpu.memory_space<vmem>>, vector<1x128xf32>,
      %c0_62 = arith.constant 0 : index
      %c0_63 = arith.constant 0 : index
      %73 = vector.load %arg14[%c0_62, %c0_63] : memref<1x128xf32, #tpu.memory_space<vmem>>, vector<1x128xf32>
      tpu.vector_store %arg14[%c0_62, %c0_63], %71 {strides = array<i32>} : memref<1x128xf32, #tpu.memory_space<vmem>>, vector<1x128xf32>,
      %c0_i32_64 = arith.constant 0 : i32
      %c2_i32_65 = arith.constant 2 : i32
      %74 = arith.addi %c0_i32_64, %c2_i32_65 : i32
      %c1_i32_66 = arith.constant 1 : i32
      scf.for %arg20 = %c0_i32_64 to %74 step %c1_i32_66  : i32 {
        %c1_i32_68 = arith.constant 1 : i32
        %75 = arith.muli %arg20, %c1_i32_68 : i32
        %c0_i32_69 = arith.constant 0 : i32
        %76 = arith.addi %c0_i32_69, %75 : i32
        %c2_i32_70 = arith.constant 2 : i32
        %77 = arith.addi %c2_i32_70, %76 : i32
        %c1_i32_71 = arith.constant 1 : i32
        %78 = arith.andi %77, %c1_i32_71 : i32
        %c128_i32 = arith.constant 128 : i32
        %79 = arith.muli %76, %c128_i32 : i32
        %80 = tpu.assume_multiple %79, 128 : i32
        %c0_i32_72 = arith.constant 0 : i32
        %81 = tpu.memref_slice %arg2[%arg0, %80, %c0_i32_72] : memref<2x256x128xf32, #tpu.memory_space<any>> -> memref<1x128x128xf32, #tpu.memory_space<any>>
        %82 = tpu.memref_squeeze %81 : memref<1x128x128xf32, #tpu.memory_space<any>> -> memref<128x128xf32, #tpu.memory_space<any>>
        %c0_i32_73 = arith.constant 0 : i32
        %c0_i32_74 = arith.constant 0 : i32
        %83 = tpu.memref_slice %arg15[%78, %c0_i32_73, %c0_i32_74] : memref<2x128x128xf32, #tpu.memory_space<vmem>> -> memref<1x128x128xf32, #tpu.memory_space<vmem>>
        %84 = tpu.memref_squeeze %83 : memref<1x128x128xf32, #tpu.memory_space<vmem>> -> memref<128x128xf32, #tpu.memory_space<vmem>>
        %85 = tpu.memref_slice %arg16[%78] : memref<2x!tpu.dma_semaphore, #tpu.memory_space<semaphore_mem>> -> memref<1x!tpu.dma_semaphore, #tpu.memory_space<semaphore_mem>>
        %86 = tpu.memref_squeeze %85 : memref<1x!tpu.dma_semaphore, #tpu.memory_space<semaphore_mem>> -> memref<!tpu.dma_semaphore, #tpu.memory_space<semaphore_mem>>
        tpu.wait_dma2 semaphore(%86 : memref<!tpu.dma_semaphore, #tpu.memory_space<semaphore_mem>>) src(%82 : memref<128x128xf32, #tpu.memory_space<any>>) dst(%84 : memref<128x128xf32, #tpu.memory_space<vmem>>)
        %c1_i32_75 = arith.constant 1 : i32
        %87 = arith.addi %76, %c1_i32_75 : i32
        %c2_i32_76 = arith.constant 2 : i32
        %88 = arith.cmpi slt, %87, %c2_i32_76 : i32
        %89 = arith.extui %88 : i1 to i32
        %c0_i32_77 = arith.constant 0 : i32
        %90 = arith.cmpi ne, %89, %c0_i32_77 : i32
        scf.if %90 {
          %c1_i32_89 = arith.constant 1 : i32
          %116 = arith.addi %76, %c1_i32_89 : i32
          %c1_i32_90 = arith.constant 1 : i32
          %117 = arith.subi %c1_i32_90, %78 : i32
          %c128_i32_91 = arith.constant 128 : i32
          %118 = arith.muli %116, %c128_i32_91 : i32
          %119 = tpu.assume_multiple %118, 128 : i32
          %c0_i32_92 = arith.constant 0 : i32
          %120 = tpu.memref_slice %arg2[%arg0, %119, %c0_i32_92] : memref<2x256x128xf32, #tpu.memory_space<any>> -> memref<1x128x128xf32, #tpu.memory_space<any>>
          %121 = tpu.memref_squeeze %120 : memref<1x128x128xf32, #tpu.memory_space<any>> -> memref<128x128xf32, #tpu.memory_space<any>>
          %c0_i32_93 = arith.constant 0 : i32
          %c0_i32_94 = arith.constant 0 : i32
          %122 = tpu.memref_slice %arg15[%117, %c0_i32_93, %c0_i32_94] : memref<2x128x128xf32, #tpu.memory_space<vmem>> -> memref<1x128x128xf32, #tpu.memory_space<vmem>>
          %123 = tpu.memref_squeeze %122 : memref<1x128x128xf32, #tpu.memory_space<vmem>> -> memref<128x128xf32, #tpu.memory_space<vmem>>
          %124 = tpu.memref_slice %arg16[%117] : memref<2x!tpu.dma_semaphore, #tpu.memory_space<semaphore_mem>> -> memref<1x!tpu.dma_semaphore, #tpu.memory_space<semaphore_mem>>
          %125 = tpu.memref_squeeze %124 : memref<1x!tpu.dma_semaphore, #tpu.memory_space<semaphore_mem>> -> memref<!tpu.dma_semaphore, #tpu.memory_space<semaphore_mem>>
          tpu.enqueue_dma source(%121 : memref<128x128xf32, #tpu.memory_space<any>>) target(%123 : memref<128x128xf32, #tpu.memory_space<vmem>>) target_semaphore(%125 : memref<!tpu.dma_semaphore, #tpu.memory_space<semaphore_mem>>)
        } else {
        }
        %c128_i32_78 = arith.constant 128 : i32
        %91 = arith.muli %76, %c128_i32_78 : i32
        %92 = tpu.assume_multiple %91, 128 : i32
        %93 = arith.index_cast %78 : i32 to index
        %c0_79 = arith.constant 0 : index
        %c0_80 = arith.constant 0 : index
        %94 = vector.load %arg15[%93, %c0_79, %c0_80] : memref<2x128x128xf32, #tpu.memory_space<vmem>>, vector<1x128x128xf32>
        %95 = vector.shape_cast %94 : vector<1x128x128xf32> to vector<128x128xf32>
        %96 = vector.broadcast %69 : vector<1x128xf32> to vector<128x128xf32>
        %97 = arith.mulf %95, %96 : vector<128x128xf32>
        %98 = vector.broadcast %71 : vector<1x128xf32> to vector<128x128xf32>
        %99 = arith.addf %97, %98 : vector<128x128xf32>
        %100 = arith.truncf %99 : vector<128x128xf32> to vector<128x128xbf16>
        %c0_81 = arith.constant 0 : index
        %c0_82 = arith.constant 0 : index
        %101 = vector.load %arg7[%c0_81, %c0_82] : memref<128x128xbf16, #tpu.memory_space<vmem>>, vector<128x128xbf16>
        %cst_83 = arith.constant dense<0.000000e+00> : vector<128x128xf32>
        %102 = tpu.matmul %100, %101, %cst_83 {dimension_numbers = #tpu.dot_dimension_numbers<[1], [0], [0], [1], [0, 0, 1, 1], [], []>} : vector<128x128xbf16>, vector<128x128xbf16>, vector<128x128xf32> -> vector<128x128xf32>
        %103 = vector.broadcast %44 : vector<1x128xf32> to vector<128x128xf32>
        %104 = arith.addf %102, %103 : vector<128x128xf32>
        %c0_84 = arith.constant 0 : index
        %c0_85 = arith.constant 0 : index
        %105 = vector.load %arg8[%c0_84, %c0_85] : memref<128x128xbf16, #tpu.memory_space<vmem>>, vector<128x128xbf16>
        %cst_86 = arith.constant dense<0.000000e+00> : vector<128x128xf32>
        %106 = tpu.matmul %100, %105, %cst_86 {dimension_numbers = #tpu.dot_dimension_numbers<[1], [0], [0], [1], [0, 0, 1, 1], [], []>} : vector<128x128xbf16>, vector<128x128xbf16>, vector<128x128xf32> -> vector<128x128xf32>
        %107 = vector.broadcast %45 : vector<1x128xf32> to vector<128x128xf32>
        %108 = arith.addf %106, %107 : vector<128x128xf32>
        %109 = tpu.transpose %104, [1, 0] : vector<128x128xf32> -> vector<128x128xf32>
        %110 = arith.truncf %109 : vector<128x128xf32> to vector<128x128xbf16>
        %c0_87 = arith.constant 0 : index
        %111 = arith.index_cast %92 : i32 to index
        %112 = vector.load %arg11[%c0_87, %111] : memref<128x256xbf16, #tpu.memory_space<vmem>>, vector<128x128xbf16>
        tpu.vector_store %arg11[%c0_87, %111], %110 {strides = array<i32>} : memref<128x256xbf16, #tpu.memory_space<vmem>>, vector<128x128xbf16>,
        %113 = arith.truncf %108 : vector<128x128xf32> to vector<128x128xbf16>
        %114 = arith.index_cast %92 : i32 to index
        %c0_88 = arith.constant 0 : index
        %115 = vector.load %arg12[%114, %c0_88] : memref<256x128xbf16, #tpu.memory_space<vmem>>, vector<128x128xbf16>
        tpu.vector_store %arg12[%114, %c0_88], %113 {strides = array<i32>} : memref<256x128xbf16, #tpu.memory_space<vmem>>, vector<128x128xbf16>,
      }
      %c2_i32_67 = arith.constant 2 : i32
    } else {
    }
    %c0 = arith.constant 0 : index
    %c0_1 = arith.constant 0 : index
    %3 = vector.load %arg13[%c0, %c0_1] : memref<1x128xf32, #tpu.memory_space<vmem>>, vector<1x128xf32>
    %c0_2 = arith.constant 0 : index
    %c0_3 = arith.constant 0 : index
    %4 = vector.load %arg14[%c0_2, %c0_3] : memref<1x128xf32, #tpu.memory_space<vmem>>, vector<1x128xf32>
    %c0_4 = arith.constant 0 : index
    %c0_5 = arith.constant 0 : index
    %c0_6 = arith.constant 0 : index
    %5 = vector.load %arg3[%c0_4, %c0_5, %c0_6] : memref<1x128x128xf32, #tpu.memory_space<vmem>>, vector<1x128x128xf32>
    %6 = vector.shape_cast %5 : vector<1x128x128xf32> to vector<128x128xf32>
    %7 = vector.broadcast %3 : vector<1x128xf32> to vector<128x128xf32>
    %8 = arith.mulf %6, %7 : vector<128x128xf32>
    %9 = vector.broadcast %4 : vector<1x128xf32> to vector<128x128xf32>
    %10 = arith.addf %8, %9 : vector<128x128xf32>
    %11 = arith.truncf %10 : vector<128x128xf32> to vector<128x128xbf16>
    %c2 = arith.constant 2 : index
    %c0_7 = arith.constant 0 : index
    %12 = vector.load %arg4[%c2, %c0_7] : memref<8x128xf32, #tpu.memory_space<vmem>>, vector<1x128xf32>
    %c0_8 = arith.constant 0 : index
    %c0_9 = arith.constant 0 : index
    %13 = vector.load %arg6[%c0_8, %c0_9] : memref<128x128xbf16, #tpu.memory_space<vmem>>, vector<128x128xbf16>
    %cst = arith.constant dense<0.000000e+00> : vector<128x128xf32>
    %14 = tpu.matmul %11, %13, %cst {dimension_numbers = #tpu.dot_dimension_numbers<[1], [0], [0], [1], [0, 0, 1, 1], [], []>} : vector<128x128xbf16>, vector<128x128xbf16>, vector<128x128xf32> -> vector<128x128xf32>
    %15 = vector.broadcast %12 : vector<1x128xf32> to vector<128x128xf32>
    %16 = arith.addf %14, %15 : vector<128x128xf32>
    %17 = arith.truncf %16 : vector<128x128xf32> to vector<128x128xbf16>
    %cst_10 = arith.constant 0xFF800000 : f32
    %18 = vector.broadcast %cst_10 : f32 to vector<128x1xf32>
    %c0_11 = arith.constant 0 : index
    %c0_12 = arith.constant 0 : index
    %19 = vector.load %arg17[%c0_11, %c0_12] : memref<128x1xf32, #tpu.memory_space<vmem>>, vector<128x1xf32>
    tpu.vector_store %arg17[%c0_11, %c0_12], %18 {strides = array<i32>} : memref<128x1xf32, #tpu.memory_space<vmem>>, vector<128x1xf32>,
    %cst_13 = arith.constant 0.000000e+00 : f32
    %20 = vector.broadcast %cst_13 : f32 to vector<128x1xf32>
    %c0_14 = arith.constant 0 : index
    %c0_15 = arith.constant 0 : index
    %21 = vector.load %arg18[%c0_14, %c0_15] : memref<128x1xf32, #tpu.memory_space<vmem>>, vector<128x1xf32>
    tpu.vector_store %arg18[%c0_14, %c0_15], %20 {strides = array<i32>} : memref<128x1xf32, #tpu.memory_space<vmem>>, vector<128x1xf32>,
    %cst_16 = arith.constant 0.000000e+00 : f32
    %22 = vector.broadcast %cst_16 : f32 to vector<128x128xf32>
    %c0_17 = arith.constant 0 : index
    %c0_18 = arith.constant 0 : index
    %23 = vector.load %arg19[%c0_17, %c0_18] : memref<128x128xf32, #tpu.memory_space<vmem>>, vector<128x128xf32>
    tpu.vector_store %arg19[%c0_17, %c0_18], %22 {strides = array<i32>} : memref<128x128xf32, #tpu.memory_space<vmem>>, vector<128x128xf32>,
    %c0_i32_19 = arith.constant 0 : i32
    %c2_i32 = arith.constant 2 : i32
    %24 = arith.addi %c0_i32_19, %c2_i32 : i32
    %c1_i32 = arith.constant 1 : i32
    scf.for %arg20 = %c0_i32_19 to %24 step %c1_i32  : i32 {
      %c128_i32 = arith.constant 128 : i32
      %42 = arith.muli %arg20, %c128_i32 : i32
      %43 = tpu.assume_multiple %42, 128 : i32
      %c0_35 = arith.constant 0 : index
      %44 = arith.index_cast %43 : i32 to index
      %45 = vector.load %arg11[%c0_35, %44] : memref<128x256xbf16, #tpu.memory_space<vmem>>, vector<128x128xbf16>
      %46 = arith.index_cast %43 : i32 to index
      %c0_36 = arith.constant 0 : index
      %47 = vector.load %arg12[%46, %c0_36] : memref<256x128xbf16, #tpu.memory_space<vmem>>, vector<128x128xbf16>
      %cst_37 = arith.constant dense<0.000000e+00> : vector<128x128xf32>
      %48 = tpu.matmul %17, %45, %cst_37 {dimension_numbers = #tpu.dot_dimension_numbers<[1], [0], [0], [1], [0, 0, 1, 1], [], []>} : vector<128x128xbf16>, vector<128x128xbf16>, vector<128x128xf32> -> vector<128x128xf32>
      %c0_38 = arith.constant 0 : index
      %c0_39 = arith.constant 0 : index
      %49 = vector.load %arg17[%c0_38, %c0_39] : memref<128x1xf32, #tpu.memory_space<vmem>>, vector<128x1xf32>
      %cst_40 = arith.constant dense<0xFF800000> : vector<128xf32>
      %50 = vector.multi_reduction <maximumf>, %48, %cst_40 [1] : vector<128x128xf32> to vector<128xf32>
      %51 = vector.shape_cast %50 : vector<128xf32> to vector<128x1xf32>
      %52 = arith.maximumf %49, %51 : vector<128x1xf32>
      %53 = arith.subf %49, %52 : vector<128x1xf32>
      %54 = math.exp %53 : vector<128x1xf32>
      %55 = vector.broadcast %52 : vector<128x1xf32> to vector<128x128xf32>
      %56 = arith.subf %48, %55 : vector<128x128xf32>
      %57 = math.exp %56 : vector<128x128xf32>
      %c0_41 = arith.constant 0 : index
      %c0_42 = arith.constant 0 : index
      %58 = vector.load %arg18[%c0_41, %c0_42] : memref<128x1xf32, #tpu.memory_space<vmem>>, vector<128x1xf32>
      %59 = arith.mulf %54, %58 : vector<128x1xf32>
      %cst_43 = arith.constant dense<0.000000e+00> : vector<128xf32>
      %60 = vector.multi_reduction <add>, %57, %cst_43 [1] : vector<128x128xf32> to vector<128xf32>
      %61 = vector.shape_cast %60 : vector<128xf32> to vector<128x1xf32>
      %62 = arith.addf %59, %61 : vector<128x1xf32>
      %c0_44 = arith.constant 0 : index
      %c0_45 = arith.constant 0 : index
      %63 = vector.load %arg18[%c0_44, %c0_45] : memref<128x1xf32, #tpu.memory_space<vmem>>, vector<128x1xf32>
      tpu.vector_store %arg18[%c0_44, %c0_45], %62 {strides = array<i32>} : memref<128x1xf32, #tpu.memory_space<vmem>>, vector<128x1xf32>,
      %c0_46 = arith.constant 0 : index
      %c0_47 = arith.constant 0 : index
      %64 = vector.load %arg19[%c0_46, %c0_47] : memref<128x128xf32, #tpu.memory_space<vmem>>, vector<128x128xf32>
      %65 = vector.broadcast %54 : vector<128x1xf32> to vector<128x128xf32>
      %66 = arith.mulf %65, %64 : vector<128x128xf32>
      %67 = arith.truncf %57 : vector<128x128xf32> to vector<128x128xbf16>
      %cst_48 = arith.constant dense<0.000000e+00> : vector<128x128xf32>
      %68 = tpu.matmul %67, %47, %cst_48 {dimension_numbers = #tpu.dot_dimension_numbers<[1], [0], [0], [1], [0, 0, 1, 1], [], []>} : vector<128x128xbf16>, vector<128x128xbf16>, vector<128x128xf32> -> vector<128x128xf32>
      %69 = arith.addf %66, %68 : vector<128x128xf32>
      %c0_49 = arith.constant 0 : index
      %c0_50 = arith.constant 0 : index
      %70 = vector.load %arg19[%c0_49, %c0_50] : memref<128x128xf32, #tpu.memory_space<vmem>>, vector<128x128xf32>
      tpu.vector_store %arg19[%c0_49, %c0_50], %69 {strides = array<i32>} : memref<128x128xf32, #tpu.memory_space<vmem>>, vector<128x128xf32>,
      %c0_51 = arith.constant 0 : index
      %c0_52 = arith.constant 0 : index
      %71 = vector.load %arg17[%c0_51, %c0_52] : memref<128x1xf32, #tpu.memory_space<vmem>>, vector<128x1xf32>
      tpu.vector_store %arg17[%c0_51, %c0_52], %52 {strides = array<i32>} : memref<128x1xf32, #tpu.memory_space<vmem>>, vector<128x1xf32>,
    }
    %c2_i32_20 = arith.constant 2 : i32
    %c0_21 = arith.constant 0 : index
    %c0_22 = arith.constant 0 : index
    %25 = vector.load %arg19[%c0_21, %c0_22] : memref<128x128xf32, #tpu.memory_space<vmem>>, vector<128x128xf32>
    %c0_23 = arith.constant 0 : index
    %c0_24 = arith.constant 0 : index
    %26 = vector.load %arg18[%c0_23, %c0_24] : memref<128x1xf32, #tpu.memory_space<vmem>>, vector<128x1xf32>
    %27 = tpu.reciprocal %26 {approx = true} : vector<128x1xf32> -> vector<128x1xf32>
    %28 = vector.broadcast %27 : vector<128x1xf32> to vector<128x128xf32>
    %29 = arith.mulf %25, %28 : vector<128x128xf32>
    %c5 = arith.constant 5 : index
    %c0_25 = arith.constant 0 : index
    %30 = vector.load %arg4[%c5, %c0_25] : memref<8x128xf32, #tpu.memory_space<vmem>>, vector<1x128xf32>
    %31 = arith.truncf %29 : vector<128x128xf32> to vector<128x128xbf16>
    %c0_26 = arith.constant 0 : index
    %c0_27 = arith.constant 0 : index
    %32 = vector.load %arg9[%c0_26, %c0_27] : memref<128x128xbf16, #tpu.memory_space<vmem>>, vector<128x128xbf16>
    %cst_28 = arith.constant dense<0.000000e+00> : vector<128x128xf32>
    %33 = tpu.matmul %31, %32, %cst_28 {dimension_numbers = #tpu.dot_dimension_numbers<[1], [0], [0], [1], [0, 0, 1, 1], [], []>} : vector<128x128xbf16>, vector<128x128xbf16>, vector<128x128xf32> -> vector<128x128xf32>
    %34 = vector.broadcast %30 : vector<1x128xf32> to vector<128x128xf32>
    %35 = arith.addf %33, %34 : vector<128x128xf32>
    %c0_29 = arith.constant 0 : index
    %c0_30 = arith.constant 0 : index
    %c0_31 = arith.constant 0 : index
    %36 = vector.load %arg3[%c0_29, %c0_30, %c0_31] : memref<1x128x128xf32, #tpu.memory_space<vmem>>, vector<1x128x128xf32>
    %37 = vector.shape_cast %36 : vector<1x128x128xf32> to vector<128x128xf32>
    %38 = arith.addf %37, %35 : vector<128x128xf32>
    %c0_32 = arith.constant 0 : index
    %c0_33 = arith.constant 0 : index
    %c0_34 = arith.constant 0 : index
    %39 = vector.load %arg10[%c0_32, %c0_33, %c0_34] : memref<1x128x128xf32, #tpu.memory_space<vmem>>, vector<1x128x128xf32>
    %40 = vector.shape_cast %39 : vector<1x128x128xf32> to vector<128x128xf32>
    %41 = vector.shape_cast %38 : vector<128x128xf32> to vector<1x128x128xf32>
    tpu.vector_store %arg10[%c0_32, %c0_33, %c0_34], %41 {strides = array<i32>} : memref<1x128x128xf32, #tpu.memory_space<vmem>>, vector<1x128x128xf32>,
    return
  }
  func.func @transform_1(%arg0: i32, %arg1: i32) -> (i32, i32, i32) {
    %c0_i32 = arith.constant 0 : i32
    %c0_i32_0 = arith.constant 0 : i32
    return %arg0, %arg1, %c0_i32 : i32, i32, i32
  }
  func.func @transform_2(%arg0: i32, %arg1: i32) -> (i32, i32) {
    %c0_i32 = arith.constant 0 : i32
    %c0_i32_0 = arith.constant 0 : i32
    %c0_i32_1 = arith.constant 0 : i32
    return %c0_i32, %c0_i32_0 : i32, i32
  }
  func.func @transform_3(%arg0: i32, %arg1: i32) -> (i32, i32) {
    %c0_i32 = arith.constant 0 : i32
    %c0_i32_0 = arith.constant 0 : i32
    %c0_i32_1 = arith.constant 0 : i32
    return %c0_i32, %c0_i32_0 : i32, i32
  }
  func.func @transform_4(%arg0: i32, %arg1: i32) -> (i32, i32) {
    %c0_i32 = arith.constant 0 : i32
    %c0_i32_0 = arith.constant 0 : i32
    %c0_i32_1 = arith.constant 0 : i32
    return %c0_i32, %c0_i32_0 : i32, i32
  }
  func.func @transform_5(%arg0: i32, %arg1: i32) -> (i32, i32) {
    %c0_i32 = arith.constant 0 : i32
    %c0_i32_0 = arith.constant 0 : i32
    %c0_i32_1 = arith.constant 0 : i32
    return %c0_i32, %c0_i32_0 : i32, i32
  }
  func.func @transform_6(%arg0: i32, %arg1: i32) -> (i32, i32) {
    %c0_i32 = arith.constant 0 : i32
    %c0_i32_0 = arith.constant 0 : i32
    %c0_i32_1 = arith.constant 0 : i32
    return %c0_i32, %c0_i32_0 : i32, i32
  }
  func.func @transform_7(%arg0: i32, %arg1: i32) -> (i32, i32) {
    %c0_i32 = arith.constant 0 : i32
    %c0_i32_0 = arith.constant 0 : i32
    %c0_i32_1 = arith.constant 0 : i32
    return %c0_i32, %c0_i32_0 : i32, i32
  }
  func.func @transform_8(%arg0: i32, %arg1: i32) -> (i32, i32, i32) {
    %c0_i32 = arith.constant 0 : i32
    %c0_i32_0 = arith.constant 0 : i32
    return %arg0, %arg1, %c0_i32 : i32, i32, i32
  }
}

module attributes {stable_mosaic.version = 11 : i64} {
  func.func @_attn_block_kernel(%arg0: i32, %arg1: i32, %arg2: memref<2x256x128xf32, #tpu.memory_space<any>>, %arg3: memref<1x128x128xf32, #tpu.memory_space<vmem>>, %arg4: memref<8x128xf32, #tpu.memory_space<vmem>>, %arg5: memref<128x128xf32, #tpu.memory_space<vmem>>, %arg6: memref<128x128xbf16, #tpu.memory_space<vmem>>, %arg7: memref<128x128xbf16, #tpu.memory_space<vmem>>, %arg8: memref<128x128xbf16, #tpu.memory_space<vmem>>, %arg9: memref<128x128xbf16, #tpu.memory_space<vmem>>, %arg10: memref<1x128x128xf32, #tpu.memory_space<vmem>>, %arg11: memref<128x256xbf16, #tpu.memory_space<vmem>>, %arg12: memref<256x128xbf16, #tpu.memory_space<vmem>>, %arg13: memref<1x128xf32, #tpu.memory_space<vmem>>, %arg14: memref<1x128xf32, #tpu.memory_space<vmem>>, %arg15: memref<2x128x128xf32, #tpu.memory_space<vmem>>, %arg16: memref<2x!tpu.dma_semaphore, #tpu.memory_space<semaphore_mem>>, %arg17: memref<128x1xf32, #tpu.memory_space<vmem>>, %arg18: memref<128x1xf32, #tpu.memory_space<vmem>>, %arg19: memref<128x128xf32, #tpu.memory_space<vmem>>) attributes {dimension_semantics = [#tpu.dimension_semantics<parallel>, #tpu.dimension_semantics<arbitrary>], iteration_bounds = array<i64: 2, 2>, scalar_prefetch = 0 : i64, scratch_operands = 9 : i64, tpu.core_type = #tpu.core_type<tc>, window_params = [{}, {transform_indices = @transform_1, window_bounds = array<i64: 1, 128, 128>}, {pipeline_mode = #tpu.pipeline_mode<synchronous>, transform_indices = @transform_2, window_bounds = array<i64: 8, 128>}, {pipeline_mode = #tpu.pipeline_mode<synchronous>, transform_indices = @transform_3, window_bounds = array<i64: 128, 128>}, {pipeline_mode = #tpu.pipeline_mode<synchronous>, transform_indices = @transform_4, window_bounds = array<i64: 128, 128>}, {pipeline_mode = #tpu.pipeline_mode<synchronous>, transform_indices = @transform_5, window_bounds = array<i64: 128, 128>}, {pipeline_mode = #tpu.pipeline_mode<synchronous>, transform_indices = @transform_6, window_bounds = array<i64: 128, 128>}, {pipeline_mode = #tpu.pipeline_mode<synchronous>, transform_indices = @transform_7, window_bounds = array<i64: 128, 128>}, {transform_indices = @transform_8, window_bounds = array<i64: 1, 128, 128>}]} {
    %c0_i32 = arith.constant 0 : i32
    %0 = arith.cmpi eq, %arg1, %c0_i32 : i32
    %1 = arith.extui %0 : i1 to i32
    %c0_i32_0 = arith.constant 0 : i32
    %2 = arith.cmpi ne, %1, %c0_i32_0 : i32
    scf.if %2 {
      %c0_35 = arith.constant 0 : index
      %c0_36 = arith.constant 0 : index
      %42 = vector.load %arg4[%c0_35, %c0_36] : memref<8x128xf32, #tpu.memory_space<vmem>>, vector<1x128xf32>
      %c1 = arith.constant 1 : index
      %c0_37 = arith.constant 0 : index
      %43 = vector.load %arg4[%c1, %c0_37] : memref<8x128xf32, #tpu.memory_space<vmem>>, vector<1x128xf32>
      %c3 = arith.constant 3 : index
      %c0_38 = arith.constant 0 : index
      %44 = vector.load %arg4[%c3, %c0_38] : memref<8x128xf32, #tpu.memory_space<vmem>>, vector<1x128xf32>
      %c4 = arith.constant 4 : index
      %c0_39 = arith.constant 0 : index
      %45 = vector.load %arg4[%c4, %c0_39] : memref<8x128xf32, #tpu.memory_space<vmem>>, vector<1x128xf32>
      %c0_i32_40 = arith.constant 0 : i32
      %46 = tpu.assume_multiple %c0_i32_40, 128 : i32
      %c0_i32_41 = arith.constant 0 : i32
      %c0_i32_42 = arith.constant 0 : i32
      %c0_i32_43 = arith.constant 0 : i32
      %47 = tpu.memref_slice %arg2[%arg0, %46, %c0_i32_43] : memref<2x256x128xf32, #tpu.memory_space<any>> -> memref<1x128x128xf32, #tpu.memory_space<any>>
      %48 = tpu.memref_squeeze %47 : memref<1x128x128xf32, #tpu.memory_space<any>> -> memref<128x128xf32, #tpu.memory_space<any>>
      %c0_i32_44 = arith.constant 0 : i32
      %c0_i32_45 = arith.constant 0 : i32
      %49 = tpu.memref_slice %arg15[%c0_i32_41, %c0_i32_44, %c0_i32_45] : memref<2x128x128xf32, #tpu.memory_space<vmem>> -> memref<1x128x128xf32, #tpu.memory_space<vmem>>
      %50 = tpu.memref_squeeze %49 : memref<1x128x128xf32, #tpu.memory_space<vmem>> -> memref<128x128xf32, #tpu.memory_space<vmem>>
      %51 = tpu.memref_slice %arg16[%c0_i32_42] : memref<2x!tpu.dma_semaphore, #tpu.memory_space<semaphore_mem>> -> memref<1x!tpu.dma_semaphore, #tpu.memory_space<semaphore_mem>>
      %52 = tpu.memref_squeeze %51 : memref<1x!tpu.dma_semaphore, #tpu.memory_space<semaphore_mem>> -> memref<!tpu.dma_semaphore, #tpu.memory_space<semaphore_mem>>
      tpu.enqueue_dma source(%48 : memref<128x128xf32, #tpu.memory_space<any>>) target(%50 : memref<128x128xf32, #tpu.memory_space<vmem>>) target_semaphore(%52 : memref<!tpu.dma_semaphore, #tpu.memory_space<semaphore_mem>>)
      %cst_46 = arith.constant 0.000000e+00 : f32
      %53 = vector.broadcast %cst_46 : f32 to vector<1x128xf32>
      %c0_i32_47 = arith.constant 0 : i32
      %c2_i32_48 = arith.constant 2 : i32
      %54 = arith.addi %c0_i32_47, %c2_i32_48 : i32
      %c1_i32_49 = arith.constant 1 : i32
      %55:2 = scf.for %arg20 = %c0_i32_47 to %54 step %c1_i32_49 iter_args(%arg21 = %53, %arg22 = %53) -> (vector<1x128xf32>, vector<1x128xf32>)  : i32 {
        %c1_i32_68 = arith.constant 1 : i32
        %75 = arith.andi %arg20, %c1_i32_68 : i32
        %c128_i32 = arith.constant 128 : i32
        %76 = arith.muli %arg20, %c128_i32 : i32
        %77 = tpu.assume_multiple %76, 128 : i32
        %c0_i32_69 = arith.constant 0 : i32
        %78 = tpu.memref_slice %arg2[%arg0, %77, %c0_i32_69] : memref<2x256x128xf32, #tpu.memory_space<any>> -> memref<1x128x128xf32, #tpu.memory_space<any>>
        %79 = tpu.memref_squeeze %78 : memref<1x128x128xf32, #tpu.memory_space<any>> -> memref<128x128xf32, #tpu.memory_space<any>>
        %c0_i32_70 = arith.constant 0 : i32
        %c0_i32_71 = arith.constant 0 : i32
        %80 = tpu.memref_slice %arg15[%75, %c0_i32_70, %c0_i32_71] : memref<2x128x128xf32, #tpu.memory_space<vmem>> -> memref<1x128x128xf32, #tpu.memory_space<vmem>>
        %81 = tpu.memref_squeeze %80 : memref<1x128x128xf32, #tpu.memory_space<vmem>> -> memref<128x128xf32, #tpu.memory_space<vmem>>
        %82 = tpu.memref_slice %arg16[%75] : memref<2x!tpu.dma_semaphore, #tpu.memory_space<semaphore_mem>> -> memref<1x!tpu.dma_semaphore, #tpu.memory_space<semaphore_mem>>
        %83 = tpu.memref_squeeze %82 : memref<1x!tpu.dma_semaphore, #tpu.memory_space<semaphore_mem>> -> memref<!tpu.dma_semaphore, #tpu.memory_space<semaphore_mem>>
        tpu.wait_dma2 semaphore(%83 : memref<!tpu.dma_semaphore, #tpu.memory_space<semaphore_mem>>) src(%79 : memref<128x128xf32, #tpu.memory_space<any>>) dst(%81 : memref<128x128xf32, #tpu.memory_space<vmem>>)
        %c1_i32_72 = arith.constant 1 : i32
        %84 = arith.addi %arg20, %c1_i32_72 : i32
        %c2_i32_73 = arith.constant 2 : i32
        %85 = arith.cmpi slt, %84, %c2_i32_73 : i32
        %86 = arith.extui %85 : i1 to i32
        %c0_i32_74 = arith.constant 0 : i32
        %87 = arith.cmpi ne, %86, %c0_i32_74 : i32
        scf.if %87 {
          %c1_i32_82 = arith.constant 1 : i32
          %102 = arith.addi %arg20, %c1_i32_82 : i32
          %c1_i32_83 = arith.constant 1 : i32
          %103 = arith.subi %c1_i32_83, %75 : i32
          %c128_i32_84 = arith.constant 128 : i32
          %104 = arith.muli %102, %c128_i32_84 : i32
          %105 = tpu.assume_multiple %104, 128 : i32
          %c0_i32_85 = arith.constant 0 : i32
          %106 = tpu.memref_slice %arg2[%arg0, %105, %c0_i32_85] : memref<2x256x128xf32, #tpu.memory_space<any>> -> memref<1x128x128xf32, #tpu.memory_space<any>>
          %107 = tpu.memref_squeeze %106 : memref<1x128x128xf32, #tpu.memory_space<any>> -> memref<128x128xf32, #tpu.memory_space<any>>
          %c0_i32_86 = arith.constant 0 : i32
          %c0_i32_87 = arith.constant 0 : i32
          %108 = tpu.memref_slice %arg15[%103, %c0_i32_86, %c0_i32_87] : memref<2x128x128xf32, #tpu.memory_space<vmem>> -> memref<1x128x128xf32, #tpu.memory_space<vmem>>
          %109 = tpu.memref_squeeze %108 : memref<1x128x128xf32, #tpu.memory_space<vmem>> -> memref<128x128xf32, #tpu.memory_space<vmem>>
          %110 = tpu.memref_slice %arg16[%103] : memref<2x!tpu.dma_semaphore, #tpu.memory_space<semaphore_mem>> -> memref<1x!tpu.dma_semaphore, #tpu.memory_space<semaphore_mem>>
          %111 = tpu.memref_squeeze %110 : memref<1x!tpu.dma_semaphore, #tpu.memory_space<semaphore_mem>> -> memref<!tpu.dma_semaphore, #tpu.memory_space<semaphore_mem>>
          tpu.enqueue_dma source(%107 : memref<128x128xf32, #tpu.memory_space<any>>) target(%109 : memref<128x128xf32, #tpu.memory_space<vmem>>) target_semaphore(%111 : memref<!tpu.dma_semaphore, #tpu.memory_space<semaphore_mem>>)
        } else {
        }
        %c1_i32_75 = arith.constant 1 : i32
        %88 = arith.addi %arg20, %c1_i32_75 : i32
        %c2_i32_76 = arith.constant 2 : i32
        %89 = arith.cmpi eq, %88, %c2_i32_76 : i32
        %90 = arith.extui %89 : i1 to i32
        %c0_i32_77 = arith.constant 0 : i32
        %91 = arith.cmpi ne, %90, %c0_i32_77 : i32
        scf.if %91 {
          %c1_i32_82 = arith.constant 1 : i32
          %102 = arith.subi %c1_i32_82, %75 : i32
          %c0_i32_83 = arith.constant 0 : i32
          %103 = tpu.assume_multiple %c0_i32_83, 128 : i32
          %c0_i32_84 = arith.constant 0 : i32
          %104 = tpu.memref_slice %arg2[%arg0, %103, %c0_i32_84] : memref<2x256x128xf32, #tpu.memory_space<any>> -> memref<1x128x128xf32, #tpu.memory_space<any>>
          %105 = tpu.memref_squeeze %104 : memref<1x128x128xf32, #tpu.memory_space<any>> -> memref<128x128xf32, #tpu.memory_space<any>>
          %c0_i32_85 = arith.constant 0 : i32
          %c0_i32_86 = arith.constant 0 : i32
          %106 = tpu.memref_slice %arg15[%102, %c0_i32_85, %c0_i32_86] : memref<2x128x128xf32, #tpu.memory_space<vmem>> -> memref<1x128x128xf32, #tpu.memory_space<vmem>>
          %107 = tpu.memref_squeeze %106 : memref<1x128x128xf32, #tpu.memory_space<vmem>> -> memref<128x128xf32, #tpu.memory_space<vmem>>
          %108 = tpu.memref_slice %arg16[%102] : memref<2x!tpu.dma_semaphore, #tpu.memory_space<semaphore_mem>> -> memref<1x!tpu.dma_semaphore, #tpu.memory_space<semaphore_mem>>
          %109 = tpu.memref_squeeze %108 : memref<1x!tpu.dma_semaphore, #tpu.memory_space<semaphore_mem>> -> memref<!tpu.dma_semaphore, #tpu.memory_space<semaphore_mem>>
          tpu.enqueue_dma source(%105 : memref<128x128xf32, #tpu.memory_space<any>>) target(%107 : memref<128x128xf32, #tpu.memory_space<vmem>>) target_semaphore(%109 : memref<!tpu.dma_semaphore, #tpu.memory_space<semaphore_mem>>)
        } else {
        }
        %92 = arith.index_cast %75 : i32 to index
        %c0_78 = arith.constant 0 : index
        %c0_79 = arith.constant 0 : index
        %93 = vector.load %arg15[%92, %c0_78, %c0_79] : memref<2x128x128xf32, #tpu.memory_space<vmem>>, vector<1x128x128xf32>
        %94 = vector.shape_cast %93 : vector<1x128x128xf32> to vector<128x128xf32>
        %cst_80 = arith.constant dense<0.000000e+00> : vector<128xf32>
        %95 = vector.multi_reduction <add>, %94, %cst_80 [0] : vector<128x128xf32> to vector<128xf32>
        %96 = vector.shape_cast %95 : vector<128xf32> to vector<1x128xf32>
        %97 = arith.addf %arg21, %96 : vector<1x128xf32>
        %98 = arith.mulf %94, %94 : vector<128x128xf32>
        %cst_81 = arith.constant dense<0.000000e+00> : vector<128xf32>
        %99 = vector.multi_reduction <add>, %98, %cst_81 [0] : vector<128x128xf32> to vector<128xf32>
        %100 = vector.shape_cast %99 : vector<128xf32> to vector<1x128xf32>
        %101 = arith.addf %arg22, %100 : vector<1x128xf32>
        scf.yield %97, %101 : vector<1x128xf32>, vector<1x128xf32>
      }
      %c2_i32_50 = arith.constant 2 : i32
      %c0_51 = arith.constant 0 : index
      %c0_52 = arith.constant 0 : index
      %56 = vector.load %arg5[%c0_51, %c0_52] : memref<128x128xf32, #tpu.memory_space<vmem>>, vector<128x128xf32>
      %cst_53 = arith.constant dense<0.000000e+00> : vector<1x128xf32>
      %57 = tpu.matmul %55#0, %56, %cst_53 {dimension_numbers = #tpu.dot_dimension_numbers<[1], [0], [0], [1], [0, 0, 1, 1], [], []>} : vector<1x128xf32>, vector<128x128xf32>, vector<1x128xf32> -> vector<1x128xf32>
      %cst_54 = arith.constant 9.765625E-4 : f32
      %58 = vector.broadcast %cst_54 : f32 to vector<1x128xf32>
      %59 = arith.mulf %57, %58 : vector<1x128xf32>
      %c0_55 = arith.constant 0 : index
      %c0_56 = arith.constant 0 : index
      %60 = vector.load %arg5[%c0_55, %c0_56] : memref<128x128xf32, #tpu.memory_space<vmem>>, vector<128x128xf32>
      %cst_57 = arith.constant dense<0.000000e+00> : vector<1x128xf32>
      %61 = tpu.matmul %55#1, %60, %cst_57 {dimension_numbers = #tpu.dot_dimension_numbers<[1], [0], [0], [1], [0, 0, 1, 1], [], []>} : vector<1x128xf32>, vector<128x128xf32>, vector<1x128xf32> -> vector<1x128xf32>
      %cst_58 = arith.constant 9.765625E-4 : f32
      %62 = vector.broadcast %cst_58 : f32 to vector<1x128xf32>
      %63 = arith.mulf %61, %62 : vector<1x128xf32>
      %64 = arith.mulf %59, %59 : vector<1x128xf32>
      %65 = arith.subf %63, %64 : vector<1x128xf32>
      %cst_59 = arith.constant 9.99999997E-7 : f32
      %66 = vector.broadcast %cst_59 : f32 to vector<1x128xf32>
      %67 = arith.addf %65, %66 : vector<1x128xf32>
      %68 = math.rsqrt %67 : vector<1x128xf32>
      %69 = arith.mulf %68, %42 : vector<1x128xf32>
      %70 = arith.mulf %59, %69 : vector<1x128xf32>
      %71 = arith.subf %43, %70 : vector<1x128xf32>
      %c0_60 = arith.constant 0 : index
      %c0_61 = arith.constant 0 : index
      %72 = vector.load %arg13[%c0_60, %c0_61] : memref<1x128xf32, #tpu.memory_space<vmem>>, vector<1x128xf32>
      tpu.vector_store %arg13[%c0_60, %c0_61], %69 {strides = array<i32>} : memref<1x128xf32, #tpu.memory_space<vmem>>, vector<1x128xf32>,
      %c0_62 = arith.constant 0 : index
      %c0_63 = arith.constant 0 : index
      %73 = vector.load %arg14[%c0_62, %c0_63] : memref<1x128xf32, #tpu.memory_space<vmem>>, vector<1x128xf32>
      tpu.vector_store %arg14[%c0_62, %c0_63], %71 {strides = array<i32>} : memref<1x128xf32, #tpu.memory_space<vmem>>, vector<1x128xf32>,
      %c0_i32_64 = arith.constant 0 : i32
      %c2_i32_65 = arith.constant 2 : i32
      %74 = arith.addi %c0_i32_64, %c2_i32_65 : i32
      %c1_i32_66 = arith.constant 1 : i32
      scf.for %arg20 = %c0_i32_64 to %74 step %c1_i32_66  : i32 {
        %c1_i32_68 = arith.constant 1 : i32
        %75 = arith.muli %arg20, %c1_i32_68 : i32
        %c0_i32_69 = arith.constant 0 : i32
        %76 = arith.addi %c0_i32_69, %75 : i32
        %c2_i32_70 = arith.constant 2 : i32
        %77 = arith.addi %c2_i32_70, %76 : i32
        %c1_i32_71 = arith.constant 1 : i32
        %78 = arith.andi %77, %c1_i32_71 : i32
        %c128_i32 = arith.constant 128 : i32
        %79 = arith.muli %76, %c128_i32 : i32
        %80 = tpu.assume_multiple %79, 128 : i32
        %c0_i32_72 = arith.constant 0 : i32
        %81 = tpu.memref_slice %arg2[%arg0, %80, %c0_i32_72] : memref<2x256x128xf32, #tpu.memory_space<any>> -> memref<1x128x128xf32, #tpu.memory_space<any>>
        %82 = tpu.memref_squeeze %81 : memref<1x128x128xf32, #tpu.memory_space<any>> -> memref<128x128xf32, #tpu.memory_space<any>>
        %c0_i32_73 = arith.constant 0 : i32
        %c0_i32_74 = arith.constant 0 : i32
        %83 = tpu.memref_slice %arg15[%78, %c0_i32_73, %c0_i32_74] : memref<2x128x128xf32, #tpu.memory_space<vmem>> -> memref<1x128x128xf32, #tpu.memory_space<vmem>>
        %84 = tpu.memref_squeeze %83 : memref<1x128x128xf32, #tpu.memory_space<vmem>> -> memref<128x128xf32, #tpu.memory_space<vmem>>
        %85 = tpu.memref_slice %arg16[%78] : memref<2x!tpu.dma_semaphore, #tpu.memory_space<semaphore_mem>> -> memref<1x!tpu.dma_semaphore, #tpu.memory_space<semaphore_mem>>
        %86 = tpu.memref_squeeze %85 : memref<1x!tpu.dma_semaphore, #tpu.memory_space<semaphore_mem>> -> memref<!tpu.dma_semaphore, #tpu.memory_space<semaphore_mem>>
        tpu.wait_dma2 semaphore(%86 : memref<!tpu.dma_semaphore, #tpu.memory_space<semaphore_mem>>) src(%82 : memref<128x128xf32, #tpu.memory_space<any>>) dst(%84 : memref<128x128xf32, #tpu.memory_space<vmem>>)
        %c1_i32_75 = arith.constant 1 : i32
        %87 = arith.addi %76, %c1_i32_75 : i32
        %c2_i32_76 = arith.constant 2 : i32
        %88 = arith.cmpi slt, %87, %c2_i32_76 : i32
        %89 = arith.extui %88 : i1 to i32
        %c0_i32_77 = arith.constant 0 : i32
        %90 = arith.cmpi ne, %89, %c0_i32_77 : i32
        scf.if %90 {
          %c1_i32_89 = arith.constant 1 : i32
          %116 = arith.addi %76, %c1_i32_89 : i32
          %c1_i32_90 = arith.constant 1 : i32
          %117 = arith.subi %c1_i32_90, %78 : i32
          %c128_i32_91 = arith.constant 128 : i32
          %118 = arith.muli %116, %c128_i32_91 : i32
          %119 = tpu.assume_multiple %118, 128 : i32
          %c0_i32_92 = arith.constant 0 : i32
          %120 = tpu.memref_slice %arg2[%arg0, %119, %c0_i32_92] : memref<2x256x128xf32, #tpu.memory_space<any>> -> memref<1x128x128xf32, #tpu.memory_space<any>>
          %121 = tpu.memref_squeeze %120 : memref<1x128x128xf32, #tpu.memory_space<any>> -> memref<128x128xf32, #tpu.memory_space<any>>
          %c0_i32_93 = arith.constant 0 : i32
          %c0_i32_94 = arith.constant 0 : i32
          %122 = tpu.memref_slice %arg15[%117, %c0_i32_93, %c0_i32_94] : memref<2x128x128xf32, #tpu.memory_space<vmem>> -> memref<1x128x128xf32, #tpu.memory_space<vmem>>
          %123 = tpu.memref_squeeze %122 : memref<1x128x128xf32, #tpu.memory_space<vmem>> -> memref<128x128xf32, #tpu.memory_space<vmem>>
          %124 = tpu.memref_slice %arg16[%117] : memref<2x!tpu.dma_semaphore, #tpu.memory_space<semaphore_mem>> -> memref<1x!tpu.dma_semaphore, #tpu.memory_space<semaphore_mem>>
          %125 = tpu.memref_squeeze %124 : memref<1x!tpu.dma_semaphore, #tpu.memory_space<semaphore_mem>> -> memref<!tpu.dma_semaphore, #tpu.memory_space<semaphore_mem>>
          tpu.enqueue_dma source(%121 : memref<128x128xf32, #tpu.memory_space<any>>) target(%123 : memref<128x128xf32, #tpu.memory_space<vmem>>) target_semaphore(%125 : memref<!tpu.dma_semaphore, #tpu.memory_space<semaphore_mem>>)
        } else {
        }
        %c128_i32_78 = arith.constant 128 : i32
        %91 = arith.muli %76, %c128_i32_78 : i32
        %92 = tpu.assume_multiple %91, 128 : i32
        %93 = arith.index_cast %78 : i32 to index
        %c0_79 = arith.constant 0 : index
        %c0_80 = arith.constant 0 : index
        %94 = vector.load %arg15[%93, %c0_79, %c0_80] : memref<2x128x128xf32, #tpu.memory_space<vmem>>, vector<1x128x128xf32>
        %95 = vector.shape_cast %94 : vector<1x128x128xf32> to vector<128x128xf32>
        %96 = vector.broadcast %69 : vector<1x128xf32> to vector<128x128xf32>
        %97 = arith.mulf %95, %96 : vector<128x128xf32>
        %98 = vector.broadcast %71 : vector<1x128xf32> to vector<128x128xf32>
        %99 = arith.addf %97, %98 : vector<128x128xf32>
        %100 = arith.truncf %99 : vector<128x128xf32> to vector<128x128xbf16>
        %c0_81 = arith.constant 0 : index
        %c0_82 = arith.constant 0 : index
        %101 = vector.load %arg7[%c0_81, %c0_82] : memref<128x128xbf16, #tpu.memory_space<vmem>>, vector<128x128xbf16>
        %cst_83 = arith.constant dense<0.000000e+00> : vector<128x128xf32>
        %102 = tpu.matmul %100, %101, %cst_83 {dimension_numbers = #tpu.dot_dimension_numbers<[1], [0], [0], [1], [0, 0, 1, 1], [], []>} : vector<128x128xbf16>, vector<128x128xbf16>, vector<128x128xf32> -> vector<128x128xf32>
        %103 = vector.broadcast %44 : vector<1x128xf32> to vector<128x128xf32>
        %104 = arith.addf %102, %103 : vector<128x128xf32>
        %c0_84 = arith.constant 0 : index
        %c0_85 = arith.constant 0 : index
        %105 = vector.load %arg8[%c0_84, %c0_85] : memref<128x128xbf16, #tpu.memory_space<vmem>>, vector<128x128xbf16>
        %cst_86 = arith.constant dense<0.000000e+00> : vector<128x128xf32>
        %106 = tpu.matmul %100, %105, %cst_86 {dimension_numbers = #tpu.dot_dimension_numbers<[1], [0], [0], [1], [0, 0, 1, 1], [], []>} : vector<128x128xbf16>, vector<128x128xbf16>, vector<128x128xf32> -> vector<128x128xf32>
        %107 = vector.broadcast %45 : vector<1x128xf32> to vector<128x128xf32>
        %108 = arith.addf %106, %107 : vector<128x128xf32>
        %109 = tpu.transpose %104, [1, 0] : vector<128x128xf32> -> vector<128x128xf32>
        %110 = arith.truncf %109 : vector<128x128xf32> to vector<128x128xbf16>
        %c0_87 = arith.constant 0 : index
        %111 = arith.index_cast %92 : i32 to index
        %112 = vector.load %arg11[%c0_87, %111] : memref<128x256xbf16, #tpu.memory_space<vmem>>, vector<128x128xbf16>
        tpu.vector_store %arg11[%c0_87, %111], %110 {strides = array<i32>} : memref<128x256xbf16, #tpu.memory_space<vmem>>, vector<128x128xbf16>,
        %113 = arith.truncf %108 : vector<128x128xf32> to vector<128x128xbf16>
        %114 = arith.index_cast %92 : i32 to index
        %c0_88 = arith.constant 0 : index
        %115 = vector.load %arg12[%114, %c0_88] : memref<256x128xbf16, #tpu.memory_space<vmem>>, vector<128x128xbf16>
        tpu.vector_store %arg12[%114, %c0_88], %113 {strides = array<i32>} : memref<256x128xbf16, #tpu.memory_space<vmem>>, vector<128x128xbf16>,
      }
      %c2_i32_67 = arith.constant 2 : i32
    } else {
    }
    %c0 = arith.constant 0 : index
    %c0_1 = arith.constant 0 : index
    %3 = vector.load %arg13[%c0, %c0_1] : memref<1x128xf32, #tpu.memory_space<vmem>>, vector<1x128xf32>
    %c0_2 = arith.constant 0 : index
    %c0_3 = arith.constant 0 : index
    %4 = vector.load %arg14[%c0_2, %c0_3] : memref<1x128xf32, #tpu.memory_space<vmem>>, vector<1x128xf32>
    %c0_4 = arith.constant 0 : index
    %c0_5 = arith.constant 0 : index
    %c0_6 = arith.constant 0 : index
    %5 = vector.load %arg3[%c0_4, %c0_5, %c0_6] : memref<1x128x128xf32, #tpu.memory_space<vmem>>, vector<1x128x128xf32>
    %6 = vector.shape_cast %5 : vector<1x128x128xf32> to vector<128x128xf32>
    %7 = vector.broadcast %3 : vector<1x128xf32> to vector<128x128xf32>
    %8 = arith.mulf %6, %7 : vector<128x128xf32>
    %9 = vector.broadcast %4 : vector<1x128xf32> to vector<128x128xf32>
    %10 = arith.addf %8, %9 : vector<128x128xf32>
    %11 = arith.truncf %10 : vector<128x128xf32> to vector<128x128xbf16>
    %c2 = arith.constant 2 : index
    %c0_7 = arith.constant 0 : index
    %12 = vector.load %arg4[%c2, %c0_7] : memref<8x128xf32, #tpu.memory_space<vmem>>, vector<1x128xf32>
    %c0_8 = arith.constant 0 : index
    %c0_9 = arith.constant 0 : index
    %13 = vector.load %arg6[%c0_8, %c0_9] : memref<128x128xbf16, #tpu.memory_space<vmem>>, vector<128x128xbf16>
    %cst = arith.constant dense<0.000000e+00> : vector<128x128xf32>
    %14 = tpu.matmul %11, %13, %cst {dimension_numbers = #tpu.dot_dimension_numbers<[1], [0], [0], [1], [0, 0, 1, 1], [], []>} : vector<128x128xbf16>, vector<128x128xbf16>, vector<128x128xf32> -> vector<128x128xf32>
    %15 = vector.broadcast %12 : vector<1x128xf32> to vector<128x128xf32>
    %16 = arith.addf %14, %15 : vector<128x128xf32>
    %17 = arith.truncf %16 : vector<128x128xf32> to vector<128x128xbf16>
    %cst_10 = arith.constant 0xFF800000 : f32
    %18 = vector.broadcast %cst_10 : f32 to vector<128x1xf32>
    %c0_11 = arith.constant 0 : index
    %c0_12 = arith.constant 0 : index
    %19 = vector.load %arg17[%c0_11, %c0_12] : memref<128x1xf32, #tpu.memory_space<vmem>>, vector<128x1xf32>
    tpu.vector_store %arg17[%c0_11, %c0_12], %18 {strides = array<i32>} : memref<128x1xf32, #tpu.memory_space<vmem>>, vector<128x1xf32>,
    %cst_13 = arith.constant 0.000000e+00 : f32
    %20 = vector.broadcast %cst_13 : f32 to vector<128x1xf32>
    %c0_14 = arith.constant 0 : index
    %c0_15 = arith.constant 0 : index
    %21 = vector.load %arg18[%c0_14, %c0_15] : memref<128x1xf32, #tpu.memory_space<vmem>>, vector<128x1xf32>
    tpu.vector_store %arg18[%c0_14, %c0_15], %20 {strides = array<i32>} : memref<128x1xf32, #tpu.memory_space<vmem>>, vector<128x1xf32>,
    %cst_16 = arith.constant 0.000000e+00 : f32
    %22 = vector.broadcast %cst_16 : f32 to vector<128x128xf32>
    %c0_17 = arith.constant 0 : index
    %c0_18 = arith.constant 0 : index
    %23 = vector.load %arg19[%c0_17, %c0_18] : memref<128x128xf32, #tpu.memory_space<vmem>>, vector<128x128xf32>
    tpu.vector_store %arg19[%c0_17, %c0_18], %22 {strides = array<i32>} : memref<128x128xf32, #tpu.memory_space<vmem>>, vector<128x128xf32>,
    %c0_i32_19 = arith.constant 0 : i32
    %c2_i32 = arith.constant 2 : i32
    %24 = arith.addi %c0_i32_19, %c2_i32 : i32
    %c1_i32 = arith.constant 1 : i32
    scf.for %arg20 = %c0_i32_19 to %24 step %c1_i32  : i32 {
      %c128_i32 = arith.constant 128 : i32
      %42 = arith.muli %arg20, %c128_i32 : i32
      %43 = tpu.assume_multiple %42, 128 : i32
      %c0_35 = arith.constant 0 : index
      %44 = arith.index_cast %43 : i32 to index
      %45 = vector.load %arg11[%c0_35, %44] : memref<128x256xbf16, #tpu.memory_space<vmem>>, vector<128x128xbf16>
      %46 = arith.index_cast %43 : i32 to index
      %c0_36 = arith.constant 0 : index
      %47 = vector.load %arg12[%46, %c0_36] : memref<256x128xbf16, #tpu.memory_space<vmem>>, vector<128x128xbf16>
      %cst_37 = arith.constant dense<0.000000e+00> : vector<128x128xf32>
      %48 = tpu.matmul %17, %45, %cst_37 {dimension_numbers = #tpu.dot_dimension_numbers<[1], [0], [0], [1], [0, 0, 1, 1], [], []>} : vector<128x128xbf16>, vector<128x128xbf16>, vector<128x128xf32> -> vector<128x128xf32>
      %c0_38 = arith.constant 0 : index
      %c0_39 = arith.constant 0 : index
      %49 = vector.load %arg17[%c0_38, %c0_39] : memref<128x1xf32, #tpu.memory_space<vmem>>, vector<128x1xf32>
      %cst_40 = arith.constant dense<0xFF800000> : vector<128xf32>
      %50 = vector.multi_reduction <maximumf>, %48, %cst_40 [1] : vector<128x128xf32> to vector<128xf32>
      %51 = vector.shape_cast %50 : vector<128xf32> to vector<128x1xf32>
      %52 = arith.maximumf %49, %51 : vector<128x1xf32>
      %53 = arith.subf %49, %52 : vector<128x1xf32>
      %54 = math.exp %53 : vector<128x1xf32>
      %55 = vector.broadcast %52 : vector<128x1xf32> to vector<128x128xf32>
      %56 = arith.subf %48, %55 : vector<128x128xf32>
      %57 = math.exp %56 : vector<128x128xf32>
      %c0_41 = arith.constant 0 : index
      %c0_42 = arith.constant 0 : index
      %58 = vector.load %arg18[%c0_41, %c0_42] : memref<128x1xf32, #tpu.memory_space<vmem>>, vector<128x1xf32>
      %59 = arith.mulf %54, %58 : vector<128x1xf32>
      %cst_43 = arith.constant dense<0.000000e+00> : vector<128xf32>
      %60 = vector.multi_reduction <add>, %57, %cst_43 [1] : vector<128x128xf32> to vector<128xf32>
      %61 = vector.shape_cast %60 : vector<128xf32> to vector<128x1xf32>
      %62 = arith.addf %59, %61 : vector<128x1xf32>
      %c0_44 = arith.constant 0 : index
      %c0_45 = arith.constant 0 : index
      %63 = vector.load %arg18[%c0_44, %c0_45] : memref<128x1xf32, #tpu.memory_space<vmem>>, vector<128x1xf32>
      tpu.vector_store %arg18[%c0_44, %c0_45], %62 {strides = array<i32>} : memref<128x1xf32, #tpu.memory_space<vmem>>, vector<128x1xf32>,
      %c0_46 = arith.constant 0 : index
      %c0_47 = arith.constant 0 : index
      %64 = vector.load %arg19[%c0_46, %c0_47] : memref<128x128xf32, #tpu.memory_space<vmem>>, vector<128x128xf32>
      %65 = vector.broadcast %54 : vector<128x1xf32> to vector<128x128xf32>
      %66 = arith.mulf %65, %64 : vector<128x128xf32>
      %67 = arith.truncf %57 : vector<128x128xf32> to vector<128x128xbf16>
      %cst_48 = arith.constant dense<0.000000e+00> : vector<128x128xf32>
      %68 = tpu.matmul %67, %47, %cst_48 {dimension_numbers = #tpu.dot_dimension_numbers<[1], [0], [0], [1], [0, 0, 1, 1], [], []>} : vector<128x128xbf16>, vector<128x128xbf16>, vector<128x128xf32> -> vector<128x128xf32>
      %69 = arith.addf %66, %68 : vector<128x128xf32>
      %c0_49 = arith.constant 0 : index
      %c0_50 = arith.constant 0 : index
      %70 = vector.load %arg19[%c0_49, %c0_50] : memref<128x128xf32, #tpu.memory_space<vmem>>, vector<128x128xf32>
      tpu.vector_store %arg19[%c0_49, %c0_50], %69 {strides = array<i32>} : memref<128x128xf32, #tpu.memory_space<vmem>>, vector<128x128xf32>,
      %c0_51 = arith.constant 0 : index
      %c0_52 = arith.constant 0 : index
      %71 = vector.load %arg17[%c0_51, %c0_52] : memref<128x1xf32, #tpu.memory_space<vmem>>, vector<128x1xf32>
      tpu.vector_store %arg17[%c0_51, %c0_52], %52 {strides = array<i32>} : memref<128x1xf32, #tpu.memory_space<vmem>>, vector<128x1xf32>,
    }
    %c2_i32_20 = arith.constant 2 : i32
    %c0_21 = arith.constant 0 : index
    %c0_22 = arith.constant 0 : index
    %25 = vector.load %arg19[%c0_21, %c0_22] : memref<128x128xf32, #tpu.memory_space<vmem>>, vector<128x128xf32>
    %c0_23 = arith.constant 0 : index
    %c0_24 = arith.constant 0 : index
    %26 = vector.load %arg18[%c0_23, %c0_24] : memref<128x1xf32, #tpu.memory_space<vmem>>, vector<128x1xf32>
    %27 = tpu.reciprocal %26 {approx = true} : vector<128x1xf32> -> vector<128x1xf32>
    %28 = vector.broadcast %27 : vector<128x1xf32> to vector<128x128xf32>
    %29 = arith.mulf %25, %28 : vector<128x128xf32>
    %c5 = arith.constant 5 : index
    %c0_25 = arith.constant 0 : index
    %30 = vector.load %arg4[%c5, %c0_25] : memref<8x128xf32, #tpu.memory_space<vmem>>, vector<1x128xf32>
    %31 = arith.truncf %29 : vector<128x128xf32> to vector<128x128xbf16>
    %c0_26 = arith.constant 0 : index
    %c0_27 = arith.constant 0 : index
    %32 = vector.load %arg9[%c0_26, %c0_27] : memref<128x128xbf16, #tpu.memory_space<vmem>>, vector<128x128xbf16>
    %cst_28 = arith.constant dense<0.000000e+00> : vector<128x128xf32>
    %33 = tpu.matmul %31, %32, %cst_28 {dimension_numbers = #tpu.dot_dimension_numbers<[1], [0], [0], [1], [0, 0, 1, 1], [], []>} : vector<128x128xbf16>, vector<128x128xbf16>, vector<128x128xf32> -> vector<128x128xf32>
    %34 = vector.broadcast %30 : vector<1x128xf32> to vector<128x128xf32>
    %35 = arith.addf %33, %34 : vector<128x128xf32>
    %c0_29 = arith.constant 0 : index
    %c0_30 = arith.constant 0 : index
    %c0_31 = arith.constant 0 : index
    %36 = vector.load %arg3[%c0_29, %c0_30, %c0_31] : memref<1x128x128xf32, #tpu.memory_space<vmem>>, vector<1x128x128xf32>
    %37 = vector.shape_cast %36 : vector<1x128x128xf32> to vector<128x128xf32>
    %38 = arith.addf %37, %35 : vector<128x128xf32>
    %c0_32 = arith.constant 0 : index
    %c0_33 = arith.constant 0 : index
    %c0_34 = arith.constant 0 : index
    %39 = vector.load %arg10[%c0_32, %c0_33, %c0_34] : memref<1x128x128xf32, #tpu.memory_space<vmem>>, vector<1x128x128xf32>
    %40 = vector.shape_cast %39 : vector<1x128x128xf32> to vector<128x128xf32>
    %41 = vector.shape_cast %38 : vector<128x128xf32> to vector<1x128x128xf32>
    tpu.vector_store %arg10[%c0_32, %c0_33, %c0_34], %41 {strides = array<i32>} : memref<1x128x128xf32, #tpu.memory_space<vmem>>, vector<1x128x128xf32>,
    return
  }
  func.func @transform_1(%arg0: i32, %arg1: i32) -> (i32, i32, i32) {
    %c0_i32 = arith.constant 0 : i32
    %c0_i32_0 = arith.constant 0 : i32
    return %arg0, %arg1, %c0_i32 : i32, i32, i32
  }
  func.func @transform_2(%arg0: i32, %arg1: i32) -> (i32, i32) {
    %c0_i32 = arith.constant 0 : i32
    %c0_i32_0 = arith.constant 0 : i32
    %c0_i32_1 = arith.constant 0 : i32
    return %c0_i32, %c0_i32_0 : i32, i32
  }
  func.func @transform_3(%arg0: i32, %arg1: i32) -> (i32, i32) {
    %c0_i32 = arith.constant 0 : i32
    %c0_i32_0 = arith.constant 0 : i32
    %c0_i32_1 = arith.constant 0 : i32
    return %c0_i32, %c0_i32_0 : i32, i32
  }
  func.func @transform_4(%arg0: i32, %arg1: i32) -> (i32, i32) {
    %c0_i32 = arith.constant 0 : i32
    %c0_i32_0 = arith.constant 0 : i32
    %c0_i32_1 = arith.constant 0 : i32
    return %c0_i32, %c0_i32_0 : i32, i32
  }
  func.func @transform_5(%arg0: i32, %arg1: i32) -> (i32, i32) {
    %c0_i32 = arith.constant 0 : i32
    %c0_i32_0 = arith.constant 0 : i32
    %c0_i32_1 = arith.constant 0 : i32
    return %c0_i32, %c0_i32_0 : i32, i32
  }
  func.func @transform_6(%arg0: i32, %arg1: i32) -> (i32, i32) {
    %c0_i32 = arith.constant 0 : i32
    %c0_i32_0 = arith.constant 0 : i32
    %c0_i32_1 = arith.constant 0 : i32
    return %c0_i32, %c0_i32_0 : i32, i32
  }
  func.func @transform_7(%arg0: i32, %arg1: i32) -> (i32, i32) {
    %c0_i32 = arith.constant 0 : i32
    %c0_i32_0 = arith.constant 0 : i32
    %c0_i32_1 = arith.constant 0 : i32
    return %c0_i32, %c0_i32_0 : i32, i32
  }
  func.func @transform_8(%arg0: i32, %arg1: i32) -> (i32, i32, i32) {
    %c0_i32 = arith.constant 0 : i32
    %c0_i32_0 = arith.constant 0 : i32
    return %arg0, %arg1, %c0_i32 : i32, i32, i32
  }
}

</mosaic_0001>

<llo_original>
// kernel: tpu_custom_call.1
$region0: #{tpu_custom_call.1}
  #allocation0 [shape = 'u32[]', space=smem, size = 0x4, offset = 0x4, fixed_abs, tag = 'smem constant byte address 0x4 - core index']
  #allocation1 [shape = 'u32[72,128]{1,0:T(1,128)}', space=vmem, size = 0x9000, scoped, tag = 'internal scratch']
  #allocation2 [shape = 'bf16[128,256]{1,0:T(8,128)(2,1)}', space=vmem, size = 0x10000, scoped, tag = 'scratch operand']
  #allocation3 [shape = 'bf16[256,128]{1,0:T(8,128)(2,1)}', space=vmem, size = 0x10000, scoped, tag = 'scratch operand']
  #allocation4 [shape = 'f32[1,128]{1,0:T(1,128)}', space=vmem, size = 0x200, scoped, tag = 'scratch operand']
  #allocation5 [shape = 'f32[1,128]{1,0:T(1,128)}', space=vmem, size = 0x200, scoped, tag = 'scratch operand']
  #allocation6 [shape = 'f32[2,128,128]{2,1,0:T(8,128)}', space=vmem, size = 0x20000, scoped, tag = 'scratch operand']
  #allocation7 [shape = 's32[2]{0}', space=sflag, size = 0x8, scoped, tag = 'scratch operand']
  #allocation8 [shape = 'f32[128,1]{1,0:T(8,128)}', space=vmem, size = 0x10000, scoped, tag = 'scratch operand']
  #allocation9 [shape = 'f32[128,1]{1,0:T(8,128)}', space=vmem, size = 0x10000, scoped, tag = 'scratch operand']
  #allocation10 [shape = 'f32[128,128]{1,0:T(8,128)}', space=vmem, size = 0x10000, scoped, tag = 'scratch operand']
  #allocation24 [shape = 's32[]', space=sflag, size = 0x4, offset = 0, fixed_abs, tag = 'sflag constant byte address 0x0 - dummy sync flag']
  #allocation25 [shape = 's32[]', space=sflag, size = 0x4, offset = 0, fixed_abs, tag = 'sflag constant byte address 0x0 - dummy sync flag']
  #allocation26 [shape = 'u32[]', space=smem, size = 0x4, offset = 0x44, fixed_abs, tag = 'smem constant byte address 0x44 - assertion arg 0']
  #allocation27 [shape = 'u32[]', space=smem, size = 0x4, offset = 0x48, fixed_abs, tag = 'smem constant byte address 0x48 - assertion arg 1']
  #allocation28 [shape = 's32[]', space=sflag, size = 0x4, offset = 0, fixed_abs, tag = 'sflag constant byte address 0x0 - dummy sync flag']
  #allocation29 [shape = 's32[]', space=sflag, size = 0x4, offset = 0, fixed_abs, tag = 'sflag constant byte address 0x0 - dummy sync flag']
  #allocation30 [shape = 's32[]', space=sflag, size = 0x4, offset = 0, fixed_abs, tag = 'sflag constant byte address 0x0 - dummy sync flag']
  #allocation31 [shape = 's32[]', space=sflag, size = 0x4, offset = 0, fixed_abs, tag = 'sflag constant byte address 0x0 - dummy sync flag']
  #allocation32 [shape = 's32[]', space=sflag, size = 0x4, offset = 0, fixed_abs, tag = 'sflag constant byte address 0x0 - dummy sync flag']
  #allocation33 [shape = 's32[]', space=sflag, size = 0x4, offset = 0, fixed_abs, tag = 'sflag constant byte address 0x0 - dummy sync flag']
  %s0 = inlined_call_operand.hbm [shape: f32[2,256,128], index: 0, kind: input, shape index: {}]
  %s1 = inlined_call_operand.hbm [shape: f32[2,256,128], index: 1, kind: input, shape index: {}]
  %s2 = inlined_call_operand.hbm [shape: f32[8,128], index: 2, kind: input, shape index: {}]
  %s3 = inlined_call_operand.hbm [shape: f32[128,128], index: 3, kind: input, shape index: {}]
  %s4 = inlined_call_operand.hbm [shape: bf16[128,128], index: 4, kind: input, shape index: {}]
  %s5 = inlined_call_operand.hbm [shape: bf16[128,128], index: 5, kind: input, shape index: {}]
  %s6 = inlined_call_operand.hbm [shape: bf16[128,128], index: 6, kind: input, shape index: {}]
  %s7 = inlined_call_operand.hbm [shape: bf16[128,128], index: 7, kind: input, shape index: {}]
  %s8 = inlined_call_operand.hbm [shape: f32[2,256,128], index: 8, kind: output, shape index: {}]
  %s9 = sld [smem:[#allocation0]]
  $region142: #{tpu_custom_call.1} parent=0
    _
  %s11 = ssub.s32 1, %s9
  %s12 = scalar_select 0, %s11, %s9
  $region1: #{tpu_custom_call.1} parent=0
    #allocation11 [shape = 'u8[131072]{0}', space=vmem, size = 0x20000, scoped, tag = 'input window, operand 1']
    #allocation12 [shape = 's32[2]{0}', space=sflag, size = 0x8, scoped, tag = 'scoped memory for tpu_custom_call.1']
    #allocation13 [shape = 's32[2]{0}', space=sflag, size = 0x8, scoped, tag = 'scoped memory for tpu_custom_call.1']
    #allocation14 [shape = 'u8[4096]{0}', space=vmem, size = 0x1000, scoped, tag = 'input window, operand 2, single buffered']
    #allocation15 [shape = 's32[1]{0}', space=sflag, size = 0x4, scoped, tag = 'scoped memory for tpu_custom_call.1']
    #allocation16 [shape = 'u8[65536]{0}', space=vmem, size = 0x10000, scoped, tag = 'input window, operand 3, single buffered']
    #allocation17 [shape = 'u8[32768]{0}', space=vmem, size = 0x8000, scoped, tag = 'input window, operand 4, single buffered']
    #allocation18 [shape = 's32[1]{0}', space=sflag, size = 0x4, scoped, tag = 'scoped memory for tpu_custom_call.1']
    #allocation19 [shape = 'u8[32768]{0}', space=vmem, size = 0x8000, scoped, tag = 'input window, operand 5, single buffered']
    #allocation20 [shape = 'u8[32768]{0}', space=vmem, size = 0x8000, scoped, tag = 'input window, operand 6, single buffered']
    #allocation21 [shape = 's32[1]{0}', space=sflag, size = 0x4, scoped, tag = 'scoped memory for tpu_custom_call.1']
    #allocation22 [shape = 'u8[32768]{0}', space=vmem, size = 0x8000, scoped, tag = 'input window, operand 7, single buffered']
    #allocation23 [shape = 'u8[131072]{0}', space=vmem, size = 0x20000, scoped, tag = 'output window, operand 0']
    %13 = vsyncpa [#allocation12], 0
    %s14 = scalar_lea.sflag [#allocation12], 1
    %15 = vsyncpa %s14, 0
    %16 = vsyncpa [#allocation15], 0
    %17 = vsyncpa [#allocation18], 0
    %18 = vsyncpa [#allocation21], 0
    %19 = vsyncpa [#allocation13], 0
    %s20 = scalar_lea.sflag [#allocation13], 1
    %21 = vsyncpa %s20, 0
    loop: start=0, step=1, limit=6
    $region2: #{tpu_custom_call.1} parent=1 // loop_pre_header
      _
    $region3: #{tpu_custom_call.1} parent=1 // loop_header
      %s23 = sphi 0, %s27
      %p24 = scmp.ge.s32.totalorder %s23, 6
      %s30 = sphi 0, %s42
      %s31 = sphi 0, %s38
      %s32 = sphi 0, %s30
      %s33 = sphi 0, %s31
      %s34 = sphi 0, %s32
      %s35 = sphi 0, %s33
      %s47 = sphi 0, %s49
      %s50 = sphi 0, %s47
      %s51 = sphi 0, %s50
      %s67 = sphi 0, %s51
      %s71 = sphi 0, %s71
      %s73 = sphi 0, %s71
      %s74 = sphi 0, %s73
      %s88 = sphi 0, %s74
      %s92 = sphi 0, %s92
      %s94 = sphi 0, %s92
      %s95 = sphi 0, %s94
      %s109 = sphi 0, %s95
      %s113 = sphi 0, %s113
      %s115 = sphi 0, %s113
      %s116 = sphi 0, %s115
      %s130 = sphi 0, %s116
      %s134 = sphi 0, %s134
      %s136 = sphi 0, %s134
      %s137 = sphi 0, %s136
      %s151 = sphi 0, %s137
      %s155 = sphi 0, %s155
      %s157 = sphi 0, %s155
      %s158 = sphi 0, %s157
      %s172 = sphi 0, %s158
      %s176 = sphi 0, %s176
      %s178 = sphi 0, %s176
      %s179 = sphi 0, %s178
      %s193 = sphi 0, %s179
      %s201 = sphi 0, %s203
      %s204 = sphi 0, %s201
      %s205 = sphi 0, %s204
      %s221 = sphi 0, %s205
    $region4: #{tpu_custom_call.1} parent=1 // loop_header_branch
      %26 = sbr.rel (%p24) target = $region8
    $region5: #{tpu_custom_call.1} parent=1 // loop_body
      %s28 = ssub.s32 %s23, 1
      %s29 = ssub.s32 %s23, 2
      %s36 = sadd.s32 1, %s31
      %p37 = scmp.ge.s32.totalorder %s36, 2
      %s38 = scalar_select %p37, 0, %s36
      %s39 = sadd.s32 1, %s30
      %s40 = scalar_select %p37, %s39, %s30
      %p41 = scmp.ge.s32.totalorder %s40, 2
      %s42 = scalar_select %p41, 0, %s40
      %s43 = ssub.s32 %s30, %s42
      %s44 = ssub.s32 %s31, %s38
      %s45 = sor.u32 %s43, %s44
      %p46 = scmp.eq.s32.totalorder %s45, 0
      %s48 = sadd.s32 %s47, 1
      %s49 = scalar_select %p46, %s47, %s48
      %p52 = pneg %p46
      %p53 = scmp.eq.s32.totalorder %s23, 3
      %p54 = por %p52, %p53
      %p55 = scmp.ne.s32.totalorder %s47, %s50
      %p56 = scmp.eq.s32.totalorder %s23, 0
      %p57 = por %p55, %p56
      %p58 = scmp.ne.s32.totalorder %s47, %s50
      %p59 = scmp.eq.s32.totalorder %s28, 3
      %p60 = por %p58, %p59
      %p61 = scmp.ne.s32.totalorder %s50, %s51
      %p62 = scmp.eq.s32.totalorder %s28, 0
      %p63 = por %p61, %p62
      %p64 = scmp.ne.s32.totalorder %s50, %s51
      %p65 = scmp.eq.s32.totalorder %s29, 3
      %p66 = por %p64, %p65
      %p68 = scmp.ne.s32.totalorder %s51, %s67
      %p69 = scmp.eq.s32.totalorder %s29, 0
      %p70 = por %p68, %p69
      %s72 = sadd.s32 %s71, 1
      %p75 = scmp.eq.s32.totalorder %s23, 3
      %p76 = scmp.ne.s32.totalorder %s71, %s73
      %p77 = scmp.eq.s32.totalorder %s23, 0
      %p78 = por %p76, %p77
      %p79 = scmp.ne.s32.totalorder %s71, %s73
      %p80 = scmp.eq.s32.totalorder %s28, 3
      %p81 = por %p79, %p80
      %p82 = scmp.ne.s32.totalorder %s73, %s74
      %p83 = scmp.eq.s32.totalorder %s28, 0
      %p84 = por %p82, %p83
      %p85 = scmp.ne.s32.totalorder %s73, %s74
      %p86 = scmp.eq.s32.totalorder %s29, 3
      %p87 = por %p85, %p86
      %p89 = scmp.ne.s32.totalorder %s74, %s88
      %p90 = scmp.eq.s32.totalorder %s29, 0
      %p91 = por %p89, %p90
      %s93 = sadd.s32 %s92, 1
      %p96 = scmp.eq.s32.totalorder %s23, 3
      %p97 = scmp.ne.s32.totalorder %s92, %s94
      %p98 = scmp.eq.s32.totalorder %s23, 0
      %p99 = por %p97, %p98
      %p100 = scmp.ne.s32.totalorder %s92, %s94
      %p101 = scmp.eq.s32.totalorder %s28, 3
      %p102 = por %p100, %p101
      %p103 = scmp.ne.s32.totalorder %s94, %s95
      %p104 = scmp.eq.s32.totalorder %s28, 0
      %p105 = por %p103, %p104
      %p106 = scmp.ne.s32.totalorder %s94, %s95
      %p107 = scmp.eq.s32.totalorder %s29, 3
      %p108 = por %p106, %p107
      %p110 = scmp.ne.s32.totalorder %s95, %s109
      %p111 = scmp.eq.s32.totalorder %s29, 0
      %p112 = por %p110, %p111
      %s114 = sadd.s32 %s113, 1
      %p117 = scmp.eq.s32.totalorder %s23, 3
      %p118 = scmp.ne.s32.totalorder %s113, %s115
      %p119 = scmp.eq.s32.totalorder %s23, 0
      %p120 = por %p118, %p119
      %p121 = scmp.ne.s32.totalorder %s113, %s115
      %p122 = scmp.eq.s32.totalorder %s28, 3
      %p123 = por %p121, %p122
      %p124 = scmp.ne.s32.totalorder %s115, %s116
      %p125 = scmp.eq.s32.totalorder %s28, 0
      %p126 = por %p124, %p125
      %p127 = scmp.ne.s32.totalorder %s115, %s116
      %p128 = scmp.eq.s32.totalorder %s29, 3
      %p129 = por %p127, %p128
      %p131 = scmp.ne.s32.totalorder %s116, %s130
      %p132 = scmp.eq.s32.totalorder %s29, 0
      %p133 = por %p131, %p132
      %s135 = sadd.s32 %s134, 1
      %p138 = scmp.eq.s32.totalorder %s23, 3
      %p139 = scmp.ne.s32.totalorder %s134, %s136
      %p140 = scmp.eq.s32.totalorder %s23, 0
      %p141 = por %p139, %p140
      %p142 = scmp.ne.s32.totalorder %s134, %s136
      %p143 = scmp.eq.s32.totalorder %s28, 3
      %p144 = por %p142, %p143
      %p145 = scmp.ne.s32.totalorder %s136, %s137
      %p146 = scmp.eq.s32.totalorder %s28, 0
      %p147 = por %p145, %p146
      %p148 = scmp.ne.s32.totalorder %s136, %s137
      %p149 = scmp.eq.s32.totalorder %s29, 3
      %p150 = por %p148, %p149
      %p152 = scmp.ne.s32.totalorder %s137, %s151
      %p153 = scmp.eq.s32.totalorder %s29, 0
      %p154 = por %p152, %p153
      %s156 = sadd.s32 %s155, 1
      %p159 = scmp.eq.s32.totalorder %s23, 3
      %p160 = scmp.ne.s32.totalorder %s155, %s157
      %p161 = scmp.eq.s32.totalorder %s23, 0
      %p162 = por %p160, %p161
      %p163 = scmp.ne.s32.totalorder %s155, %s157
      %p164 = scmp.eq.s32.totalorder %s28, 3
      %p165 = por %p163, %p164
      %p166 = scmp.ne.s32.totalorder %s157, %s158
      %p167 = scmp.eq.s32.totalorder %s28, 0
      %p168 = por %p166, %p167
      %p169 = scmp.ne.s32.totalorder %s157, %s158
      %p170 = scmp.eq.s32.totalorder %s29, 3
      %p171 = por %p169, %p170
      %p173 = scmp.ne.s32.totalorder %s158, %s172
      %p174 = scmp.eq.s32.totalorder %s29, 0
      %p175 = por %p173, %p174
      %s177 = sadd.s32 %s176, 1
      %p180 = scmp.eq.s32.totalorder %s23, 3
      %p181 = scmp.ne.s32.totalorder %s176, %s178
      %p182 = scmp.eq.s32.totalorder %s23, 0
      %p183 = por %p181, %p182
      %p184 = scmp.ne.s32.totalorder %s176, %s178
      %p185 = scmp.eq.s32.totalorder %s28, 3
      %p186 = por %p184, %p185
      %p187 = scmp.ne.s32.totalorder %s178, %s179
      %p188 = scmp.eq.s32.totalorder %s28, 0
      %p189 = por %p187, %p188
      %p190 = scmp.ne.s32.totalorder %s178, %s179
      %p191 = scmp.eq.s32.totalorder %s29, 3
      %p192 = por %p190, %p191
      %p194 = scmp.ne.s32.totalorder %s179, %s193
      %p195 = scmp.eq.s32.totalorder %s29, 0
      %p196 = por %p194, %p195
      %s197 = ssub.s32 %s30, %s42
      %s198 = ssub.s32 %s31, %s38
      %s199 = sor.u32 %s197, %s198
      %p200 = scmp.eq.s32.totalorder %s199, 0
      %s202 = sadd.s32 %s201, 1
      %s203 = scalar_select %p200, %s201, %s202
      %p206 = pneg %p200
      %p207 = scmp.eq.s32.totalorder %s23, 3
      %p208 = por %p206, %p207
      %p209 = scmp.ne.s32.totalorder %s201, %s204
      %p210 = scmp.eq.s32.totalorder %s23, 0
      %p211 = por %p209, %p210
      %p212 = scmp.ne.s32.totalorder %s201, %s204
      %p213 = scmp.eq.s32.totalorder %s28, 3
      %p214 = por %p212, %p213
      %p215 = scmp.ne.s32.totalorder %s204, %s205
      %p216 = scmp.eq.s32.totalorder %s28, 0
      %p217 = por %p215, %p216
      %p218 = scmp.ne.s32.totalorder %s204, %s205
      %p219 = scmp.eq.s32.totalorder %s29, 3
      %p220 = por %p218, %p219
      %p222 = scmp.ne.s32.totalorder %s205, %s221
      %p223 = scmp.eq.s32.totalorder %s29, 0
      %p224 = por %p222, %p223
      %p225 = scmp.le.s32.totalorder 1, %s23
      %p226 = scmp.lt.s32.totalorder %s23, 5
      %p227 = pnand %p225, %p226
      %p228 = pneg %p227
      // Predicated region
      $region9: #{tpu_custom_call.1} parent=5 // pred_check
        _
      $region10: #{tpu_custom_call.1} parent=5 // pred_check_branch
        %230 = sbr.rel (%p227) target = $region12
      $region11: #{tpu_custom_call.1} parent=5 // pred_region
        %s231 = ssub.s32 %s23, 1
        // Predicated region
        $region13: #{tpu_custom_call.1} parent=11 // pred_check
          %p232 = pneg %p84
        $region14: #{tpu_custom_call.1} parent=11 // pred_check_branch
          %234 = sbr.rel (%p232) target = $region16
        $region15: #{tpu_custom_call.1} parent=11 // pred_region
          %236 = vsyncadd [#allocation15], 0
          %s238 = sshll.u32 %s2, 4
          %s239 = int_to_ptr.hbm [resolvable:$true] %s238
          %s240 = sshll.u32 [#allocation14], 4
          %s241 = int_to_ptr.vmem [resolvable:$true] %s240
          %243 = dma.hbm_to_vmem [thread:$0]  %s239, 128, %s241, [#allocation15]
        $region16: #{tpu_custom_call.1} parent=11 // pred_fallthru
          _
        // Predicated region
        $region17: #{tpu_custom_call.1} parent=11 // pred_check
          %p244 = pneg %p105
        $region18: #{tpu_custom_call.1} parent=11 // pred_check_branch
          %246 = sbr.rel (%p244) target = $region20
        $region19: #{tpu_custom_call.1} parent=11 // pred_region
          %248 = vsyncadd [#allocation15], 0
          %s249 = sshll.u32 %s3, 4
          %s250 = int_to_ptr.hbm [resolvable:$true] %s249
          %s251 = sshll.u32 [#allocation16], 4
          %s252 = int_to_ptr.vmem [resolvable:$true] %s251
          %257 = dma.hbm_to_vmem [thread:$0]  %s250, 2048, %s252, [#allocation15], 128, 128, 8
        $region20: #{tpu_custom_call.1} parent=11 // pred_fallthru
          _
        // Predicated region
        $region21: #{tpu_custom_call.1} parent=11 // pred_check
          %p258 = pneg %p126
        $region22: #{tpu_custom_call.1} parent=11 // pred_check_branch
          %260 = sbr.rel (%p258) target = $region24
        $region23: #{tpu_custom_call.1} parent=11 // pred_region
          %262 = vsyncadd [#allocation18], 0
          %s263 = sshll.u32 %s4, 4
          %s264 = int_to_ptr.hbm [resolvable:$true] %s263
          %s265 = sshll.u32 [#allocation17], 4
          %s266 = int_to_ptr.vmem [resolvable:$true] %s265
          %271 = dma.hbm_to_vmem [thread:$0]  %s264, 1024, %s266, [#allocation18], 64, 64, 4
        $region24: #{tpu_custom_call.1} parent=11 // pred_fallthru
          _
        // Predicated region
        $region25: #{tpu_custom_call.1} parent=11 // pred_check
          %p272 = pneg %p147
        $region26: #{tpu_custom_call.1} parent=11 // pred_check_branch
          %274 = sbr.rel (%p272) target = $region28
        $region27: #{tpu_custom_call.1} parent=11 // pred_region
          %276 = vsyncadd [#allocation18], 0
          %s277 = sshll.u32 %s5, 4
          %s278 = int_to_ptr.hbm [resolvable:$true] %s277
          %s279 = sshll.u32 [#allocation19], 4
          %s280 = int_to_ptr.vmem [resolvable:$true] %s279
          %285 = dma.hbm_to_vmem [thread:$0]  %s278, 1024, %s280, [#allocation18], 64, 64, 4
        $region28: #{tpu_custom_call.1} parent=11 // pred_fallthru
          _
        // Predicated region
        $region29: #{tpu_custom_call.1} parent=11 // pred_check
          %p286 = pneg %p168
        $region30: #{tpu_custom_call.1} parent=11 // pred_check_branch
          %288 = sbr.rel (%p286) target = $region32
        $region31: #{tpu_custom_call.1} parent=11 // pred_region
          %290 = vsyncadd [#allocation21], 0
          %s291 = sshll.u32 %s6, 4
          %s292 = int_to_ptr.hbm [resolvable:$true] %s291
          %s293 = sshll.u32 [#allocation20], 4
          %s294 = int_to_ptr.vmem [resolvable:$true] %s293
          %299 = dma.hbm_to_vmem [thread:$0]  %s292, 1024, %s294, [#allocation21], 64, 64, 4
        $region32: #{tpu_custom_call.1} parent=11 // pred_fallthru
          _
        // Predicated region
        $region33: #{tpu_custom_call.1} parent=11 // pred_check
          %p300 = pneg %p189
        $region34: #{tpu_custom_call.1} parent=11 // pred_check_branch
          %302 = sbr.rel (%p300) target = $region36
        $region35: #{tpu_custom_call.1} parent=11 // pred_region
          %304 = vsyncadd [#allocation21], 0
          %s305 = sshll.u32 %s7, 4
          %s306 = int_to_ptr.hbm [resolvable:$true] %s305
          %s307 = sshll.u32 [#allocation22], 4
          %s308 = int_to_ptr.vmem [resolvable:$true] %s307
          %313 = dma.hbm_to_vmem [thread:$0]  %s306, 1024, %s308, [#allocation21], 64, 64, 4
        $region36: #{tpu_custom_call.1} parent=11 // pred_fallthru
          _
      $region12: #{tpu_custom_call.1} parent=5 // pred_fallthru
        _
      %p314 = scmp.lt.s32.totalorder %s23, 4
      // Predicated region
      $region37: #{tpu_custom_call.1} parent=5 // pred_check
        %p315 = pneg %p314
      $region38: #{tpu_custom_call.1} parent=5 // pred_check_branch
        %317 = sbr.rel (%p315) target = $region40
      $region39: #{tpu_custom_call.1} parent=5 // pred_region
        // Predicated region
        $region41: #{tpu_custom_call.1} parent=39 // pred_check
          %p318 = pneg %p57
        $region42: #{tpu_custom_call.1} parent=39 // pred_check_branch
          %320 = sbr.rel (%p318) target = $region44
        $region43: #{tpu_custom_call.1} parent=39 // pred_region
          %s321 = sand.u32 %s47, 1
          %s322 = scalar_lea.sflag [#allocation12], %s321
          %s323 = sand.u32 %s47, 1
          %s324 = smul.addr %s323, 128
          %s325 = scalar_lea.vmem [#allocation11], %s324
          %s326 = smul.u32 16, %s31
          %328 = vsyncadd %s322, 0
          %s329 = smul.addr %s30, 32
          %s330 = sadd.s32 %s326, %s329
          %s331 = smul.addr %s330, 8
          %s332 = scalar_lea.hbm %s1, %s331
          %s333 = sshll.u32 %s332, 4
          %s334 = int_to_ptr.hbm [resolvable:$true] %s333
          %s335 = sshll.u32 %s325, 4
          %s336 = int_to_ptr.vmem [resolvable:$true] %s335
          %341 = dma.hbm_to_vmem [thread:$0]  %s334, 2048, %s336, %s322, 128, 128, 8
        $region44: #{tpu_custom_call.1} parent=39 // pred_fallthru
          _
      $region40: #{tpu_custom_call.1} parent=5 // pred_fallthru
        _
      %p342 = scmp.le.s32.totalorder 1, %s23
      %p343 = scmp.lt.s32.totalorder %s23, 5
      %p344 = pnand %p342, %p343
      %p345 = pneg %p344
      // Predicated region
      $region45: #{tpu_custom_call.1} parent=5 // pred_check
        _
      $region46: #{tpu_custom_call.1} parent=5 // pred_check_branch
        %347 = sbr.rel (%p344) target = $region48
      $region47: #{tpu_custom_call.1} parent=5 // pred_region
        %s348 = ssub.s32 %s23, 1
        %s349 = sand.u32 %s50, 1
        %s350 = scalar_lea.sflag [#allocation12], %s349
        %s351 = sand.u32 %s50, 1
        %s352 = smul.addr %s351, 128
        %s353 = scalar_lea.vmem [#allocation11], %s352
        // Predicated region
        $region49: #{tpu_custom_call.1} parent=47 // pred_check
          %p354 = pneg %p63
        $region50: #{tpu_custom_call.1} parent=47 // pred_check_branch
          %356 = sbr.rel (%p354) target = $region52
        $region51: #{tpu_custom_call.1} parent=47 // pred_region
          %358 = dma.done %s350, 2048
        $region52: #{tpu_custom_call.1} parent=47 // pred_fallthru
          _
        // Predicated region
        $region53: #{tpu_custom_call.1} parent=47 // pred_check
          %p359 = pneg %p84
        $region54: #{tpu_custom_call.1} parent=47 // pred_check_branch
          %361 = sbr.rel (%p359) target = $region56
        $region55: #{tpu_custom_call.1} parent=47 // pred_region
          %363 = dma.done [#allocation15], 128
        $region56: #{tpu_custom_call.1} parent=47 // pred_fallthru
          _
        // Predicated region
        $region57: #{tpu_custom_call.1} parent=47 // pred_check
          %p364 = pneg %p105
        $region58: #{tpu_custom_call.1} parent=47 // pred_check_branch
          %366 = sbr.rel (%p364) target = $region60
        $region59: #{tpu_custom_call.1} parent=47 // pred_region
          %368 = dma.done [#allocation15], 2048
        $region60: #{tpu_custom_call.1} parent=47 // pred_fallthru
          _
        // Predicated region
        $region61: #{tpu_custom_call.1} parent=47 // pred_check
          %p369 = pneg %p126
        $region62: #{tpu_custom_call.1} parent=47 // pred_check_branch
          %371 = sbr.rel (%p369) target = $region64
        $region63: #{tpu_custom_call.1} parent=47 // pred_region
          %373 = dma.done [#allocation18], 1024
        $region64: #{tpu_custom_call.1} parent=47 // pred_fallthru
          _
        // Predicated region
        $region65: #{tpu_custom_call.1} parent=47 // pred_check
          %p374 = pneg %p147
        $region66: #{tpu_custom_call.1} parent=47 // pred_check_branch
          %376 = sbr.rel (%p374) target = $region68
        $region67: #{tpu_custom_call.1} parent=47 // pred_region
          %378 = dma.done [#allocation18], 1024
        $region68: #{tpu_custom_call.1} parent=47 // pred_fallthru
          _
        // Predicated region
        $region69: #{tpu_custom_call.1} parent=47 // pred_check
          %p379 = pneg %p168
        $region70: #{tpu_custom_call.1} parent=47 // pred_check_branch
          %381 = sbr.rel (%p379) target = $region72
        $region71: #{tpu_custom_call.1} parent=47 // pred_region
          %383 = dma.done [#allocation21], 1024
        $region72: #{tpu_custom_call.1} parent=47 // pred_fallthru
          _
        // Predicated region
        $region73: #{tpu_custom_call.1} parent=47 // pred_check
          %p384 = pneg %p189
        $region74: #{tpu_custom_call.1} parent=47 // pred_check_branch
          %386 = sbr.rel (%p384) target = $region76
        $region75: #{tpu_custom_call.1} parent=47 // pred_region
          %388 = dma.done [#allocation21], 1024
        $region76: #{tpu_custom_call.1} parent=47 // pred_fallthru
          _
        %s389 = sand.u32 %s50, 1
        %s390 = scalar_lea.sflag [#allocation12], %s389
        %s391 = sand.u32 %s50, 1
        %s392 = smul.addr %s391, 128
        %s393 = scalar_lea.vmem [#allocation11], %s392
        %p394 = pneg %p63
        %p395 = pneg %p60
        %p396 = pneg %p84
        %p397 = pneg %p81
        %p398 = pneg %p105
        %p399 = pneg %p102
        %p400 = pneg %p126
        %p401 = pneg %p123
        %p402 = pneg %p147
        %p403 = pneg %p144
        %p404 = pneg %p168
        %p405 = pneg %p165
        %p406 = pneg %p189
        %p407 = pneg %p186
        %p408 = pneg %p217
        %p409 = pneg %p214
        %s410 = sand.u32 %s204, 1
        %s411 = scalar_lea.sflag [#allocation13], %s410
        %s412 = sand.u32 %s204, 1
        %s413 = smul.addr %s412, 128
        %s414 = scalar_lea.vmem [#allocation23], %s413
        %s415 = smul.u32 16, %s33
        %s416 = smul.u32 16, %s33
        %p417 = scmp.eq.s32.totalorder %s33, 0
        // Predicated region
        $region77: #{tpu_custom_call.1} parent=47 // pred_check
          %p418 = pneg %p417
        $region78: #{tpu_custom_call.1} parent=47 // pred_check_branch
          %420 = sbr.rel (%p418) target = $region80
        $region79: #{tpu_custom_call.1} parent=47 // pred_region
          %v421 = vld [vmem:[#allocation14] sm:$0x1]
          %v422 = vld [vmem:[#allocation14 + $0x1] sm:$0x1]
          %v423 = vld [vmem:[#allocation14 + $0x3] sm:$0x1]
          %v424 = vld [vmem:[#allocation14 + $0x4] sm:$0x1]
          %s425 = smul.u32 %s32, 256
          %s426 = sadd.s32 0, %s425
          %s427 = scalar_lea.hbm %s0, %s426
          // Predicated region
          $region81: #{tpu_custom_call.1} parent=79 // pred_check
            _
          $region82: #{tpu_custom_call.1} parent=79 // pred_check_branch
            %429 = sbr.rel target = $region84
          $region83: #{tpu_custom_call.1} parent=79 // pred_region
            %430 = sst [smem:[#allocation26]] [#allocation25]
            %431 = sst [smem:[#allocation27]] [#allocation24]
          $region84: #{tpu_custom_call.1} parent=79 // pred_fallthru
            _
          %433 = shalt.err (0)
          %s435 = sshll.u32 %s427, 4
          %s436 = int_to_ptr.hbm [resolvable:$true] %s435
          %s437 = sshll.u32 [#allocation6], 4
          %s438 = int_to_ptr.vmem [resolvable:$true] %s437
          %440 = dma.hbm_to_vmem [thread:$0]  %s436, 2048, %s438, [#allocation7]
          loop: start=0, step=1, limit=2
          $region85: #{tpu_custom_call.1} parent=79 // loop_pre_header
            _
          $region86: #{tpu_custom_call.1} parent=79 // loop_header
            %s442 = sphi 0, %s446
            %p443 = scmp.ge.s32.totalorder %s442, 2
            %v447 = vphi 0.0, %v540
            %v448 = vphi 0.0, %v578
          $region87: #{tpu_custom_call.1} parent=79 // loop_header_branch
            %445 = sbr.rel (%p443) target = $region91
          $region88: #{tpu_custom_call.1} parent=79 // loop_body
            %s449 = sand.u32 %s442, 1
            %s450 = smul.u32 %s442, 128
            %s451 = smul.u32 %s449, 128
            %s452 = scalar_lea.vmem [#allocation6], %s451
            %s453 = scalar_lea.sflag [#allocation7], %s449
            %s454 = smul.u32 128, 1
            %s455 = sshll.u32 %s454, 4
            %456 = dma.done %s453, %s455
            %s457 = sadd.s32 %s442, 1
            %p458 = scmp.lt.s32.totalorder %s457, 2
            // Predicated region
            $region92: #{tpu_custom_call.1} parent=88 // pred_check
              %p459 = pneg %p458
            $region93: #{tpu_custom_call.1} parent=88 // pred_check_branch
              %461 = sbr.rel (%p459) target = $region95
            $region94: #{tpu_custom_call.1} parent=88 // pred_region
              %s462 = ssub.s32 1, %s449
              %s463 = smul.u32 %s457, 128
              %s464 = sadd.s32 %s463, %s425
              %s465 = scalar_lea.hbm %s0, %s464
              %s466 = smul.u32 %s462, 128
              %s467 = scalar_lea.vmem [#allocation6], %s466
              %s468 = scalar_lea.sflag [#allocation7], %s462
              // Predicated region
              $region96: #{tpu_custom_call.1} parent=94 // pred_check
                _
              $region97: #{tpu_custom_call.1} parent=94 // pred_check_branch
                %470 = sbr.rel target = $region99
              $region98: #{tpu_custom_call.1} parent=94 // pred_region
                %471 = sst [smem:[#allocation26]] [#allocation29]
                %472 = sst [smem:[#allocation27]] [#allocation28]
              $region99: #{tpu_custom_call.1} parent=94 // pred_fallthru
                _
              %474 = shalt.err (0)
              %s476 = sshll.u32 %s465, 4
              %s477 = int_to_ptr.hbm [resolvable:$true] %s476
              %s478 = sshll.u32 %s467, 4
              %s479 = int_to_ptr.vmem [resolvable:$true] %s478
              %481 = dma.hbm_to_vmem [thread:$0]  %s477, 2048, %s479, %s468
            $region95: #{tpu_custom_call.1} parent=88 // pred_fallthru
              _
            %p482 = scmp.eq.s32.totalorder %s457, 2
            // Predicated region
            $region100: #{tpu_custom_call.1} parent=88 // pred_check
              %p483 = pneg %p482
            $region101: #{tpu_custom_call.1} parent=88 // pred_check_branch
              %485 = sbr.rel (%p483) target = $region103
            $region102: #{tpu_custom_call.1} parent=88 // pred_region
              %s486 = ssub.s32 1, %s449
              %s487 = smul.u32 %s486, 128
              %s488 = scalar_lea.vmem [#allocation6], %s487
              %s489 = scalar_lea.sflag [#allocation7], %s486
              // Predicated region
              $region104: #{tpu_custom_call.1} parent=102 // pred_check
                _
              $region105: #{tpu_custom_call.1} parent=102 // pred_check_branch
                %491 = sbr.rel target = $region107
              $region106: #{tpu_custom_call.1} parent=102 // pred_region
                %492 = sst [smem:[#allocation26]] [#allocation31]
                %493 = sst [smem:[#allocation27]] [#allocation30]
              $region107: #{tpu_custom_call.1} parent=102 // pred_fallthru
                _
              %495 = shalt.err (0)
              %s497 = sshll.u32 %s427, 4
              %s498 = int_to_ptr.hbm [resolvable:$true] %s497
              %s499 = sshll.u32 %s488, 4
              %s500 = int_to_ptr.vmem [resolvable:$true] %s499
              %502 = dma.hbm_to_vmem [thread:$0]  %s498, 2048, %s500, %s489
            $region103: #{tpu_custom_call.1} parent=88 // pred_fallthru
              _
            %v503 = vld [vmem:[%s452] sm:$0xff]
            %v504 = vld [vmem:[%s452 + $0x8] sm:$0xff]
            %v505 = vld [vmem:[%s452 + $0x10] sm:$0xff]
            %v506 = vld [vmem:[%s452 + $0x18] sm:$0xff]
            %v507 = vld [vmem:[%s452 + $0x20] sm:$0xff]
            %v508 = vld [vmem:[%s452 + $0x28] sm:$0xff]
            %v509 = vld [vmem:[%s452 + $0x30] sm:$0xff]
            %v510 = vld [vmem:[%s452 + $0x38] sm:$0xff]
            %v511 = vld [vmem:[%s452 + $0x40] sm:$0xff]
            %v512 = vld [vmem:[%s452 + $0x48] sm:$0xff]
            %v513 = vld [vmem:[%s452 + $0x50] sm:$0xff]
            %v514 = vld [vmem:[%s452 + $0x58] sm:$0xff]
            %v515 = vld [vmem:[%s452 + $0x60] sm:$0xff]
            %v516 = vld [vmem:[%s452 + $0x68] sm:$0xff]
            %v517 = vld [vmem:[%s452 + $0x70] sm:$0xff]
            %v518 = vld [vmem:[%s452 + $0x78] sm:$0xff]
            %v519 = vadd.f32 %v503, %v504
            %v520 = vadd.f32 %v519, %v505
            %v521 = vadd.f32 %v520, %v506
            %v522 = vadd.f32 %v521, %v507
            %v523 = vadd.f32 %v522, %v508
            %v524 = vadd.f32 %v523, %v509
            %v525 = vadd.f32 %v524, %v510
            %v526 = vadd.f32 %v525, %v511
            %v527 = vadd.f32 %v526, %v512
            %v528 = vadd.f32 %v527, %v513
            %v529 = vadd.f32 %v528, %v514
            %v530 = vadd.f32 %v529, %v515
            %v531 = vadd.f32 %v530, %v516
            %v532 = vadd.f32 %v531, %v517
            %v533 = vadd.f32 %v532, %v518
            %v534 = vrot.slane %v533, 4
            %v535 = vadd.f32 %v533, %v534
            %v536 = vrot.slane %v535, 2
            %v537 = vadd.f32 %v535, %v536
            %v538 = vrot.slane %v537, 1
            %v539 = vadd.f32 %v537, %v538
            %v540 = vadd.f32 %v447, %v539
            %v541 = vmul.f32 %v503, %v503
            %v542 = vmul.f32 %v504, %v504
            %v543 = vmul.f32 %v505, %v505
            %v544 = vmul.f32 %v506, %v506
            %v545 = vmul.f32 %v507, %v507
            %v546 = vmul.f32 %v508, %v508
            %v547 = vmul.f32 %v509, %v509
            %v548 = vmul.f32 %v510, %v510
            %v549 = vmul.f32 %v511, %v511
            %v550 = vmul.f32 %v512, %v512
            %v551 = vmul.f32 %v513, %v513
            %v552 = vmul.f32 %v514, %v514
            %v553 = vmul.f32 %v515, %v515
            %v554 = vmul.f32 %v516, %v516
            %v555 = vmul.f32 %v517, %v517
            %v556 = vmul.f32 %v518, %v518
            %v557 = vadd.f32 %v541, %v542
            %v558 = vadd.f32 %v557, %v543
            %v559 = vadd.f32 %v558, %v544
            %v560 = vadd.f32 %v559, %v545
            %v561 = vadd.f32 %v560, %v546
            %v562 = vadd.f32 %v561, %v547
            %v563 = vadd.f32 %v562, %v548
            %v564 = vadd.f32 %v563, %v549
            %v565 = vadd.f32 %v564, %v550
            %v566 = vadd.f32 %v565, %v551
            %v567 = vadd.f32 %v566, %v552
            %v568 = vadd.f32 %v567, %v553
            %v569 = vadd.f32 %v568, %v554
            %v570 = vadd.f32 %v569, %v555
            %v571 = vadd.f32 %v570, %v556
            %v572 = vrot.slane %v571, 4
            %v573 = vadd.f32 %v571, %v572
            %v574 = vrot.slane %v573, 2
            %v575 = vadd.f32 %v573, %v574
            %v576 = vrot.slane %v575, 1
            %v577 = vadd.f32 %v575, %v576
            %v578 = vadd.f32 %v448, %v577
          $region89: #{tpu_custom_call.1} parent=79 // loop_footer
            %s446 = sadd.s32 1, %s442
          $region90: #{tpu_custom_call.1} parent=79 // loop_footer_branch
            %441 = sbr.rel target = $region86
          $region91: #{tpu_custom_call.1} parent=79 // loop_exit
            _
          %v579 = vld [vmem:[#allocation16] sm:$0xff]
          %v580 = vld [vmem:[#allocation16 + $0x8] sm:$0xff]
          %v581 = vld [vmem:[#allocation16 + $0x10] sm:$0xff]
          %v582 = vld [vmem:[#allocation16 + $0x18] sm:$0xff]
          %v583 = vld [vmem:[#allocation16 + $0x20] sm:$0xff]
          %v584 = vld [vmem:[#allocation16 + $0x28] sm:$0xff]
          %v585 = vld [vmem:[#allocation16 + $0x30] sm:$0xff]
          %v586 = vld [vmem:[#allocation16 + $0x38] sm:$0xff]
          %v587 = vld [vmem:[#allocation16 + $0x40] sm:$0xff]
          %v588 = vld [vmem:[#allocation16 + $0x48] sm:$0xff]
          %v589 = vld [vmem:[#allocation16 + $0x50] sm:$0xff]
          %v590 = vld [vmem:[#allocation16 + $0x58] sm:$0xff]
          %v591 = vld [vmem:[#allocation16 + $0x60] sm:$0xff]
          %v592 = vld [vmem:[#allocation16 + $0x68] sm:$0xff]
          %v593 = vld [vmem:[#allocation16 + $0x70] sm:$0xff]
          %v594 = vld [vmem:[#allocation16 + $0x78] sm:$0xff]
          %595 = vmatpush.msra.mxu0 %v594
          %596 = vmatpush.msra.mxu0 %v593
          %597 = vmatpush.msra.mxu0 %v592
          %598 = vmatpush.msra.mxu0 %v591
          %599 = vmatpush.msra.mxu0 %v590
          %600 = vmatpush.msra.mxu0 %v589
          %601 = vmatpush.msra.mxu0 %v588
          %602 = vmatpush.msra.mxu0 %v587
          %603 = vmatpush.msra.mxu0 %v586
          %604 = vmatpush.msra.mxu0 %v585
          %605 = vmatpush.msra.mxu0 %v584
          %606 = vmatpush.msra.mxu0 %v583
          %607 = vmatpush.msra.mxu0 %v582
          %608 = vmatpush.msra.mxu0 %v581
          %609 = vmatpush.msra.mxu0 %v580
          %610 = vmatpush.msra.mxu0 %v579
          %611 = vmatmul.f32.gmra.mxu0 %v447
          %v612 = vpop.f32.mrf.mxu0
          %v613 = vadd.f32 0.0, %v612
          %614 = vdwg.mxu0
          %v615 = vmul.f32 %v613, 0.0009765625
          %616 = vmatpush.msra.mxu0 %v594
          %617 = vmatpush.msra.mxu0 %v593
          %618 = vmatpush.msra.mxu0 %v592
          %619 = vmatpush.msra.mxu0 %v591
          %620 = vmatpush.msra.mxu0 %v590
          %621 = vmatpush.msra.mxu0 %v589
          %622 = vmatpush.msra.mxu0 %v588
          %623 = vmatpush.msra.mxu0 %v587
          %624 = vmatpush.msra.mxu0 %v586
          %625 = vmatpush.msra.mxu0 %v585
          %626 = vmatpush.msra.mxu0 %v584
          %627 = vmatpush.msra.mxu0 %v583
          %628 = vmatpush.msra.mxu0 %v582
          %629 = vmatpush.msra.mxu0 %v581
          %630 = vmatpush.msra.mxu0 %v580
          %631 = vmatpush.msra.mxu0 %v579
          %632 = vmatmul.f32.gmra.mxu0 %v448
          %v633 = vpop.f32.mrf.mxu0
          %v634 = vadd.f32 0.0, %v633
          %635 = vdwg.mxu0
          %v636 = vmul.f32 %v634, 0.0009765625
          %v637 = vmul.f32 %v615, %v615
          %v638 = vsub.f32 %v636, %v637
          %v639 = vadd.f32 %v638, 1e-06
          %v640 = vrsqrt.pop %v639
          %v641 = vmul.f32 %v640, %v639
          %v642 = vmul.f32 %v641, %v640
          %v643 = vmul.f32 0.5, %v642
          %v644 = vsub.f32 1.5, %v643
          %v645 = vmul.f32 %v640, %v644
          %vm646 = vweird.f32 %v639
          %vm647 = vweird.f32 %v640
          %vm648 = vmor %vm646, %vm647
          %v649 = vsel %vm648, %v640, %v645
          %v650 = vmul.f32 %v649, %v421
          %v651 = vmul.f32 %v615, %v650
          %v652 = vsub.f32 %v422, %v651
          %653 = vst [vmem:[#allocation4] sm:$0x1] %v650
          %654 = vst [vmem:[#allocation5] sm:$0x1] %v652
          loop: start=0, step=1, limit=2
          $region108: #{tpu_custom_call.1} parent=79 // loop_pre_header
            _
          $region109: #{tpu_custom_call.1} parent=79 // loop_header
            %s656 = sphi 0, %s660
            %p657 = scmp.ge.s32.totalorder %s656, 2
          $region110: #{tpu_custom_call.1} parent=79 // loop_header_branch
            %659 = sbr.rel (%p657) target = $region114
          $region111: #{tpu_custom_call.1} parent=79 // loop_body
            %s661 = sadd.s32 %s656, 2
            %s662 = sand.u32 %s661, 1
            %s663 = smul.u32 %s656, 128
            %s664 = smul.u32 %s662, 128
            %s665 = scalar_lea.vmem [#allocation6], %s664
            %s666 = scalar_lea.sflag [#allocation7], %s662
            %s667 = smul.u32 128, 1
            %s668 = sshll.u32 %s667, 4
            %669 = dma.done %s666, %s668
            %s670 = sadd.s32 %s656, 1
            %p671 = scmp.lt.s32.totalorder %s670, 2
            // Predicated region
            $region115: #{tpu_custom_call.1} parent=111 // pred_check
              %p672 = pneg %p671
            $region116: #{tpu_custom_call.1} parent=111 // pred_check_branch
              %674 = sbr.rel (%p672) target = $region118
            $region117: #{tpu_custom_call.1} parent=111 // pred_region
              %s675 = ssub.s32 1, %s662
              %s676 = smul.u32 %s670, 128
              %s677 = sadd.s32 %s676, %s425
              %s678 = scalar_lea.hbm %s0, %s677
              %s679 = smul.u32 %s675, 128
              %s680 = scalar_lea.vmem [#allocation6], %s679
              %s681 = scalar_lea.sflag [#allocation7], %s675
              // Predicated region
              $region119: #{tpu_custom_call.1} parent=117 // pred_check
                _
              $region120: #{tpu_custom_call.1} parent=117 // pred_check_branch
                %683 = sbr.rel target = $region122
              $region121: #{tpu_custom_call.1} parent=117 // pred_region
                %684 = sst [smem:[#allocation26]] [#allocation33]
                %685 = sst [smem:[#allocation27]] [#allocation32]
              $region122: #{tpu_custom_call.1} parent=117 // pred_fallthru
                _
              %687 = shalt.err (0)
              %s689 = sshll.u32 %s678, 4
              %s690 = int_to_ptr.hbm [resolvable:$true] %s689
              %s691 = sshll.u32 %s680, 4
              %s692 = int_to_ptr.vmem [resolvable:$true] %s691
              %694 = dma.hbm_to_vmem [thread:$0]  %s690, 2048, %s692, %s681
            $region118: #{tpu_custom_call.1} parent=111 // pred_fallthru
              _
            %v695 = vld [vmem:[%s665] sm:$0xff]
            %v696 = vld [vmem:[%s665 + $0x8] sm:$0xff]
            %v697 = vld [vmem:[%s665 + $0x10] sm:$0xff]
            %v698 = vld [vmem:[%s665 + $0x18] sm:$0xff]
            %v699 = vld [vmem:[%s665 + $0x20] sm:$0xff]
            %v700 = vld [vmem:[%s665 + $0x28] sm:$0xff]
            %v701 = vld [vmem:[%s665 + $0x30] sm:$0xff]
            %v702 = vld [vmem:[%s665 + $0x38] sm:$0xff]
            %v703 = vld [vmem:[%s665 + $0x40] sm:$0xff]
            %v704 = vld [vmem:[%s665 + $0x48] sm:$0xff]
            %v705 = vld [vmem:[%s665 + $0x50] sm:$0xff]
            %v706 = vld [vmem:[%s665 + $0x58] sm:$0xff]
            %v707 = vld [vmem:[%s665 + $0x60] sm:$0xff]
            %v708 = vld [vmem:[%s665 + $0x68] sm:$0xff]
            %v709 = vld [vmem:[%s665 + $0x70] sm:$0xff]
            %v710 = vld [vmem:[%s665 + $0x78] sm:$0xff]
            %v711 = vperm.slane %v650, 0
            %v712 = vmul.f32 %v695, %v711
            %v713 = vmul.f32 %v696, %v711
            %v714 = vmul.f32 %v697, %v711
            %v715 = vmul.f32 %v698, %v711
            %v716 = vmul.f32 %v699, %v711
            %v717 = vmul.f32 %v700, %v711
            %v718 = vmul.f32 %v701, %v711
            %v719 = vmul.f32 %v702, %v711
            %v720 = vmul.f32 %v703, %v711
            %v721 = vmul.f32 %v704, %v711
            %v722 = vmul.f32 %v705, %v711
            %v723 = vmul.f32 %v706, %v711
            %v724 = vmul.f32 %v707, %v711
            %v725 = vmul.f32 %v708, %v711
            %v726 = vmul.f32 %v709, %v711
            %v727 = vmul.f32 %v710, %v711
            %v728 = vperm.slane %v652, 0
            %v729 = vadd.f32 %v712, %v728
            %v730 = vadd.f32 %v713, %v728
            %v731 = vadd.f32 %v714, %v728
            %v732 = vadd.f32 %v715, %v728
            %v733 = vadd.f32 %v716, %v728
            %v734 = vadd.f32 %v717, %v728
            %v735 = vadd.f32 %v718, %v728
            %v736 = vadd.f32 %v719, %v728
            %v737 = vadd.f32 %v720, %v728
            %v738 = vadd.f32 %v721, %v728
            %v739 = vadd.f32 %v722, %v728
            %v740 = vadd.f32 %v723, %v728
            %v741 = vadd.f32 %v724, %v728
            %v742 = vadd.f32 %v725, %v728
            %v743 = vadd.f32 %v726, %v728
            %v744 = vadd.f32 %v727, %v728
            %v745 = vpack.c.bf16 %v730, %v729
            %v746 = vpack.c.bf16 %v732, %v731
            %v747 = vpack.c.bf16 %v734, %v733
            %v748 = vpack.c.bf16 %v736, %v735
            %v749 = vpack.c.bf16 %v738, %v737
            %v750 = vpack.c.bf16 %v740, %v739
            %v751 = vpack.c.bf16 %v742, %v741
            %v752 = vpack.c.bf16 %v744, %v743
            %v753 = vld [vmem:[#allocation19] sm:$0xf]
            %v754 = vld [vmem:[#allocation19 + $0x4] sm:$0xf]
            %v755 = vld [vmem:[#allocation19 + $0x8] sm:$0xf]
            %v756 = vld [vmem:[#allocation19 + $0xc] sm:$0xf]
            %v757 = vld [vmem:[#allocation19 + $0x10] sm:$0xf]
            %v758 = vld [vmem:[#allocation19 + $0x14] sm:$0xf]
            %v759 = vld [vmem:[#allocation19 + $0x18] sm:$0xf]
            %v760 = vld [vmem:[#allocation19 + $0x1c] sm:$0xf]
            %v761 = vld [vmem:[#allocation19 + $0x20] sm:$0xf]
            %v762 = vld [vmem:[#allocation19 + $0x24] sm:$0xf]
            %v763 = vld [vmem:[#allocation19 + $0x28] sm:$0xf]
            %v764 = vld [vmem:[#allocation19 + $0x2c] sm:$0xf]
            %v765 = vld [vmem:[#allocation19 + $0x30] sm:$0xf]
            %v766 = vld [vmem:[#allocation19 + $0x34] sm:$0xf]
            %v767 = vld [vmem:[#allocation19 + $0x38] sm:$0xf]
            %v768 = vld [vmem:[#allocation19 + $0x3c] sm:$0xf]
            %v769 = vperm.slane %v423, 0
            %v786 = vunpack.c.l.b16 %v753
            %v787 = vunpack.c.l.b16 %v754
            %v788 = vunpack.c.l.b16 %v755
            %v789 = vunpack.c.l.b16 %v756
            %v790 = vunpack.c.l.b16 %v757
            %v791 = vunpack.c.l.b16 %v758
            %v792 = vunpack.c.l.b16 %v759
            %v793 = vunpack.c.l.b16 %v760
            %v794 = vunpack.c.l.b16 %v761
            %v795 = vunpack.c.l.b16 %v762
            %v796 = vunpack.c.l.b16 %v763
            %v797 = vunpack.c.l.b16 %v764
            %v798 = vunpack.c.l.b16 %v765
            %v799 = vunpack.c.l.b16 %v766
            %v800 = vunpack.c.l.b16 %v767
            %v801 = vunpack.c.l.b16 %v768
            %v802 = vpack.c.b16 %v787, %v786
            %v803 = vpack.c.b16 %v789, %v788
            %v804 = vpack.c.b16 %v791, %v790
            %v805 = vpack.c.b16 %v793, %v792
            %v806 = vpack.c.b16 %v795, %v794
            %v807 = vpack.c.b16 %v797, %v796
            %v808 = vpack.c.b16 %v799, %v798
            %v809 = vpack.c.b16 %v801, %v800
            %818 = vmatpush.bf16.msra.mxu0 %v809
            %819 = vmatpush.bf16.msra.mxu0 %v808
            %820 = vmatpush.bf16.msra.mxu0 %v807
            %821 = vmatpush.bf16.msra.mxu0 %v806
            %822 = vmatpush.bf16.msra.mxu0 %v805
            %823 = vmatpush.bf16.msra.mxu0 %v804
            %824 = vmatpush.bf16.msra.mxu0 %v803
            %825 = vmatpush.bf16.msra.mxu0 %v802
            %826 = vmatmul.bf16.gmra.mxu0 %v745
            %v827 = vpop.f32.mrf.mxu0
            %v828 = vadd.f32 %v769, %v827
            %v829 = vpop.f32.mrf.mxu0
            %v830 = vadd.f32 %v769, %v829
            %831 = vmatmul.bf16.gmra.mxu0 %v746
            %v832 = vpop.f32.mrf.mxu0
            %v833 = vadd.f32 %v769, %v832
            %v834 = vpop.f32.mrf.mxu0
            %v835 = vadd.f32 %v769, %v834
            %836 = vmatmul.bf16.gmra.mxu0 %v747
            %v837 = vpop.f32.mrf.mxu0
            %v838 = vadd.f32 %v769, %v837
            %v839 = vpop.f32.mrf.mxu0
            %v840 = vadd.f32 %v769, %v839
            %841 = vmatmul.bf16.gmra.mxu0 %v748
            %v842 = vpop.f32.mrf.mxu0
            %v843 = vadd.f32 %v769, %v842
            %v844 = vpop.f32.mrf.mxu0
            %v845 = vadd.f32 %v769, %v844
            %846 = vmatmul.bf16.gmra.mxu0 %v749
            %v847 = vpop.f32.mrf.mxu0
            %v848 = vadd.f32 %v769, %v847
            %v849 = vpop.f32.mrf.mxu0
            %v850 = vadd.f32 %v769, %v849
            %851 = vmatmul.bf16.gmra.mxu0 %v750
            %v852 = vpop.f32.mrf.mxu0
            %v853 = vadd.f32 %v769, %v852
            %v854 = vpop.f32.mrf.mxu0
            %v855 = vadd.f32 %v769, %v854
            %856 = vmatmul.bf16.gmra.mxu0 %v751
            %v857 = vpop.f32.mrf.mxu0
            %v858 = vadd.f32 %v769, %v857
            %v859 = vpop.f32.mrf.mxu0
            %v860 = vadd.f32 %v769, %v859
            %861 = vmatmul.bf16.gmra.mxu0 %v752
            %v862 = vpop.f32.mrf.mxu0
            %v863 = vadd.f32 %v769, %v862
            %v864 = vpop.f32.mrf.mxu0
            %v865 = vadd.f32 %v769, %v864
            %866 = vdwg.mxu0
            %v867 = vld [vmem:[#allocation20] sm:$0xf]
            %v868 = vld [vmem:[#allocation20 + $0x4] sm:$0xf]
            %v869 = vld [vmem:[#allocation20 + $0x8] sm:$0xf]
            %v870 = vld [vmem:[#allocation20 + $0xc] sm:$0xf]
            %v871 = vld [vmem:[#allocation20 + $0x10] sm:$0xf]
            %v872 = vld [vmem:[#allocation20 + $0x14] sm:$0xf]
            %v873 = vld [vmem:[#allocation20 + $0x18] sm:$0xf]
            %v874 = vld [vmem:[#allocation20 + $0x1c] sm:$0xf]
            %v875 = vld [vmem:[#allocation20 + $0x20] sm:$0xf]
            %v876 = vld [vmem:[#allocation20 + $0x24] sm:$0xf]
            %v877 = vld [vmem:[#allocation20 + $0x28] sm:$0xf]
            %v878 = vld [vmem:[#allocation20 + $0x2c] sm:$0xf]
            %v879 = vld [vmem:[#allocation20 + $0x30] sm:$0xf]
            %v880 = vld [vmem:[#allocation20 + $0x34] sm:$0xf]
            %v881 = vld [vmem:[#allocation20 + $0x38] sm:$0xf]
            %v882 = vld [vmem:[#allocation20 + $0x3c] sm:$0xf]
            %v883 = vperm.slane %v424, 0
            %v900 = vunpack.c.l.b16 %v867
            %v901 = vunpack.c.l.b16 %v868
            %v902 = vunpack.c.l.b16 %v869
            %v903 = vunpack.c.l.b16 %v870
            %v904 = vunpack.c.l.b16 %v871
            %v905 = vunpack.c.l.b16 %v872
            %v906 = vunpack.c.l.b16 %v873
            %v907 = vunpack.c.l.b16 %v874
            %v908 = vunpack.c.l.b16 %v875
            %v909 = vunpack.c.l.b16 %v876
            %v910 = vunpack.c.l.b16 %v877
            %v911 = vunpack.c.l.b16 %v878
            %v912 = vunpack.c.l.b16 %v879
            %v913 = vunpack.c.l.b16 %v880
            %v914 = vunpack.c.l.b16 %v881
            %v915 = vunpack.c.l.b16 %v882
            %v916 = vpack.c.b16 %v901, %v900
            %v917 = vpack.c.b16 %v903, %v902
            %v918 = vpack.c.b16 %v905, %v904
            %v919 = vpack.c.b16 %v907, %v906
            %v920 = vpack.c.b16 %v909, %v908
            %v921 = vpack.c.b16 %v911, %v910
            %v922 = vpack.c.b16 %v913, %v912
            %v923 = vpack.c.b16 %v915, %v914
            %932 = vmatpush.bf16.msra.mxu0 %v923
            %933 = vmatpush.bf16.msra.mxu0 %v922
            %934 = vmatpush.bf16.msra.mxu0 %v921
            %935 = vmatpush.bf16.msra.mxu0 %v920
            %936 = vmatpush.bf16.msra.mxu0 %v919
            %937 = vmatpush.bf16.msra.mxu0 %v918
            %938 = vmatpush.bf16.msra.mxu0 %v917
            %939 = vmatpush.bf16.msra.mxu0 %v916
            %940 = vmatmul.bf16.gmra.mxu0 %v745
            %v941 = vpop.f32.mrf.mxu0
            %v942 = vadd.f32 %v883, %v941
            %v943 = vpop.f32.mrf.mxu0
            %v944 = vadd.f32 %v883, %v943
            %945 = vmatmul.bf16.gmra.mxu0 %v746
            %v946 = vpop.f32.mrf.mxu0
            %v947 = vadd.f32 %v883, %v946
            %v948 = vpop.f32.mrf.mxu0
            %v949 = vadd.f32 %v883, %v948
            %950 = vmatmul.bf16.gmra.mxu0 %v747
            %v951 = vpop.f32.mrf.mxu0
            %v952 = vadd.f32 %v883, %v951
            %v953 = vpop.f32.mrf.mxu0
            %v954 = vadd.f32 %v883, %v953
            %955 = vmatmul.bf16.gmra.mxu0 %v748
            %v956 = vpop.f32.mrf.mxu0
            %v957 = vadd.f32 %v883, %v956
            %v958 = vpop.f32.mrf.mxu0
            %v959 = vadd.f32 %v883, %v958
            %960 = vmatmul.bf16.gmra.mxu0 %v749
            %v961 = vpop.f32.mrf.mxu0
            %v962 = vadd.f32 %v883, %v961
            %v963 = vpop.f32.mrf.mxu0
            %v964 = vadd.f32 %v883, %v963
            %965 = vmatmul.bf16.gmra.mxu0 %v750
            %v966 = vpop.f32.mrf.mxu0
            %v967 = vadd.f32 %v883, %v966
            %v968 = vpop.f32.mrf.mxu0
            %v969 = vadd.f32 %v883, %v968
            %970 = vmatmul.bf16.gmra.mxu0 %v751
            %v971 = vpop.f32.mrf.mxu0
            %v972 = vadd.f32 %v883, %v971
            %v973 = vpop.f32.mrf.mxu0
            %v974 = vadd.f32 %v883, %v973
            %975 = vmatmul.bf16.gmra.mxu0 %v752
            %v976 = vpop.f32.mrf.mxu0
            %v977 = vadd.f32 %v883, %v976
            %v978 = vpop.f32.mrf.mxu0
            %v979 = vadd.f32 %v883, %v978
            %980 = vdwg.mxu0
            %981 = vxpose.xlu0.b32.start [1/16] %v828, 128
            %982 = vxpose.xlu0.b32.cont [2/16] %v830, 128
            %983 = vxpose.xlu0.b32.cont [3/16] %v833, 128
            %984 = vxpose.xlu0.b32.cont [4/16] %v835, 128
            %985 = vxpose.xlu0.b32.cont [5/16] %v838, 128
            %986 = vxpose.xlu0.b32.cont [6/16] %v840, 128
            %987 = vxpose.xlu0.b32.cont [7/16] %v843, 128
            %988 = vxpose.xlu0.b32.cont [8/16] %v845, 128
            %989 = vxpose.xlu0.b32.cont [9/16] %v848, 128
            %990 = vxpose.xlu0.b32.cont [10/16] %v850, 128
            %991 = vxpose.xlu0.b32.cont [11/16] %v853, 128
            %992 = vxpose.xlu0.b32.cont [12/16] %v855, 128
            %993 = vxpose.xlu0.b32.cont [13/16] %v858, 128
            %994 = vxpose.xlu0.b32.cont [14/16] %v860, 128
            %995 = vxpose.xlu0.b32.cont [15/16] %v863, 128
            %996 = vxpose.xlu0.b32.end [16/16] %v865, 128
            %v997 = vpop.trf.xlu0
            %v998 = vpop.trf.xlu0
            %v999 = vpop.trf.xlu0
            %v1000 = vpop.trf.xlu0
            %v1001 = vpop.trf.xlu0
            %v1002 = vpop.trf.xlu0
            %v1003 = vpop.trf.xlu0
            %v1004 = vpop.trf.xlu0
            %v1005 = vpop.trf.xlu0
            %v1006 = vpop.trf.xlu0
            %v1007 = vpop.trf.xlu0
            %v1008 = vpop.trf.xlu0
            %v1009 = vpop.trf.xlu0
            %v1010 = vpop.trf.xlu0
            %v1011 = vpop.trf.xlu0
            %v1012 = vpop.trf.xlu0
            %v1013 = vpack.c.bf16 %v997, %v997
            %v1014 = vpack.c.bf16 %v998, %v998
            %v1015 = vpack.c.bf16 %v999, %v999
            %v1016 = vpack.c.bf16 %v1000, %v1000
            %v1017 = vpack.c.bf16 %v1001, %v1001
            %v1018 = vpack.c.bf16 %v1002, %v1002
            %v1019 = vpack.c.bf16 %v1003, %v1003
            %v1020 = vpack.c.bf16 %v1004, %v1004
            %v1021 = vpack.c.bf16 %v1005, %v1005
            %v1022 = vpack.c.bf16 %v1006, %v1006
            %v1023 = vpack.c.bf16 %v1007, %v1007
            %v1024 = vpack.c.bf16 %v1008, %v1008
            %v1025 = vpack.c.bf16 %v1009, %v1009
            %v1026 = vpack.c.bf16 %v1010, %v1010
            %v1027 = vpack.c.bf16 %v1011, %v1011
            %v1028 = vpack.c.bf16 %v1012, %v1012
            %s1029 = sshra.s32 %s663, 7
            %s1030 = sand.u32 %s663, 127
            %s1031 = smul.addr %s1029, 4
            %s1032 = scalar_lea.vmem [#allocation2], %s1031
            %1033 = vst [vmem:[%s1032] sm:$0xf] %v1013
            %1034 = vst [vmem:[%s1032 + $0x8] sm:$0xf] %v1014
            %1035 = vst [vmem:[%s1032 + $0x10] sm:$0xf] %v1015
            %1036 = vst [vmem:[%s1032 + $0x18] sm:$0xf] %v1016
            %1037 = vst [vmem:[%s1032 + $0x20] sm:$0xf] %v1017
            %1038 = vst [vmem:[%s1032 + $0x28] sm:$0xf] %v1018
            %1039 = vst [vmem:[%s1032 + $0x30] sm:$0xf] %v1019
            %1040 = vst [vmem:[%s1032 + $0x38] sm:$0xf] %v1020
            %1041 = vst [vmem:[%s1032 + $0x40] sm:$0xf] %v1021
            %1042 = vst [vmem:[%s1032 + $0x48] sm:$0xf] %v1022
            %1043 = vst [vmem:[%s1032 + $0x50] sm:$0xf] %v1023
            %1044 = vst [vmem:[%s1032 + $0x58] sm:$0xf] %v1024
            %1045 = vst [vmem:[%s1032 + $0x60] sm:$0xf] %v1025
            %1046 = vst [vmem:[%s1032 + $0x68] sm:$0xf] %v1026
            %1047 = vst [vmem:[%s1032 + $0x70] sm:$0xf] %v1027
            %1048 = vst [vmem:[%s1032 + $0x78] sm:$0xf] %v1028
            %v1049 = vpack.c.bf16 %v942, %v942
            %v1050 = vpack.c.bf16 %v944, %v944
            %v1051 = vpack.c.bf16 %v947, %v947
            %v1052 = vpack.c.bf16 %v949, %v949
            %v1053 = vpack.c.bf16 %v952, %v952
            %v1054 = vpack.c.bf16 %v954, %v954
            %v1055 = vpack.c.bf16 %v957, %v957
            %v1056 = vpack.c.bf16 %v959, %v959
            %v1057 = vpack.c.bf16 %v962, %v962
            %v1058 = vpack.c.bf16 %v964, %v964
            %v1059 = vpack.c.bf16 %v967, %v967
            %v1060 = vpack.c.bf16 %v969, %v969
            %v1061 = vpack.c.bf16 %v972, %v972
            %v1062 = vpack.c.bf16 %v974, %v974
            %v1063 = vpack.c.bf16 %v977, %v977
            %v1064 = vpack.c.bf16 %v979, %v979
            %s1065 = sshra.s32 %s663, 3
            %s1066 = sand.u32 %s663, 7
            %s1067 = smul.addr %s1065, 4
            %s1068 = scalar_lea.vmem [#allocation3], %s1067
            %1069 = vst [vmem:[%s1068] sm:$0xf] %v1049
            %1070 = vst [vmem:[%s1068 + $0x4] sm:$0xf] %v1050
            %1071 = vst [vmem:[%s1068 + $0x8] sm:$0xf] %v1051
            %1072 = vst [vmem:[%s1068 + $0xc] sm:$0xf] %v1052
            %1073 = vst [vmem:[%s1068 + $0x10] sm:$0xf] %v1053
            %1074 = vst [vmem:[%s1068 + $0x14] sm:$0xf] %v1054
            %1075 = vst [vmem:[%s1068 + $0x18] sm:$0xf] %v1055
            %1076 = vst [vmem:[%s1068 + $0x1c] sm:$0xf] %v1056
            %1077 = vst [vmem:[%s1068 + $0x20] sm:$0xf] %v1057
            %1078 = vst [vmem:[%s1068 + $0x24] sm:$0xf] %v1058
            %1079 = vst [vmem:[%s1068 + $0x28] sm:$0xf] %v1059
            %1080 = vst [vmem:[%s1068 + $0x2c] sm:$0xf] %v1060
            %1081 = vst [vmem:[%s1068 + $0x30] sm:$0xf] %v1061
            %1082 = vst [vmem:[%s1068 + $0x34] sm:$0xf] %v1062
            %1083 = vst [vmem:[%s1068 + $0x38] sm:$0xf] %v1063
            %1084 = vst [vmem:[%s1068 + $0x3c] sm:$0xf] %v1064
          $region112: #{tpu_custom_call.1} parent=79 // loop_footer
            %s660 = sadd.s32 1, %s656
          $region113: #{tpu_custom_call.1} parent=79 // loop_footer_branch
            %655 = sbr.rel target = $region109
          $region114: #{tpu_custom_call.1} parent=79 // loop_exit
            _
        $region80: #{tpu_custom_call.1} parent=47 // pred_fallthru
          _
        %v1085 = vld [vmem:[#allocation4] sm:$0x1]
        %v1086 = vld [vmem:[#allocation5] sm:$0x1]
        %v1087 = vld [vmem:[%s353] sm:$0xff]
        %v1088 = vld [vmem:[%s353 + $0x8] sm:$0xff]
        %v1089 = vld [vmem:[%s353 + $0x10] sm:$0xff]
        %v1090 = vld [vmem:[%s353 + $0x18] sm:$0xff]
        %v1091 = vld [vmem:[%s353 + $0x20] sm:$0xff]
        %v1092 = vld [vmem:[%s353 + $0x28] sm:$0xff]
        %v1093 = vld [vmem:[%s353 + $0x30] sm:$0xff]
        %v1094 = vld [vmem:[%s353 + $0x38] sm:$0xff]
        %v1095 = vld [vmem:[%s353 + $0x40] sm:$0xff]
        %v1096 = vld [vmem:[%s353 + $0x48] sm:$0xff]
        %v1097 = vld [vmem:[%s353 + $0x50] sm:$0xff]
        %v1098 = vld [vmem:[%s353 + $0x58] sm:$0xff]
        %v1099 = vld [vmem:[%s353 + $0x60] sm:$0xff]
        %v1100 = vld [vmem:[%s353 + $0x68] sm:$0xff]
        %v1101 = vld [vmem:[%s353 + $0x70] sm:$0xff]
        %v1102 = vld [vmem:[%s353 + $0x78] sm:$0xff]
        %v1104 = vperm.slane %v1085, 0
        %v1106 = vmul.f32 %v1087, %v1104
        %v1107 = vmul.f32 %v1088, %v1104
        %v1108 = vmul.f32 %v1089, %v1104
        %v1109 = vmul.f32 %v1090, %v1104
        %v1110 = vmul.f32 %v1091, %v1104
        %v1111 = vmul.f32 %v1092, %v1104
        %v1112 = vmul.f32 %v1093, %v1104
        %v1113 = vmul.f32 %v1094, %v1104
        %v1114 = vmul.f32 %v1095, %v1104
        %v1115 = vmul.f32 %v1096, %v1104
        %v1116 = vmul.f32 %v1097, %v1104
        %v1117 = vmul.f32 %v1098, %v1104
        %v1118 = vmul.f32 %v1099, %v1104
        %v1119 = vmul.f32 %v1100, %v1104
        %v1120 = vmul.f32 %v1101, %v1104
        %v1121 = vmul.f32 %v1102, %v1104
        %v1123 = vperm.slane %v1086, 0
        %v1125 = vadd.f32 %v1106, %v1123
        %v1126 = vadd.f32 %v1107, %v1123
        %v1127 = vadd.f32 %v1108, %v1123
        %v1128 = vadd.f32 %v1109, %v1123
        %v1129 = vadd.f32 %v1110, %v1123
        %v1130 = vadd.f32 %v1111, %v1123
        %v1131 = vadd.f32 %v1112, %v1123
        %v1132 = vadd.f32 %v1113, %v1123
        %v1133 = vadd.f32 %v1114, %v1123
        %v1134 = vadd.f32 %v1115, %v1123
        %v1135 = vadd.f32 %v1116, %v1123
        %v1136 = vadd.f32 %v1117, %v1123
        %v1137 = vadd.f32 %v1118, %v1123
        %v1138 = vadd.f32 %v1119, %v1123
        %v1139 = vadd.f32 %v1120, %v1123
        %v1140 = vadd.f32 %v1121, %v1123
        %v1141 = vpack.c.bf16 %v1126, %v1125
        %v1142 = vpack.c.bf16 %v1128, %v1127
        %v1143 = vpack.c.bf16 %v1130, %v1129
        %v1144 = vpack.c.bf16 %v1132, %v1131
        %v1145 = vpack.c.bf16 %v1134, %v1133
        %v1146 = vpack.c.bf16 %v1136, %v1135
        %v1147 = vpack.c.bf16 %v1138, %v1137
        %v1148 = vpack.c.bf16 %v1140, %v1139
        %v1149 = vld [vmem:[#allocation14 + $0x2] sm:$0x1]
        %v1150 = vld [vmem:[#allocation17] sm:$0xf]
        %v1151 = vld [vmem:[#allocation17 + $0x4] sm:$0xf]
        %v1152 = vld [vmem:[#allocation17 + $0x8] sm:$0xf]
        %v1153 = vld [vmem:[#allocation17 + $0xc] sm:$0xf]
        %v1154 = vld [vmem:[#allocation17 + $0x10] sm:$0xf]
        %v1155 = vld [vmem:[#allocation17 + $0x14] sm:$0xf]
        %v1156 = vld [vmem:[#allocation17 + $0x18] sm:$0xf]
        %v1157 = vld [vmem:[#allocation17 + $0x1c] sm:$0xf]
        %v1158 = vld [vmem:[#allocation17 + $0x20] sm:$0xf]
        %v1159 = vld [vmem:[#allocation17 + $0x24] sm:$0xf]
        %v1160 = vld [vmem:[#allocation17 + $0x28] sm:$0xf]
        %v1161 = vld [vmem:[#allocation17 + $0x2c] sm:$0xf]
        %v1162 = vld [vmem:[#allocation17 + $0x30] sm:$0xf]
        %v1163 = vld [vmem:[#allocation17 + $0x34] sm:$0xf]
        %v1164 = vld [vmem:[#allocation17 + $0x38] sm:$0xf]
        %v1165 = vld [vmem:[#allocation17 + $0x3c] sm:$0xf]
        %v1166 = vperm.slane %v1149, 0
        %v1183 = vunpack.c.l.b16 %v1150
        %v1184 = vunpack.c.l.b16 %v1151
        %v1185 = vunpack.c.l.b16 %v1152
        %v1186 = vunpack.c.l.b16 %v1153
        %v1187 = vunpack.c.l.b16 %v1154
        %v1188 = vunpack.c.l.b16 %v1155
        %v1189 = vunpack.c.l.b16 %v1156
        %v1190 = vunpack.c.l.b16 %v1157
        %v1191 = vunpack.c.l.b16 %v1158
        %v1192 = vunpack.c.l.b16 %v1159
        %v1193 = vunpack.c.l.b16 %v1160
        %v1194 = vunpack.c.l.b16 %v1161
        %v1195 = vunpack.c.l.b16 %v1162
        %v1196 = vunpack.c.l.b16 %v1163
        %v1197 = vunpack.c.l.b16 %v1164
        %v1198 = vunpack.c.l.b16 %v1165
        %v1199 = vpack.c.b16 %v1184, %v1183
        %v1200 = vpack.c.b16 %v1186, %v1185
        %v1201 = vpack.c.b16 %v1188, %v1187
        %v1202 = vpack.c.b16 %v1190, %v1189
        %v1203 = vpack.c.b16 %v1192, %v1191
        %v1204 = vpack.c.b16 %v1194, %v1193
        %v1205 = vpack.c.b16 %v1196, %v1195
        %v1206 = vpack.c.b16 %v1198, %v1197
        %1215 = vmatpush.bf16.msra.mxu0 %v1206
        %1216 = vmatpush.bf16.msra.mxu0 %v1205
        %1217 = vmatpush.bf16.msra.mxu0 %v1204
        %1218 = vmatpush.bf16.msra.mxu0 %v1203
        %1219 = vmatpush.bf16.msra.mxu0 %v1202
        %1220 = vmatpush.bf16.msra.mxu0 %v1201
        %1221 = vmatpush.bf16.msra.mxu0 %v1200
        %1222 = vmatpush.bf16.msra.mxu0 %v1199
        %1223 = vmatmul.bf16.gmra.mxu0 %v1141
        %v1224 = vpop.f32.mrf.mxu0
        %v1225 = vadd.f32 %v1166, %v1224
        %v1226 = vpop.f32.mrf.mxu0
        %v1227 = vadd.f32 %v1166, %v1226
        %1228 = vmatmul.bf16.gmra.mxu0 %v1142
        %v1229 = vpop.f32.mrf.mxu0
        %v1230 = vadd.f32 %v1166, %v1229
        %v1231 = vpop.f32.mrf.mxu0
        %v1232 = vadd.f32 %v1166, %v1231
        %1233 = vmatmul.bf16.gmra.mxu0 %v1143
        %v1234 = vpop.f32.mrf.mxu0
        %v1235 = vadd.f32 %v1166, %v1234
        %v1236 = vpop.f32.mrf.mxu0
        %v1237 = vadd.f32 %v1166, %v1236
        %1238 = vmatmul.bf16.gmra.mxu0 %v1144
        %v1239 = vpop.f32.mrf.mxu0
        %v1240 = vadd.f32 %v1166, %v1239
        %v1241 = vpop.f32.mrf.mxu0
        %v1242 = vadd.f32 %v1166, %v1241
        %1243 = vmatmul.bf16.gmra.mxu0 %v1145
        %v1244 = vpop.f32.mrf.mxu0
        %v1245 = vadd.f32 %v1166, %v1244
        %v1246 = vpop.f32.mrf.mxu0
        %v1247 = vadd.f32 %v1166, %v1246
        %1248 = vmatmul.bf16.gmra.mxu0 %v1146
        %v1249 = vpop.f32.mrf.mxu0
        %v1250 = vadd.f32 %v1166, %v1249
        %v1251 = vpop.f32.mrf.mxu0
        %v1252 = vadd.f32 %v1166, %v1251
        %1253 = vmatmul.bf16.gmra.mxu0 %v1147
        %v1254 = vpop.f32.mrf.mxu0
        %v1255 = vadd.f32 %v1166, %v1254
        %v1256 = vpop.f32.mrf.mxu0
        %v1257 = vadd.f32 %v1166, %v1256
        %1258 = vmatmul.bf16.gmra.mxu0 %v1148
        %v1259 = vpop.f32.mrf.mxu0
        %v1260 = vadd.f32 %v1166, %v1259
        %v1261 = vpop.f32.mrf.mxu0
        %v1262 = vadd.f32 %v1166, %v1261
        %1263 = vdwg.mxu0
        %v1264 = vpack.c.bf16 %v1227, %v1225
        %v1265 = vpack.c.bf16 %v1232, %v1230
        %v1266 = vpack.c.bf16 %v1237, %v1235
        %v1267 = vpack.c.bf16 %v1242, %v1240
        %v1268 = vpack.c.bf16 %v1247, %v1245
        %v1269 = vpack.c.bf16 %v1252, %v1250
        %v1270 = vpack.c.bf16 %v1257, %v1255
        %v1271 = vpack.c.bf16 %v1262, %v1260
        %vm1272 = vcmask 7168
        %1273 = vst.msk [vmem:[#allocation8] sm:$0xff] %vm1272, -inf
        %1274 = vst.msk [vmem:[#allocation8 + $0x8] sm:$0xff] %vm1272, -inf
        %1275 = vst.msk [vmem:[#allocation8 + $0x10] sm:$0xff] %vm1272, -inf
        %1276 = vst.msk [vmem:[#allocation8 + $0x18] sm:$0xff] %vm1272, -inf
        %1277 = vst.msk [vmem:[#allocation8 + $0x20] sm:$0xff] %vm1272, -inf
        %1278 = vst.msk [vmem:[#allocation8 + $0x28] sm:$0xff] %vm1272, -inf
        %1279 = vst.msk [vmem:[#allocation8 + $0x30] sm:$0xff] %vm1272, -inf
        %1280 = vst.msk [vmem:[#allocation8 + $0x38] sm:$0xff] %vm1272, -inf
        %1281 = vst.msk [vmem:[#allocation8 + $0x40] sm:$0xff] %vm1272, -inf
        %1282 = vst.msk [vmem:[#allocation8 + $0x48] sm:$0xff] %vm1272, -inf
        %1283 = vst.msk [vmem:[#allocation8 + $0x50] sm:$0xff] %vm1272, -inf
        %1284 = vst.msk [vmem:[#allocation8 + $0x58] sm:$0xff] %vm1272, -inf
        %1285 = vst.msk [vmem:[#allocation8 + $0x60] sm:$0xff] %vm1272, -inf
        %1286 = vst.msk [vmem:[#allocation8 + $0x68] sm:$0xff] %vm1272, -inf
        %1287 = vst.msk [vmem:[#allocation8 + $0x70] sm:$0xff] %vm1272, -inf
        %1288 = vst.msk [vmem:[#allocation8 + $0x78] sm:$0xff] %vm1272, -inf
        %1289 = vst.msk [vmem:[#allocation9] sm:$0xff] %vm1272, 0.0
        %1290 = vst.msk [vmem:[#allocation9 + $0x8] sm:$0xff] %vm1272, 0.0
        %1291 = vst.msk [vmem:[#allocation9 + $0x10] sm:$0xff] %vm1272, 0.0
        %1292 = vst.msk [vmem:[#allocation9 + $0x18] sm:$0xff] %vm1272, 0.0
        %1293 = vst.msk [vmem:[#allocation9 + $0x20] sm:$0xff] %vm1272, 0.0
        %1294 = vst.msk [vmem:[#allocation9 + $0x28] sm:$0xff] %vm1272, 0.0
        %1295 = vst.msk [vmem:[#allocation9 + $0x30] sm:$0xff] %vm1272, 0.0
        %1296 = vst.msk [vmem:[#allocation9 + $0x38] sm:$0xff] %vm1272, 0.0
        %1297 = vst.msk [vmem:[#allocation9 + $0x40] sm:$0xff] %vm1272, 0.0
        %1298 = vst.msk [vmem:[#allocation9 + $0x48] sm:$0xff] %vm1272, 0.0
        %1299 = vst.msk [vmem:[#allocation9 + $0x50] sm:$0xff] %vm1272, 0.0
        %1300 = vst.msk [vmem:[#allocation9 + $0x58] sm:$0xff] %vm1272, 0.0
        %1301 = vst.msk [vmem:[#allocation9 + $0x60] sm:$0xff] %vm1272, 0.0
        %1302 = vst.msk [vmem:[#allocation9 + $0x68] sm:$0xff] %vm1272, 0.0
        %1303 = vst.msk [vmem:[#allocation9 + $0x70] sm:$0xff] %vm1272, 0.0
        %1304 = vst.msk [vmem:[#allocation9 + $0x78] sm:$0xff] %vm1272, 0.0
        %1305 = vst [vmem:[#allocation10] sm:$0xff] 0.0
        %1306 = vst [vmem:[#allocation10 + $0x8] sm:$0xff] 0.0
        %1307 = vst [vmem:[#allocation10 + $0x10] sm:$0xff] 0.0
        %1308 = vst [vmem:[#allocation10 + $0x18] sm:$0xff] 0.0
        %1309 = vst [vmem:[#allocation10 + $0x20] sm:$0xff] 0.0
        %1310 = vst [vmem:[#allocation10 + $0x28] sm:$0xff] 0.0
        %1311 = vst [vmem:[#allocation10 + $0x30] sm:$0xff] 0.0
        %1312 = vst [vmem:[#allocation10 + $0x38] sm:$0xff] 0.0
        %1313 = vst [vmem:[#allocation10 + $0x40] sm:$0xff] 0.0
        %1314 = vst [vmem:[#allocation10 + $0x48] sm:$0xff] 0.0
        %1315 = vst [vmem:[#allocation10 + $0x50] sm:$0xff] 0.0
        %1316 = vst [vmem:[#allocation10 + $0x58] sm:$0xff] 0.0
        %1317 = vst [vmem:[#allocation10 + $0x60] sm:$0xff] 0.0
        %1318 = vst [vmem:[#allocation10 + $0x68] sm:$0xff] 0.0
        %1319 = vst [vmem:[#allocation10 + $0x70] sm:$0xff] 0.0
        %1320 = vst [vmem:[#allocation10 + $0x78] sm:$0xff] 0.0
        loop: start=0, step=1, limit=2
        $region123: #{tpu_custom_call.1} parent=47 // loop_pre_header
          _
        $region124: #{tpu_custom_call.1} parent=47 // loop_header
          %s1322 = sphi 0, %s1326
          %p1323 = scmp.ge.s32.totalorder %s1322, 2
        $region125: #{tpu_custom_call.1} parent=47 // loop_header_branch
          %1325 = sbr.rel (%p1323) target = $region129
        $region126: #{tpu_custom_call.1} parent=47 // loop_body
          %s1327 = smul.u32 %s1322, 128
          %s1328 = sshra.s32 %s1327, 7
          %s1329 = sand.u32 %s1327, 127
          %s1330 = smul.addr %s1328, 4
          %s1331 = scalar_lea.vmem [#allocation2], %s1330
          %v1332 = vld [vmem:[%s1331] sm:$0xf]
          %v1333 = vld [vmem:[%s1331 + $0x8] sm:$0xf]
          %v1334 = vld [vmem:[%s1331 + $0x10] sm:$0xf]
          %v1335 = vld [vmem:[%s1331 + $0x18] sm:$0xf]
          %v1336 = vld [vmem:[%s1331 + $0x20] sm:$0xf]
          %v1337 = vld [vmem:[%s1331 + $0x28] sm:$0xf]
          %v1338 = vld [vmem:[%s1331 + $0x30] sm:$0xf]
          %v1339 = vld [vmem:[%s1331 + $0x38] sm:$0xf]
          %v1340 = vld [vmem:[%s1331 + $0x40] sm:$0xf]
          %v1341 = vld [vmem:[%s1331 + $0x48] sm:$0xf]
          %v1342 = vld [vmem:[%s1331 + $0x50] sm:$0xf]
          %v1343 = vld [vmem:[%s1331 + $0x58] sm:$0xf]
          %v1344 = vld [vmem:[%s1331 + $0x60] sm:$0xf]
          %v1345 = vld [vmem:[%s1331 + $0x68] sm:$0xf]
          %v1346 = vld [vmem:[%s1331 + $0x70] sm:$0xf]
          %v1347 = vld [vmem:[%s1331 + $0x78] sm:$0xf]
          %s1348 = sshra.s32 %s1327, 3
          %s1349 = sand.u32 %s1327, 7
          %s1350 = smul.addr %s1348, 4
          %s1351 = scalar_lea.vmem [#allocation3], %s1350
          %v1352 = vld [vmem:[%s1351] sm:$0xf]
          %v1353 = vld [vmem:[%s1351 + $0x4] sm:$0xf]
          %v1354 = vld [vmem:[%s1351 + $0x8] sm:$0xf]
          %v1355 = vld [vmem:[%s1351 + $0xc] sm:$0xf]
          %v1356 = vld [vmem:[%s1351 + $0x10] sm:$0xf]
          %v1357 = vld [vmem:[%s1351 + $0x14] sm:$0xf]
          %v1358 = vld [vmem:[%s1351 + $0x18] sm:$0xf]
          %v1359 = vld [vmem:[%s1351 + $0x1c] sm:$0xf]
          %v1360 = vld [vmem:[%s1351 + $0x20] sm:$0xf]
          %v1361 = vld [vmem:[%s1351 + $0x24] sm:$0xf]
          %v1362 = vld [vmem:[%s1351 + $0x28] sm:$0xf]
          %v1363 = vld [vmem:[%s1351 + $0x2c] sm:$0xf]
          %v1364 = vld [vmem:[%s1351 + $0x30] sm:$0xf]
          %v1365 = vld [vmem:[%s1351 + $0x34] sm:$0xf]
          %v1366 = vld [vmem:[%s1351 + $0x38] sm:$0xf]
          %v1367 = vld [vmem:[%s1351 + $0x3c] sm:$0xf]
          %v1384 = vunpack.c.l.b16 %v1332
          %v1385 = vunpack.c.l.b16 %v1333
          %v1386 = vunpack.c.l.b16 %v1334
          %v1387 = vunpack.c.l.b16 %v1335
          %v1388 = vunpack.c.l.b16 %v1336
          %v1389 = vunpack.c.l.b16 %v1337
          %v1390 = vunpack.c.l.b16 %v1338
          %v1391 = vunpack.c.l.b16 %v1339
          %v1392 = vunpack.c.l.b16 %v1340
          %v1393 = vunpack.c.l.b16 %v1341
          %v1394 = vunpack.c.l.b16 %v1342
          %v1395 = vunpack.c.l.b16 %v1343
          %v1396 = vunpack.c.l.b16 %v1344
          %v1397 = vunpack.c.l.b16 %v1345
          %v1398 = vunpack.c.l.b16 %v1346
          %v1399 = vunpack.c.l.b16 %v1347
          %v1400 = vpack.c.b16 %v1385, %v1384
          %v1401 = vpack.c.b16 %v1387, %v1386
          %v1402 = vpack.c.b16 %v1389, %v1388
          %v1403 = vpack.c.b16 %v1391, %v1390
          %v1404 = vpack.c.b16 %v1393, %v1392
          %v1405 = vpack.c.b16 %v1395, %v1394
          %v1406 = vpack.c.b16 %v1397, %v1396
          %v1407 = vpack.c.b16 %v1399, %v1398
          %1416 = vmatpush.bf16.msra.mxu0 %v1407
          %1417 = vmatpush.bf16.msra.mxu0 %v1406
          %1418 = vmatpush.bf16.msra.mxu0 %v1405
          %1419 = vmatpush.bf16.msra.mxu0 %v1404
          %1420 = vmatpush.bf16.msra.mxu0 %v1403
          %1421 = vmatpush.bf16.msra.mxu0 %v1402
          %1422 = vmatpush.bf16.msra.mxu0 %v1401
          %1423 = vmatpush.bf16.msra.mxu0 %v1400
          %1424 = vmatmul.bf16.gmra.mxu0 %v1264
          %v1425 = vpop.f32.mrf.mxu0
          %v1426 = vadd.f32 0.0, %v1425
          %v1427 = vpop.f32.mrf.mxu0
          %v1428 = vadd.f32 0.0, %v1427
          %1429 = vmatmul.bf16.gmra.mxu0 %v1265
          %v1430 = vpop.f32.mrf.mxu0
          %v1431 = vadd.f32 0.0, %v1430
          %v1432 = vpop.f32.mrf.mxu0
          %v1433 = vadd.f32 0.0, %v1432
          %1434 = vmatmul.bf16.gmra.mxu0 %v1266
          %v1435 = vpop.f32.mrf.mxu0
          %v1436 = vadd.f32 0.0, %v1435
          %v1437 = vpop.f32.mrf.mxu0
          %v1438 = vadd.f32 0.0, %v1437
          %1439 = vmatmul.bf16.gmra.mxu0 %v1267
          %v1440 = vpop.f32.mrf.mxu0
          %v1441 = vadd.f32 0.0, %v1440
          %v1442 = vpop.f32.mrf.mxu0
          %v1443 = vadd.f32 0.0, %v1442
          %1444 = vmatmul.bf16.gmra.mxu0 %v1268
          %v1445 = vpop.f32.mrf.mxu0
          %v1446 = vadd.f32 0.0, %v1445
          %v1447 = vpop.f32.mrf.mxu0
          %v1448 = vadd.f32 0.0, %v1447
          %1449 = vmatmul.bf16.gmra.mxu0 %v1269
          %v1450 = vpop.f32.mrf.mxu0
          %v1451 = vadd.f32 0.0, %v1450
          %v1452 = vpop.f32.mrf.mxu0
          %v1453 = vadd.f32 0.0, %v1452
          %1454 = vmatmul.bf16.gmra.mxu0 %v1270
          %v1455 = vpop.f32.mrf.mxu0
          %v1456 = vadd.f32 0.0, %v1455
          %v1457 = vpop.f32.mrf.mxu0
          %v1458 = vadd.f32 0.0, %v1457
          %1459 = vmatmul.bf16.gmra.mxu0 %v1271
          %v1460 = vpop.f32.mrf.mxu0
          %v1461 = vadd.f32 0.0, %v1460
          %v1462 = vpop.f32.mrf.mxu0
          %v1463 = vadd.f32 0.0, %v1462
          %1464 = vdwg.mxu0
          %v1465 = vld [vmem:[#allocation8] sm:$0xff]
          %v1466 = vld [vmem:[#allocation8 + $0x8] sm:$0xff]
          %v1467 = vld [vmem:[#allocation8 + $0x10] sm:$0xff]
          %v1468 = vld [vmem:[#allocation8 + $0x18] sm:$0xff]
          %v1469 = vld [vmem:[#allocation8 + $0x20] sm:$0xff]
          %v1470 = vld [vmem:[#allocation8 + $0x28] sm:$0xff]
          %v1471 = vld [vmem:[#allocation8 + $0x30] sm:$0xff]
          %v1472 = vld [vmem:[#allocation8 + $0x38] sm:$0xff]
          %v1473 = vld [vmem:[#allocation8 + $0x40] sm:$0xff]
          %v1474 = vld [vmem:[#allocation8 + $0x48] sm:$0xff]
          %v1475 = vld [vmem:[#allocation8 + $0x50] sm:$0xff]
          %v1476 = vld [vmem:[#allocation8 + $0x58] sm:$0xff]
          %v1477 = vld [vmem:[#allocation8 + $0x60] sm:$0xff]
          %v1478 = vld [vmem:[#allocation8 + $0x68] sm:$0xff]
          %v1479 = vld [vmem:[#allocation8 + $0x70] sm:$0xff]
          %v1480 = vld [vmem:[#allocation8 + $0x78] sm:$0xff]
          %1481 = vmax.xlane.f32.xlu0 %v1426
          %v1482 = vpop.xlane.xlu0 %1481
          %1483 = vmax.xlane.f32.xlu0 %v1428
          %v1484 = vpop.xlane.xlu0 %1483
          %1485 = vmax.xlane.f32.xlu0 %v1431
          %v1486 = vpop.xlane.xlu0 %1485
          %1487 = vmax.xlane.f32.xlu0 %v1433
          %v1488 = vpop.xlane.xlu0 %1487
          %1489 = vmax.xlane.f32.xlu0 %v1436
          %v1490 = vpop.xlane.xlu0 %1489
          %1491 = vmax.xlane.f32.xlu0 %v1438
          %v1492 = vpop.xlane.xlu0 %1491
          %1493 = vmax.xlane.f32.xlu0 %v1441
          %v1494 = vpop.xlane.xlu0 %1493
          %1495 = vmax.xlane.f32.xlu0 %v1443
          %v1496 = vpop.xlane.xlu0 %1495
          %1497 = vmax.xlane.f32.xlu0 %v1446
          %v1498 = vpop.xlane.xlu0 %1497
          %1499 = vmax.xlane.f32.xlu0 %v1448
          %v1500 = vpop.xlane.xlu0 %1499
          %1501 = vmax.xlane.f32.xlu0 %v1451
          %v1502 = vpop.xlane.xlu0 %1501
          %1503 = vmax.xlane.f32.xlu0 %v1453
          %v1504 = vpop.xlane.xlu0 %1503
          %1505 = vmax.xlane.f32.xlu0 %v1456
          %v1506 = vpop.xlane.xlu0 %1505
          %1507 = vmax.xlane.f32.xlu0 %v1458
          %v1508 = vpop.xlane.xlu0 %1507
          %1509 = vmax.xlane.f32.xlu0 %v1461
          %v1510 = vpop.xlane.xlu0 %1509
          %1511 = vmax.xlane.f32.xlu0 %v1463
          %v1512 = vpop.xlane.xlu0 %1511
          %v1513 = vmax.f32 %v1465, %v1482
          %v1514 = vmax.f32 %v1466, %v1484
          %v1515 = vmax.f32 %v1467, %v1486
          %v1516 = vmax.f32 %v1468, %v1488
          %v1517 = vmax.f32 %v1469, %v1490
          %v1518 = vmax.f32 %v1470, %v1492
          %v1519 = vmax.f32 %v1471, %v1494
          %v1520 = vmax.f32 %v1472, %v1496
          %v1521 = vmax.f32 %v1473, %v1498
          %v1522 = vmax.f32 %v1474, %v1500
          %v1523 = vmax.f32 %v1475, %v1502
          %v1524 = vmax.f32 %v1476, %v1504
          %v1525 = vmax.f32 %v1477, %v1506
          %v1526 = vmax.f32 %v1478, %v1508
          %v1527 = vmax.f32 %v1479, %v1510
          %v1528 = vmax.f32 %v1480, %v1512
          %v1529 = vsub.f32 %v1465, %v1513
          %v1530 = vsub.f32 %v1466, %v1514
          %v1531 = vsub.f32 %v1467, %v1515
          %v1532 = vsub.f32 %v1468, %v1516
          %v1533 = vsub.f32 %v1469, %v1517
          %v1534 = vsub.f32 %v1470, %v1518
          %v1535 = vsub.f32 %v1471, %v1519
          %v1536 = vsub.f32 %v1472, %v1520
          %v1537 = vsub.f32 %v1473, %v1521
          %v1538 = vsub.f32 %v1474, %v1522
          %v1539 = vsub.f32 %v1475, %v1523
          %v1540 = vsub.f32 %v1476, %v1524
          %v1541 = vsub.f32 %v1477, %v1525
          %v1542 = vsub.f32 %v1478, %v1526
          %v1543 = vsub.f32 %v1479, %v1527
          %v1544 = vsub.f32 %v1480, %v1528
          %v1545 = vmul.f32 %v1529, 1.442695
          %v1546 = vpow.pop %v1545
          %v1547 = vmul.f32 %v1530, 1.442695
          %v1548 = vpow.pop %v1547
          %v1549 = vmul.f32 %v1531, 1.442695
          %v1550 = vpow.pop %v1549
          %v1551 = vmul.f32 %v1532, 1.442695
          %v1552 = vpow.pop %v1551
          %v1553 = vmul.f32 %v1533, 1.442695
          %v1554 = vpow.pop %v1553
          %v1555 = vmul.f32 %v1534, 1.442695
          %v1556 = vpow.pop %v1555
          %v1557 = vmul.f32 %v1535, 1.442695
          %v1558 = vpow.pop %v1557
          %v1559 = vmul.f32 %v1536, 1.442695
          %v1560 = vpow.pop %v1559
          %v1561 = vmul.f32 %v1537, 1.442695
          %v1562 = vpow.pop %v1561
          %v1563 = vmul.f32 %v1538, 1.442695
          %v1564 = vpow.pop %v1563
          %v1565 = vmul.f32 %v1539, 1.442695
          %v1566 = vpow.pop %v1565
          %v1567 = vmul.f32 %v1540, 1.442695
          %v1568 = vpow.pop %v1567
          %v1569 = vmul.f32 %v1541, 1.442695
          %v1570 = vpow.pop %v1569
          %v1571 = vmul.f32 %v1542, 1.442695
          %v1572 = vpow.pop %v1571
          %v1573 = vmul.f32 %v1543, 1.442695
          %v1574 = vpow.pop %v1573
          %v1575 = vmul.f32 %v1544, 1.442695
          %v1576 = vpow.pop %v1575
          %1578 = vset.pattern.permute.xlu0 0
          %1579 = vperm.xlu0 %1578, %v1513
          %v1580 = vpop.permute.xlu0 %1579
          %1583 = vset.pattern.permute.xlu0 0
          %1584 = vperm.xlu0 %1583, %v1514
          %v1585 = vpop.permute.xlu0 %1584
          %1588 = vset.pattern.permute.xlu0 0
          %1589 = vperm.xlu0 %1588, %v1515
          %v1590 = vpop.permute.xlu0 %1589
          %1593 = vset.pattern.permute.xlu0 0
          %1594 = vperm.xlu0 %1593, %v1516
          %v1595 = vpop.permute.xlu0 %1594
          %1598 = vset.pattern.permute.xlu0 0
          %1599 = vperm.xlu0 %1598, %v1517
          %v1600 = vpop.permute.xlu0 %1599
          %1603 = vset.pattern.permute.xlu0 0
          %1604 = vperm.xlu0 %1603, %v1518
          %v1605 = vpop.permute.xlu0 %1604
          %1608 = vset.pattern.permute.xlu0 0
          %1609 = vperm.xlu0 %1608, %v1519
          %v1610 = vpop.permute.xlu0 %1609
          %1613 = vset.pattern.permute.xlu0 0
          %1614 = vperm.xlu0 %1613, %v1520
          %v1615 = vpop.permute.xlu0 %1614
          %1618 = vset.pattern.permute.xlu0 0
          %1619 = vperm.xlu0 %1618, %v1521
          %v1620 = vpop.permute.xlu0 %1619
          %1623 = vset.pattern.permute.xlu0 0
          %1624 = vperm.xlu0 %1623, %v1522
          %v1625 = vpop.permute.xlu0 %1624
          %1628 = vset.pattern.permute.xlu0 0
          %1629 = vperm.xlu0 %1628, %v1523
          %v1630 = vpop.permute.xlu0 %1629
          %1633 = vset.pattern.permute.xlu0 0
          %1634 = vperm.xlu0 %1633, %v1524
          %v1635 = vpop.permute.xlu0 %1634
          %1638 = vset.pattern.permute.xlu0 0
          %1639 = vperm.xlu0 %1638, %v1525
          %v1640 = vpop.permute.xlu0 %1639
          %1643 = vset.pattern.permute.xlu0 0
          %1644 = vperm.xlu0 %1643, %v1526
          %v1645 = vpop.permute.xlu0 %1644
          %1648 = vset.pattern.permute.xlu0 0
          %1649 = vperm.xlu0 %1648, %v1527
          %v1650 = vpop.permute.xlu0 %1649
          %1653 = vset.pattern.permute.xlu0 0
          %1654 = vperm.xlu0 %1653, %v1528
          %v1655 = vpop.permute.xlu0 %1654
          %v1657 = vsub.f32 %v1426, %v1580
          %v1658 = vsub.f32 %v1428, %v1585
          %v1659 = vsub.f32 %v1431, %v1590
          %v1660 = vsub.f32 %v1433, %v1595
          %v1661 = vsub.f32 %v1436, %v1600
          %v1662 = vsub.f32 %v1438, %v1605
          %v1663 = vsub.f32 %v1441, %v1610
          %v1664 = vsub.f32 %v1443, %v1615
          %v1665 = vsub.f32 %v1446, %v1620
          %v1666 = vsub.f32 %v1448, %v1625
          %v1667 = vsub.f32 %v1451, %v1630
          %v1668 = vsub.f32 %v1453, %v1635
          %v1669 = vsub.f32 %v1456, %v1640
          %v1670 = vsub.f32 %v1458, %v1645
          %v1671 = vsub.f32 %v1461, %v1650
          %v1672 = vsub.f32 %v1463, %v1655
          %v1673 = vmul.f32 %v1657, 1.442695
          %v1674 = vpow.pop %v1673
          %v1675 = vmul.f32 %v1658, 1.442695
          %v1676 = vpow.pop %v1675
          %v1677 = vmul.f32 %v1659, 1.442695
          %v1678 = vpow.pop %v1677
          %v1679 = vmul.f32 %v1660, 1.442695
          %v1680 = vpow.pop %v1679
          %v1681 = vmul.f32 %v1661, 1.442695
          %v1682 = vpow.pop %v1681
          %v1683 = vmul.f32 %v1662, 1.442695
          %v1684 = vpow.pop %v1683
          %v1685 = vmul.f32 %v1663, 1.442695
          %v1686 = vpow.pop %v1685
          %v1687 = vmul.f32 %v1664, 1.442695
          %v1688 = vpow.pop %v1687
          %v1689 = vmul.f32 %v1665, 1.442695
          %v1690 = vpow.pop %v1689
          %v1691 = vmul.f32 %v1666, 1.442695
          %v1692 = vpow.pop %v1691
          %v1693 = vmul.f32 %v1667, 1.442695
          %v1694 = vpow.pop %v1693
          %v1695 = vmul.f32 %v1668, 1.442695
          %v1696 = vpow.pop %v1695
          %v1697 = vmul.f32 %v1669, 1.442695
          %v1698 = vpow.pop %v1697
          %v1699 = vmul.f32 %v1670, 1.442695
          %v1700 = vpow.pop %v1699
          %v1701 = vmul.f32 %v1671, 1.442695
          %v1702 = vpow.pop %v1701
          %v1703 = vmul.f32 %v1672, 1.442695
          %v1704 = vpow.pop %v1703
          %v1705 = vld [vmem:[#allocation9] sm:$0xff]
          %v1706 = vld [vmem:[#allocation9 + $0x8] sm:$0xff]
          %v1707 = vld [vmem:[#allocation9 + $0x10] sm:$0xff]
          %v1708 = vld [vmem:[#allocation9 + $0x18] sm:$0xff]
          %v1709 = vld [vmem:[#allocation9 + $0x20] sm:$0xff]
          %v1710 = vld [vmem:[#allocation9 + $0x28] sm:$0xff]
          %v1711 = vld [vmem:[#allocation9 + $0x30] sm:$0xff]
          %v1712 = vld [vmem:[#allocation9 + $0x38] sm:$0xff]
          %v1713 = vld [vmem:[#allocation9 + $0x40] sm:$0xff]
          %v1714 = vld [vmem:[#allocation9 + $0x48] sm:$0xff]
          %v1715 = vld [vmem:[#allocation9 + $0x50] sm:$0xff]
          %v1716 = vld [vmem:[#allocation9 + $0x58] sm:$0xff]
          %v1717 = vld [vmem:[#allocation9 + $0x60] sm:$0xff]
          %v1718 = vld [vmem:[#allocation9 + $0x68] sm:$0xff]
          %v1719 = vld [vmem:[#allocation9 + $0x70] sm:$0xff]
          %v1720 = vld [vmem:[#allocation9 + $0x78] sm:$0xff]
          %v1721 = vmul.f32 %v1546, %v1705
          %v1722 = vmul.f32 %v1548, %v1706
          %v1723 = vmul.f32 %v1550, %v1707
          %v1724 = vmul.f32 %v1552, %v1708
          %v1725 = vmul.f32 %v1554, %v1709
          %v1726 = vmul.f32 %v1556, %v1710
          %v1727 = vmul.f32 %v1558, %v1711
          %v1728 = vmul.f32 %v1560, %v1712
          %v1729 = vmul.f32 %v1562, %v1713
          %v1730 = vmul.f32 %v1564, %v1714
          %v1731 = vmul.f32 %v1566, %v1715
          %v1732 = vmul.f32 %v1568, %v1716
          %v1733 = vmul.f32 %v1570, %v1717
          %v1734 = vmul.f32 %v1572, %v1718
          %v1735 = vmul.f32 %v1574, %v1719
          %v1736 = vmul.f32 %v1576, %v1720
          %1737 = vadd.xlane.f32.xlu0 %v1674
          %v1738 = vpop.xlane.xlu0 %1737
          %1739 = vadd.xlane.f32.xlu0 %v1676
          %v1740 = vpop.xlane.xlu0 %1739
          %1741 = vadd.xlane.f32.xlu0 %v1678
          %v1742 = vpop.xlane.xlu0 %1741
          %1743 = vadd.xlane.f32.xlu0 %v1680
          %v1744 = vpop.xlane.xlu0 %1743
          %1745 = vadd.xlane.f32.xlu0 %v1682
          %v1746 = vpop.xlane.xlu0 %1745
          %1747 = vadd.xlane.f32.xlu0 %v1684
          %v1748 = vpop.xlane.xlu0 %1747
          %1749 = vadd.xlane.f32.xlu0 %v1686
          %v1750 = vpop.xlane.xlu0 %1749
          %1751 = vadd.xlane.f32.xlu0 %v1688
          %v1752 = vpop.xlane.xlu0 %1751
          %1753 = vadd.xlane.f32.xlu0 %v1690
          %v1754 = vpop.xlane.xlu0 %1753
          %1755 = vadd.xlane.f32.xlu0 %v1692
          %v1756 = vpop.xlane.xlu0 %1755
          %1757 = vadd.xlane.f32.xlu0 %v1694
          %v1758 = vpop.xlane.xlu0 %1757
          %1759 = vadd.xlane.f32.xlu0 %v1696
          %v1760 = vpop.xlane.xlu0 %1759
          %1761 = vadd.xlane.f32.xlu0 %v1698
          %v1762 = vpop.xlane.xlu0 %1761
          %1763 = vadd.xlane.f32.xlu0 %v1700
          %v1764 = vpop.xlane.xlu0 %1763
          %1765 = vadd.xlane.f32.xlu0 %v1702
          %v1766 = vpop.xlane.xlu0 %1765
          %1767 = vadd.xlane.f32.xlu0 %v1704
          %v1768 = vpop.xlane.xlu0 %1767
          %v1769 = vadd.f32 %v1721, %v1738
          %v1770 = vadd.f32 %v1722, %v1740
          %v1771 = vadd.f32 %v1723, %v1742
          %v1772 = vadd.f32 %v1724, %v1744
          %v1773 = vadd.f32 %v1725, %v1746
          %v1774 = vadd.f32 %v1726, %v1748
          %v1775 = vadd.f32 %v1727, %v1750
          %v1776 = vadd.f32 %v1728, %v1752
          %v1777 = vadd.f32 %v1729, %v1754
          %v1778 = vadd.f32 %v1730, %v1756
          %v1779 = vadd.f32 %v1731, %v1758
          %v1780 = vadd.f32 %v1732, %v1760
          %v1781 = vadd.f32 %v1733, %v1762
          %v1782 = vadd.f32 %v1734, %v1764
          %v1783 = vadd.f32 %v1735, %v1766
          %v1784 = vadd.f32 %v1736, %v1768
          %1785 = vst.msk [vmem:[#allocation9] sm:$0xff] %vm1272, %v1769
          %1786 = vst.msk [vmem:[#allocation9 + $0x8] sm:$0xff] %vm1272, %v1770
          %1787 = vst.msk [vmem:[#allocation9 + $0x10] sm:$0xff] %vm1272, %v1771
          %1788 = vst.msk [vmem:[#allocation9 + $0x18] sm:$0xff] %vm1272, %v1772
          %1789 = vst.msk [vmem:[#allocation9 + $0x20] sm:$0xff] %vm1272, %v1773
          %1790 = vst.msk [vmem:[#allocation9 + $0x28] sm:$0xff] %vm1272, %v1774
          %1791 = vst.msk [vmem:[#allocation9 + $0x30] sm:$0xff] %vm1272, %v1775
          %1792 = vst.msk [vmem:[#allocation9 + $0x38] sm:$0xff] %vm1272, %v1776
          %1793 = vst.msk [vmem:[#allocation9 + $0x40] sm:$0xff] %vm1272, %v1777
          %1794 = vst.msk [vmem:[#allocation9 + $0x48] sm:$0xff] %vm1272, %v1778
          %1795 = vst.msk [vmem:[#allocation9 + $0x50] sm:$0xff] %vm1272, %v1779
          %1796 = vst.msk [vmem:[#allocation9 + $0x58] sm:$0xff] %vm1272, %v1780
          %1797 = vst.msk [vmem:[#allocation9 + $0x60] sm:$0xff] %vm1272, %v1781
          %1798 = vst.msk [vmem:[#allocation9 + $0x68] sm:$0xff] %vm1272, %v1782
          %1799 = vst.msk [vmem:[#allocation9 + $0x70] sm:$0xff] %vm1272, %v1783
          %1800 = vst.msk [vmem:[#allocation9 + $0x78] sm:$0xff] %vm1272, %v1784
          %v1801 = vld [vmem:[#allocation10] sm:$0xff]
          %v1802 = vld [vmem:[#allocation10 + $0x8] sm:$0xff]
          %v1803 = vld [vmem:[#allocation10 + $0x10] sm:$0xff]
          %v1804 = vld [vmem:[#allocation10 + $0x18] sm:$0xff]
          %v1805 = vld [vmem:[#allocation10 + $0x20] sm:$0xff]
          %v1806 = vld [vmem:[#allocation10 + $0x28] sm:$0xff]
          %v1807 = vld [vmem:[#allocation10 + $0x30] sm:$0xff]
          %v1808 = vld [vmem:[#allocation10 + $0x38] sm:$0xff]
          %v1809 = vld [vmem:[#allocation10 + $0x40] sm:$0xff]
          %v1810 = vld [vmem:[#allocation10 + $0x48] sm:$0xff]
          %v1811 = vld [vmem:[#allocation10 + $0x50] sm:$0xff]
          %v1812 = vld [vmem:[#allocation10 + $0x58] sm:$0xff]
          %v1813 = vld [vmem:[#allocation10 + $0x60] sm:$0xff]
          %v1814 = vld [vmem:[#allocation10 + $0x68] sm:$0xff]
          %v1815 = vld [vmem:[#allocation10 + $0x70] sm:$0xff]
          %v1816 = vld [vmem:[#allocation10 + $0x78] sm:$0xff]
          %1818 = vset.pattern.permute.xlu0 0
          %1819 = vperm.xlu0 %1818, %v1546
          %v1820 = vpop.permute.xlu0 %1819
          %1823 = vset.pattern.permute.xlu0 0
          %1824 = vperm.xlu0 %1823, %v1548
          %v1825 = vpop.permute.xlu0 %1824
          %1828 = vset.pattern.permute.xlu0 0
          %1829 = vperm.xlu0 %1828, %v1550
          %v1830 = vpop.permute.xlu0 %1829
          %1833 = vset.pattern.permute.xlu0 0
          %1834 = vperm.xlu0 %1833, %v1552
          %v1835 = vpop.permute.xlu0 %1834
          %1838 = vset.pattern.permute.xlu0 0
          %1839 = vperm.xlu0 %1838, %v1554
          %v1840 = vpop.permute.xlu0 %1839
          %1843 = vset.pattern.permute.xlu0 0
          %1844 = vperm.xlu0 %1843, %v1556
          %v1845 = vpop.permute.xlu0 %1844
          %1848 = vset.pattern.permute.xlu0 0
          %1849 = vperm.xlu0 %1848, %v1558
          %v1850 = vpop.permute.xlu0 %1849
          %1853 = vset.pattern.permute.xlu0 0
          %1854 = vperm.xlu0 %1853, %v1560
          %v1855 = vpop.permute.xlu0 %1854
          %1858 = vset.pattern.permute.xlu0 0
          %1859 = vperm.xlu0 %1858, %v1562
          %v1860 = vpop.permute.xlu0 %1859
          %1863 = vset.pattern.permute.xlu0 0
          %1864 = vperm.xlu0 %1863, %v1564
          %v1865 = vpop.permute.xlu0 %1864
          %1868 = vset.pattern.permute.xlu0 0
          %1869 = vperm.xlu0 %1868, %v1566
          %v1870 = vpop.permute.xlu0 %1869
          %1873 = vset.pattern.permute.xlu0 0
          %1874 = vperm.xlu0 %1873, %v1568
          %v1875 = vpop.permute.xlu0 %1874
          %1878 = vset.pattern.permute.xlu0 0
          %1879 = vperm.xlu0 %1878, %v1570
          %v1880 = vpop.permute.xlu0 %1879
          %1883 = vset.pattern.permute.xlu0 0
          %1884 = vperm.xlu0 %1883, %v1572
          %v1885 = vpop.permute.xlu0 %1884
          %1888 = vset.pattern.permute.xlu0 0
          %1889 = vperm.xlu0 %1888, %v1574
          %v1890 = vpop.permute.xlu0 %1889
          %1893 = vset.pattern.permute.xlu0 0
          %1894 = vperm.xlu0 %1893, %v1576
          %v1895 = vpop.permute.xlu0 %1894
          %v1897 = vmul.f32 %v1820, %v1801
          %v1898 = vmul.f32 %v1825, %v1802
          %v1899 = vmul.f32 %v1830, %v1803
          %v1900 = vmul.f32 %v1835, %v1804
          %v1901 = vmul.f32 %v1840, %v1805
          %v1902 = vmul.f32 %v1845, %v1806
          %v1903 = vmul.f32 %v1850, %v1807
          %v1904 = vmul.f32 %v1855, %v1808
          %v1905 = vmul.f32 %v1860, %v1809
          %v1906 = vmul.f32 %v1865, %v1810
          %v1907 = vmul.f32 %v1870, %v1811
          %v1908 = vmul.f32 %v1875, %v1812
          %v1909 = vmul.f32 %v1880, %v1813
          %v1910 = vmul.f32 %v1885, %v1814
          %v1911 = vmul.f32 %v1890, %v1815
          %v1912 = vmul.f32 %v1895, %v1816
          %v1913 = vpack.c.bf16 %v1676, %v1674
          %v1914 = vpack.c.bf16 %v1680, %v1678
          %v1915 = vpack.c.bf16 %v1684, %v1682
          %v1916 = vpack.c.bf16 %v1688, %v1686
          %v1917 = vpack.c.bf16 %v1692, %v1690
          %v1918 = vpack.c.bf16 %v1696, %v1694
          %v1919 = vpack.c.bf16 %v1700, %v1698
          %v1920 = vpack.c.bf16 %v1704, %v1702
          %v1937 = vunpack.c.l.b16 %v1352
          %v1938 = vunpack.c.l.b16 %v1353
          %v1939 = vunpack.c.l.b16 %v1354
          %v1940 = vunpack.c.l.b16 %v1355
          %v1941 = vunpack.c.l.b16 %v1356
          %v1942 = vunpack.c.l.b16 %v1357
          %v1943 = vunpack.c.l.b16 %v1358
          %v1944 = vunpack.c.l.b16 %v1359
          %v1945 = vunpack.c.l.b16 %v1360
          %v1946 = vunpack.c.l.b16 %v1361
          %v1947 = vunpack.c.l.b16 %v1362
          %v1948 = vunpack.c.l.b16 %v1363
          %v1949 = vunpack.c.l.b16 %v1364
          %v1950 = vunpack.c.l.b16 %v1365
          %v1951 = vunpack.c.l.b16 %v1366
          %v1952 = vunpack.c.l.b16 %v1367
          %v1953 = vpack.c.b16 %v1938, %v1937
          %v1954 = vpack.c.b16 %v1940, %v1939
          %v1955 = vpack.c.b16 %v1942, %v1941
          %v1956 = vpack.c.b16 %v1944, %v1943
          %v1957 = vpack.c.b16 %v1946, %v1945
          %v1958 = vpack.c.b16 %v1948, %v1947
          %v1959 = vpack.c.b16 %v1950, %v1949
          %v1960 = vpack.c.b16 %v1952, %v1951
          %1969 = vmatpush.bf16.msra.mxu0 %v1960
          %1970 = vmatpush.bf16.msra.mxu0 %v1959
          %1971 = vmatpush.bf16.msra.mxu0 %v1958
          %1972 = vmatpush.bf16.msra.mxu0 %v1957
          %1973 = vmatpush.bf16.msra.mxu0 %v1956
          %1974 = vmatpush.bf16.msra.mxu0 %v1955
          %1975 = vmatpush.bf16.msra.mxu0 %v1954
          %1976 = vmatpush.bf16.msra.mxu0 %v1953
          %1977 = vmatmul.bf16.gmra.mxu0 %v1913
          %v1978 = vpop.f32.mrf.mxu0
          %v1979 = vadd.f32 0.0, %v1978
          %v1980 = vpop.f32.mrf.mxu0
          %v1981 = vadd.f32 0.0, %v1980
          %1982 = vmatmul.bf16.gmra.mxu0 %v1914
          %v1983 = vpop.f32.mrf.mxu0
          %v1984 = vadd.f32 0.0, %v1983
          %v1985 = vpop.f32.mrf.mxu0
          %v1986 = vadd.f32 0.0, %v1985
          %1987 = vmatmul.bf16.gmra.mxu0 %v1915
          %v1988 = vpop.f32.mrf.mxu0
          %v1989 = vadd.f32 0.0, %v1988
          %v1990 = vpop.f32.mrf.mxu0
          %v1991 = vadd.f32 0.0, %v1990
          %1992 = vmatmul.bf16.gmra.mxu0 %v1916
          %v1993 = vpop.f32.mrf.mxu0
          %v1994 = vadd.f32 0.0, %v1993
          %v1995 = vpop.f32.mrf.mxu0
          %v1996 = vadd.f32 0.0, %v1995
          %1997 = vmatmul.bf16.gmra.mxu0 %v1917
          %v1998 = vpop.f32.mrf.mxu0
          %v1999 = vadd.f32 0.0, %v1998
          %v2000 = vpop.f32.mrf.mxu0
          %v2001 = vadd.f32 0.0, %v2000
          %2002 = vmatmul.bf16.gmra.mxu0 %v1918
          %v2003 = vpop.f32.mrf.mxu0
          %v2004 = vadd.f32 0.0, %v2003
          %v2005 = vpop.f32.mrf.mxu0
          %v2006 = vadd.f32 0.0, %v2005
          %2007 = vmatmul.bf16.gmra.mxu0 %v1919
          %v2008 = vpop.f32.mrf.mxu0
          %v2009 = vadd.f32 0.0, %v2008
          %v2010 = vpop.f32.mrf.mxu0
          %v2011 = vadd.f32 0.0, %v2010
          %2012 = vmatmul.bf16.gmra.mxu0 %v1920
          %v2013 = vpop.f32.mrf.mxu0
          %v2014 = vadd.f32 0.0, %v2013
          %v2015 = vpop.f32.mrf.mxu0
          %v2016 = vadd.f32 0.0, %v2015
          %2017 = vdwg.mxu0
          %v2018 = vadd.f32 %v1897, %v1979
          %v2019 = vadd.f32 %v1898, %v1981
          %v2020 = vadd.f32 %v1899, %v1984
          %v2021 = vadd.f32 %v1900, %v1986
          %v2022 = vadd.f32 %v1901, %v1989
          %v2023 = vadd.f32 %v1902, %v1991
          %v2024 = vadd.f32 %v1903, %v1994
          %v2025 = vadd.f32 %v1904, %v1996
          %v2026 = vadd.f32 %v1905, %v1999
          %v2027 = vadd.f32 %v1906, %v2001
          %v2028 = vadd.f32 %v1907, %v2004
          %v2029 = vadd.f32 %v1908, %v2006
          %v2030 = vadd.f32 %v1909, %v2009
          %v2031 = vadd.f32 %v1910, %v2011
          %v2032 = vadd.f32 %v1911, %v2014
          %v2033 = vadd.f32 %v1912, %v2016
          %2034 = vst [vmem:[#allocation10] sm:$0xff] %v2018
          %2035 = vst [vmem:[#allocation10 + $0x8] sm:$0xff] %v2019
          %2036 = vst [vmem:[#allocation10 + $0x10] sm:$0xff] %v2020
          %2037 = vst [vmem:[#allocation10 + $0x18] sm:$0xff] %v2021
          %2038 = vst [vmem:[#allocation10 + $0x20] sm:$0xff] %v2022
          %2039 = vst [vmem:[#allocation10 + $0x28] sm:$0xff] %v2023
          %2040 = vst [vmem:[#allocation10 + $0x30] sm:$0xff] %v2024
          %2041 = vst [vmem:[#allocation10 + $0x38] sm:$0xff] %v2025
          %2042 = vst [vmem:[#allocation10 + $0x40] sm:$0xff] %v2026
          %2043 = vst [vmem:[#allocation10 + $0x48] sm:$0xff] %v2027
          %2044 = vst [vmem:[#allocation10 + $0x50] sm:$0xff] %v2028
          %2045 = vst [vmem:[#allocation10 + $0x58] sm:$0xff] %v2029
          %2046 = vst [vmem:[#allocation10 + $0x60] sm:$0xff] %v2030
          %2047 = vst [vmem:[#allocation10 + $0x68] sm:$0xff] %v2031
          %2048 = vst [vmem:[#allocation10 + $0x70] sm:$0xff] %v2032
          %2049 = vst [vmem:[#allocation10 + $0x78] sm:$0xff] %v2033
          %2050 = vst.msk [vmem:[#allocation8] sm:$0xff] %vm1272, %v1513
          %2051 = vst.msk [vmem:[#allocation8 + $0x8] sm:$0xff] %vm1272, %v1514
          %2052 = vst.msk [vmem:[#allocation8 + $0x10] sm:$0xff] %vm1272, %v1515
          %2053 = vst.msk [vmem:[#allocation8 + $0x18] sm:$0xff] %vm1272, %v1516
          %2054 = vst.msk [vmem:[#allocation8 + $0x20] sm:$0xff] %vm1272, %v1517
          %2055 = vst.msk [vmem:[#allocation8 + $0x28] sm:$0xff] %vm1272, %v1518
          %2056 = vst.msk [vmem:[#allocation8 + $0x30] sm:$0xff] %vm1272, %v1519
          %2057 = vst.msk [vmem:[#allocation8 + $0x38] sm:$0xff] %vm1272, %v1520
          %2058 = vst.msk [vmem:[#allocation8 + $0x40] sm:$0xff] %vm1272, %v1521
          %2059 = vst.msk [vmem:[#allocation8 + $0x48] sm:$0xff] %vm1272, %v1522
          %2060 = vst.msk [vmem:[#allocation8 + $0x50] sm:$0xff] %vm1272, %v1523
          %2061 = vst.msk [vmem:[#allocation8 + $0x58] sm:$0xff] %vm1272, %v1524
          %2062 = vst.msk [vmem:[#allocation8 + $0x60] sm:$0xff] %vm1272, %v1525
          %2063 = vst.msk [vmem:[#allocation8 + $0x68] sm:$0xff] %vm1272, %v1526
          %2064 = vst.msk [vmem:[#allocation8 + $0x70] sm:$0xff] %vm1272, %v1527
          %2065 = vst.msk [vmem:[#allocation8 + $0x78] sm:$0xff] %vm1272, %v1528
        $region127: #{tpu_custom_call.1} parent=47 // loop_footer
          %s1326 = sadd.s32 1, %s1322
        $region128: #{tpu_custom_call.1} parent=47 // loop_footer_branch
          %1321 = sbr.rel target = $region124
        $region129: #{tpu_custom_call.1} parent=47 // loop_exit
          _
        %v2066 = vld [vmem:[#allocation10] sm:$0xff]
        %v2067 = vld [vmem:[#allocation10 + $0x8] sm:$0xff]
        %v2068 = vld [vmem:[#allocation10 + $0x10] sm:$0xff]
        %v2069 = vld [vmem:[#allocation10 + $0x18] sm:$0xff]
        %v2070 = vld [vmem:[#allocation10 + $0x20] sm:$0xff]
        %v2071 = vld [vmem:[#allocation10 + $0x28] sm:$0xff]
        %v2072 = vld [vmem:[#allocation10 + $0x30] sm:$0xff]
        %v2073 = vld [vmem:[#allocation10 + $0x38] sm:$0xff]
        %v2074 = vld [vmem:[#allocation10 + $0x40] sm:$0xff]
        %v2075 = vld [vmem:[#allocation10 + $0x48] sm:$0xff]
        %v2076 = vld [vmem:[#allocation10 + $0x50] sm:$0xff]
        %v2077 = vld [vmem:[#allocation10 + $0x58] sm:$0xff]
        %v2078 = vld [vmem:[#allocation10 + $0x60] sm:$0xff]
        %v2079 = vld [vmem:[#allocation10 + $0x68] sm:$0xff]
        %v2080 = vld [vmem:[#allocation10 + $0x70] sm:$0xff]
        %v2081 = vld [vmem:[#allocation10 + $0x78] sm:$0xff]
        %v2082 = vld [vmem:[#allocation9] sm:$0xff]
        %v2083 = vld [vmem:[#allocation9 + $0x8] sm:$0xff]
        %v2084 = vld [vmem:[#allocation9 + $0x10] sm:$0xff]
        %v2085 = vld [vmem:[#allocation9 + $0x18] sm:$0xff]
        %v2086 = vld [vmem:[#allocation9 + $0x20] sm:$0xff]
        %v2087 = vld [vmem:[#allocation9 + $0x28] sm:$0xff]
        %v2088 = vld [vmem:[#allocation9 + $0x30] sm:$0xff]
        %v2089 = vld [vmem:[#allocation9 + $0x38] sm:$0xff]
        %v2090 = vld [vmem:[#allocation9 + $0x40] sm:$0xff]
        %v2091 = vld [vmem:[#allocation9 + $0x48] sm:$0xff]
        %v2092 = vld [vmem:[#allocation9 + $0x50] sm:$0xff]
        %v2093 = vld [vmem:[#allocation9 + $0x58] sm:$0xff]
        %v2094 = vld [vmem:[#allocation9 + $0x60] sm:$0xff]
        %v2095 = vld [vmem:[#allocation9 + $0x68] sm:$0xff]
        %v2096 = vld [vmem:[#allocation9 + $0x70] sm:$0xff]
        %v2097 = vld [vmem:[#allocation9 + $0x78] sm:$0xff]
        %v2098 = vrcp.pop %v2082
        %v2099 = vrcp.pop %v2083
        %v2100 = vrcp.pop %v2084
        %v2101 = vrcp.pop %v2085
        %v2102 = vrcp.pop %v2086
        %v2103 = vrcp.pop %v2087
        %v2104 = vrcp.pop %v2088
        %v2105 = vrcp.pop %v2089
        %v2106 = vrcp.pop %v2090
        %v2107 = vrcp.pop %v2091
        %v2108 = vrcp.pop %v2092
        %v2109 = vrcp.pop %v2093
        %v2110 = vrcp.pop %v2094
        %v2111 = vrcp.pop %v2095
        %v2112 = vrcp.pop %v2096
        %v2113 = vrcp.pop %v2097
        %2115 = vset.pattern.permute.xlu0 0
        %2116 = vperm.xlu0 %2115, %v2098
        %v2117 = vpop.permute.xlu0 %2116
        %2120 = vset.pattern.permute.xlu0 0
        %2121 = vperm.xlu0 %2120, %v2099
        %v2122 = vpop.permute.xlu0 %2121
        %2125 = vset.pattern.permute.xlu0 0
        %2126 = vperm.xlu0 %2125, %v2100
        %v2127 = vpop.permute.xlu0 %2126
        %2130 = vset.pattern.permute.xlu0 0
        %2131 = vperm.xlu0 %2130, %v2101
        %v2132 = vpop.permute.xlu0 %2131
        %2135 = vset.pattern.permute.xlu0 0
        %2136 = vperm.xlu0 %2135, %v2102
        %v2137 = vpop.permute.xlu0 %2136
        %2140 = vset.pattern.permute.xlu0 0
        %2141 = vperm.xlu0 %2140, %v2103
        %v2142 = vpop.permute.xlu0 %2141
        %2145 = vset.pattern.permute.xlu0 0
        %2146 = vperm.xlu0 %2145, %v2104
        %v2147 = vpop.permute.xlu0 %2146
        %2150 = vset.pattern.permute.xlu0 0
        %2151 = vperm.xlu0 %2150, %v2105
        %v2152 = vpop.permute.xlu0 %2151
        %2155 = vset.pattern.permute.xlu0 0
        %2156 = vperm.xlu0 %2155, %v2106
        %v2157 = vpop.permute.xlu0 %2156
        %2160 = vset.pattern.permute.xlu0 0
        %2161 = vperm.xlu0 %2160, %v2107
        %v2162 = vpop.permute.xlu0 %2161
        %2165 = vset.pattern.permute.xlu0 0
        %2166 = vperm.xlu0 %2165, %v2108
        %v2167 = vpop.permute.xlu0 %2166
        %2170 = vset.pattern.permute.xlu0 0
        %2171 = vperm.xlu0 %2170, %v2109
        %v2172 = vpop.permute.xlu0 %2171
        %2175 = vset.pattern.permute.xlu0 0
        %2176 = vperm.xlu0 %2175, %v2110
        %v2177 = vpop.permute.xlu0 %2176
        %2180 = vset.pattern.permute.xlu0 0
        %2181 = vperm.xlu0 %2180, %v2111
        %v2182 = vpop.permute.xlu0 %2181
        %2185 = vset.pattern.permute.xlu0 0
        %2186 = vperm.xlu0 %2185, %v2112
        %v2187 = vpop.permute.xlu0 %2186
        %2190 = vset.pattern.permute.xlu0 0
        %2191 = vperm.xlu0 %2190, %v2113
        %v2192 = vpop.permute.xlu0 %2191
        %v2194 = vmul.f32 %v2066, %v2117
        %v2195 = vmul.f32 %v2067, %v2122
        %v2196 = vmul.f32 %v2068, %v2127
        %v2197 = vmul.f32 %v2069, %v2132
        %v2198 = vmul.f32 %v2070, %v2137
        %v2199 = vmul.f32 %v2071, %v2142
        %v2200 = vmul.f32 %v2072, %v2147
        %v2201 = vmul.f32 %v2073, %v2152
        %v2202 = vmul.f32 %v2074, %v2157
        %v2203 = vmul.f32 %v2075, %v2162
        %v2204 = vmul.f32 %v2076, %v2167
        %v2205 = vmul.f32 %v2077, %v2172
        %v2206 = vmul.f32 %v2078, %v2177
        %v2207 = vmul.f32 %v2079, %v2182
        %v2208 = vmul.f32 %v2080, %v2187
        %v2209 = vmul.f32 %v2081, %v2192
        %v2210 = vld [vmem:[#allocation14 + $0x5] sm:$0x1]
        %v2211 = vpack.c.bf16 %v2195, %v2194
        %v2212 = vpack.c.bf16 %v2197, %v2196
        %v2213 = vpack.c.bf16 %v2199, %v2198
        %v2214 = vpack.c.bf16 %v2201, %v2200
        %v2215 = vpack.c.bf16 %v2203, %v2202
        %v2216 = vpack.c.bf16 %v2205, %v2204
        %v2217 = vpack.c.bf16 %v2207, %v2206
        %v2218 = vpack.c.bf16 %v2209, %v2208
        %v2219 = vld [vmem:[#allocation22] sm:$0xf]
        %v2220 = vld [vmem:[#allocation22 + $0x4] sm:$0xf]
        %v2221 = vld [vmem:[#allocation22 + $0x8] sm:$0xf]
        %v2222 = vld [vmem:[#allocation22 + $0xc] sm:$0xf]
        %v2223 = vld [vmem:[#allocation22 + $0x10] sm:$0xf]
        %v2224 = vld [vmem:[#allocation22 + $0x14] sm:$0xf]
        %v2225 = vld [vmem:[#allocation22 + $0x18] sm:$0xf]
        %v2226 = vld [vmem:[#allocation22 + $0x1c] sm:$0xf]
        %v2227 = vld [vmem:[#allocation22 + $0x20] sm:$0xf]
        %v2228 = vld [vmem:[#allocation22 + $0x24] sm:$0xf]
        %v2229 = vld [vmem:[#allocation22 + $0x28] sm:$0xf]
        %v2230 = vld [vmem:[#allocation22 + $0x2c] sm:$0xf]
        %v2231 = vld [vmem:[#allocation22 + $0x30] sm:$0xf]
        %v2232 = vld [vmem:[#allocation22 + $0x34] sm:$0xf]
        %v2233 = vld [vmem:[#allocation22 + $0x38] sm:$0xf]
        %v2234 = vld [vmem:[#allocation22 + $0x3c] sm:$0xf]
        %v2235 = vperm.slane %v2210, 0
        %v2252 = vunpack.c.l.b16 %v2219
        %v2253 = vunpack.c.l.b16 %v2220
        %v2254 = vunpack.c.l.b16 %v2221
        %v2255 = vunpack.c.l.b16 %v2222
        %v2256 = vunpack.c.l.b16 %v2223
        %v2257 = vunpack.c.l.b16 %v2224
        %v2258 = vunpack.c.l.b16 %v2225
        %v2259 = vunpack.c.l.b16 %v2226
        %v2260 = vunpack.c.l.b16 %v2227
        %v2261 = vunpack.c.l.b16 %v2228
        %v2262 = vunpack.c.l.b16 %v2229
        %v2263 = vunpack.c.l.b16 %v2230
        %v2264 = vunpack.c.l.b16 %v2231
        %v2265 = vunpack.c.l.b16 %v2232
        %v2266 = vunpack.c.l.b16 %v2233
        %v2267 = vunpack.c.l.b16 %v2234
        %v2268 = vpack.c.b16 %v2253, %v2252
        %v2269 = vpack.c.b16 %v2255, %v2254
        %v2270 = vpack.c.b16 %v2257, %v2256
        %v2271 = vpack.c.b16 %v2259, %v2258
        %v2272 = vpack.c.b16 %v2261, %v2260
        %v2273 = vpack.c.b16 %v2263, %v2262
        %v2274 = vpack.c.b16 %v2265, %v2264
        %v2275 = vpack.c.b16 %v2267, %v2266
        %2284 = vmatpush.bf16.msra.mxu0 %v2275
        %2285 = vmatpush.bf16.msra.mxu0 %v2274
        %2286 = vmatpush.bf16.msra.mxu0 %v2273
        %2287 = vmatpush.bf16.msra.mxu0 %v2272
        %2288 = vmatpush.bf16.msra.mxu0 %v2271
        %2289 = vmatpush.bf16.msra.mxu0 %v2270
        %2290 = vmatpush.bf16.msra.mxu0 %v2269
        %2291 = vmatpush.bf16.msra.mxu0 %v2268
        %2292 = vmatmul.bf16.gmra.mxu0 %v2211
        %v2293 = vpop.f32.mrf.mxu0
        %v2294 = vadd.f32 %v2235, %v2293
        %v2295 = vpop.f32.mrf.mxu0
        %v2296 = vadd.f32 %v2235, %v2295
        %2297 = vmatmul.bf16.gmra.mxu0 %v2212
        %v2298 = vpop.f32.mrf.mxu0
        %v2299 = vadd.f32 %v2235, %v2298
        %v2300 = vpop.f32.mrf.mxu0
        %v2301 = vadd.f32 %v2235, %v2300
        %2302 = vmatmul.bf16.gmra.mxu0 %v2213
        %v2303 = vpop.f32.mrf.mxu0
        %v2304 = vadd.f32 %v2235, %v2303
        %v2305 = vpop.f32.mrf.mxu0
        %v2306 = vadd.f32 %v2235, %v2305
        %2307 = vmatmul.bf16.gmra.mxu0 %v2214
        %v2308 = vpop.f32.mrf.mxu0
        %v2309 = vadd.f32 %v2235, %v2308
        %v2310 = vpop.f32.mrf.mxu0
        %v2311 = vadd.f32 %v2235, %v2310
        %2312 = vmatmul.bf16.gmra.mxu0 %v2215
        %v2313 = vpop.f32.mrf.mxu0
        %v2314 = vadd.f32 %v2235, %v2313
        %v2315 = vpop.f32.mrf.mxu0
        %v2316 = vadd.f32 %v2235, %v2315
        %2317 = vmatmul.bf16.gmra.mxu0 %v2216
        %v2318 = vpop.f32.mrf.mxu0
        %v2319 = vadd.f32 %v2235, %v2318
        %v2320 = vpop.f32.mrf.mxu0
        %v2321 = vadd.f32 %v2235, %v2320
        %2322 = vmatmul.bf16.gmra.mxu0 %v2217
        %v2323 = vpop.f32.mrf.mxu0
        %v2324 = vadd.f32 %v2235, %v2323
        %v2325 = vpop.f32.mrf.mxu0
        %v2326 = vadd.f32 %v2235, %v2325
        %2327 = vmatmul.bf16.gmra.mxu0 %v2218
        %v2328 = vpop.f32.mrf.mxu0
        %v2329 = vadd.f32 %v2235, %v2328
        %v2330 = vpop.f32.mrf.mxu0
        %v2331 = vadd.f32 %v2235, %v2330
        %2332 = vdwg.mxu0
        %v2333 = vld [vmem:[%s353] sm:$0xff]
        %v2334 = vld [vmem:[%s353 + $0x8] sm:$0xff]
        %v2335 = vld [vmem:[%s353 + $0x10] sm:$0xff]
        %v2336 = vld [vmem:[%s353 + $0x18] sm:$0xff]
        %v2337 = vld [vmem:[%s353 + $0x20] sm:$0xff]
        %v2338 = vld [vmem:[%s353 + $0x28] sm:$0xff]
        %v2339 = vld [vmem:[%s353 + $0x30] sm:$0xff]
        %v2340 = vld [vmem:[%s353 + $0x38] sm:$0xff]
        %v2341 = vld [vmem:[%s353 + $0x40] sm:$0xff]
        %v2342 = vld [vmem:[%s353 + $0x48] sm:$0xff]
        %v2343 = vld [vmem:[%s353 + $0x50] sm:$0xff]
        %v2344 = vld [vmem:[%s353 + $0x58] sm:$0xff]
        %v2345 = vld [vmem:[%s353 + $0x60] sm:$0xff]
        %v2346 = vld [vmem:[%s353 + $0x68] sm:$0xff]
        %v2347 = vld [vmem:[%s353 + $0x70] sm:$0xff]
        %v2348 = vld [vmem:[%s353 + $0x78] sm:$0xff]
        %v2349 = vadd.f32 %v2333, %v2294
        %v2350 = vadd.f32 %v2334, %v2296
        %v2351 = vadd.f32 %v2335, %v2299
        %v2352 = vadd.f32 %v2336, %v2301
        %v2353 = vadd.f32 %v2337, %v2304
        %v2354 = vadd.f32 %v2338, %v2306
        %v2355 = vadd.f32 %v2339, %v2309
        %v2356 = vadd.f32 %v2340, %v2311
        %v2357 = vadd.f32 %v2341, %v2314
        %v2358 = vadd.f32 %v2342, %v2316
        %v2359 = vadd.f32 %v2343, %v2319
        %v2360 = vadd.f32 %v2344, %v2321
        %v2361 = vadd.f32 %v2345, %v2324
        %v2362 = vadd.f32 %v2346, %v2326
        %v2363 = vadd.f32 %v2347, %v2329
        %v2364 = vadd.f32 %v2348, %v2331
        %2365 = vst [vmem:[%s414] sm:$0xff] %v2349
        %2366 = vst [vmem:[%s414 + $0x8] sm:$0xff] %v2350
        %2367 = vst [vmem:[%s414 + $0x10] sm:$0xff] %v2351
        %2368 = vst [vmem:[%s414 + $0x18] sm:$0xff] %v2352
        %2369 = vst [vmem:[%s414 + $0x20] sm:$0xff] %v2353
        %2370 = vst [vmem:[%s414 + $0x28] sm:$0xff] %v2354
        %2371 = vst [vmem:[%s414 + $0x30] sm:$0xff] %v2355
        %2372 = vst [vmem:[%s414 + $0x38] sm:$0xff] %v2356
        %2373 = vst [vmem:[%s414 + $0x40] sm:$0xff] %v2357
        %2374 = vst [vmem:[%s414 + $0x48] sm:$0xff] %v2358
        %2375 = vst [vmem:[%s414 + $0x50] sm:$0xff] %v2359
        %2376 = vst [vmem:[%s414 + $0x58] sm:$0xff] %v2360
        %2377 = vst [vmem:[%s414 + $0x60] sm:$0xff] %v2361
        %2378 = vst [vmem:[%s414 + $0x68] sm:$0xff] %v2362
        %2379 = vst [vmem:[%s414 + $0x70] sm:$0xff] %v2363
        %2380 = vst [vmem:[%s414 + $0x78] sm:$0xff] %v2364
        %s2381 = sand.u32 %s204, 1
        %s2382 = scalar_lea.sflag [#allocation13], %s2381
        %s2383 = sand.u32 %s204, 1
        %s2384 = smul.addr %s2383, 128
        %s2385 = scalar_lea.vmem [#allocation23], %s2384
        // Predicated region
        $region130: #{tpu_custom_call.1} parent=47 // pred_check
          %p2386 = pneg %p214
        $region131: #{tpu_custom_call.1} parent=47 // pred_check_branch
          %2388 = sbr.rel (%p2386) target = $region133
        $region132: #{tpu_custom_call.1} parent=47 // pred_region
          %s2389 = smul.u32 16, %s33
          %2391 = vsyncadd %s2382, 0
          %s2392 = smul.addr %s32, 32
          %s2393 = sadd.s32 %s2389, %s2392
          %s2394 = smul.addr %s2393, 8
          %s2395 = scalar_lea.hbm %s8, %s2394
          %s2396 = sshll.u32 %s2385, 4
          %s2397 = int_to_ptr.vmem [resolvable:$true] %s2396
          %s2398 = sshll.u32 %s2395, 4
          %s2399 = int_to_ptr.hbm [resolvable:$true] %s2398
          %2404 = dma.vmem_to_hbm [thread:$0]  %s2397, 2048, %s2399, %s2382, 128, 128, 8
        $region133: #{tpu_custom_call.1} parent=47 // pred_fallthru
          _
      $region48: #{tpu_custom_call.1} parent=5 // pred_fallthru
        _
      %p2405 = scmp.le.s32.totalorder 2, %s23
      // Predicated region
      $region134: #{tpu_custom_call.1} parent=5 // pred_check
        %p2406 = pneg %p2405
      $region135: #{tpu_custom_call.1} parent=5 // pred_check_branch
        %2408 = sbr.rel (%p2406) target = $region137
      $region136: #{tpu_custom_call.1} parent=5 // pred_region
        %s2409 = ssub.s32 %s23, 2
        // Predicated region
        $region138: #{tpu_custom_call.1} parent=136 // pred_check
          %p2410 = pneg %p220
        $region139: #{tpu_custom_call.1} parent=136 // pred_check_branch
          %2412 = sbr.rel (%p2410) target = $region141
        $region140: #{tpu_custom_call.1} parent=136 // pred_region
          %s2413 = sand.u32 %s205, 1
          %s2414 = scalar_lea.sflag [#allocation13], %s2413
          %s2415 = sand.u32 %s205, 1
          %s2416 = smul.addr %s2415, 128
          %s2417 = scalar_lea.vmem [#allocation23], %s2416
          %2419 = dma.done %s2414, 2048
        $region141: #{tpu_custom_call.1} parent=136 // pred_fallthru
          _
      $region137: #{tpu_custom_call.1} parent=5 // pred_fallthru
        _
    $region6: #{tpu_custom_call.1} parent=1 // loop_footer
      %s27 = sadd.s32 1, %s23
    $region7: #{tpu_custom_call.1} parent=1 // loop_footer_branch
      %22 = sbr.rel target = $region3
    $region8: #{tpu_custom_call.1} parent=1 // loop_exit
      _
    %2420 = vsyncpa [#allocation12], 1
    %s2421 = scalar_lea.sflag [#allocation12], 1
    %2422 = vsyncpa %s2421, 1
    %2423 = vsyncpa [#allocation15], 1
    %2424 = vsyncpa [#allocation18], 1
    %2425 = vsyncpa [#allocation21], 1
    %2426 = vsyncpa [#allocation13], 1
    %s2427 = scalar_lea.sflag [#allocation13], 1
    %2428 = vsyncpa %s2427, 1
  %2429 = vsyncmov [#allocation7]
  %s2430 = vpop.sfrf %2429
  %p2431 = scmp.eq.s32.totalorder %s2430, 0
  %p2432 = pneg %p2431
  %2434 = shalt.err (%p2432)
  %s2435 = scalar_lea.sflag [#allocation7], 1
  %2436 = vsyncmov %s2435
  %s2437 = vpop.sfrf %2436
  %p2438 = scmp.eq.s32.totalorder %s2437, 0
  %p2439 = pneg %p2438
  %2441 = shalt.err (%p2439)

// kernel: tpu_custom_call.1
$region0: #{tpu_custom_call.1}
  #allocation0 [shape = 'u32[]', space=smem, size = 0x4, offset = 0x4, fixed_abs, tag = 'smem constant byte address 0x4 - core index']
  #allocation1 [shape = 'u32[72,128]{1,0:T(1,128)}', space=vmem, size = 0x9000, scoped, tag = 'internal scratch']
  #allocation2 [shape = 'bf16[128,256]{1,0:T(8,128)(2,1)}', space=vmem, size = 0x10000, scoped, tag = 'scratch operand']
  #allocation3 [shape = 'bf16[256,128]{1,0:T(8,128)(2,1)}', space=vmem, size = 0x10000, scoped, tag = 'scratch operand']
  #allocation4 [shape = 'f32[1,128]{1,0:T(1,128)}', space=vmem, size = 0x200, scoped, tag = 'scratch operand']
  #allocation5 [shape = 'f32[1,128]{1,0:T(1,128)}', space=vmem, size = 0x200, scoped, tag = 'scratch operand']
  #allocation6 [shape = 'f32[2,128,128]{2,1,0:T(8,128)}', space=vmem, size = 0x20000, scoped, tag = 'scratch operand']
  #allocation7 [shape = 's32[2]{0}', space=sflag, size = 0x8, scoped, tag = 'scratch operand']
  #allocation8 [shape = 'f32[128,1]{1,0:T(8,128)}', space=vmem, size = 0x10000, scoped, tag = 'scratch operand']
  #allocation9 [shape = 'f32[128,1]{1,0:T(8,128)}', space=vmem, size = 0x10000, scoped, tag = 'scratch operand']
  #allocation10 [shape = 'f32[128,128]{1,0:T(8,128)}', space=vmem, size = 0x10000, scoped, tag = 'scratch operand']
  #allocation24 [shape = 's32[]', space=sflag, size = 0x4, offset = 0, fixed_abs, tag = 'sflag constant byte address 0x0 - dummy sync flag']
  #allocation25 [shape = 's32[]', space=sflag, size = 0x4, offset = 0, fixed_abs, tag = 'sflag constant byte address 0x0 - dummy sync flag']
  #allocation26 [shape = 'u32[]', space=smem, size = 0x4, offset = 0x44, fixed_abs, tag = 'smem constant byte address 0x44 - assertion arg 0']
  #allocation27 [shape = 'u32[]', space=smem, size = 0x4, offset = 0x48, fixed_abs, tag = 'smem constant byte address 0x48 - assertion arg 1']
  #allocation28 [shape = 's32[]', space=sflag, size = 0x4, offset = 0, fixed_abs, tag = 'sflag constant byte address 0x0 - dummy sync flag']
  #allocation29 [shape = 's32[]', space=sflag, size = 0x4, offset = 0, fixed_abs, tag = 'sflag constant byte address 0x0 - dummy sync flag']
  #allocation30 [shape = 's32[]', space=sflag, size = 0x4, offset = 0, fixed_abs, tag = 'sflag constant byte address 0x0 - dummy sync flag']
  #allocation31 [shape = 's32[]', space=sflag, size = 0x4, offset = 0, fixed_abs, tag = 'sflag constant byte address 0x0 - dummy sync flag']
  #allocation32 [shape = 's32[]', space=sflag, size = 0x4, offset = 0, fixed_abs, tag = 'sflag constant byte address 0x0 - dummy sync flag']
  #allocation33 [shape = 's32[]', space=sflag, size = 0x4, offset = 0, fixed_abs, tag = 'sflag constant byte address 0x0 - dummy sync flag']
  %s0 = inlined_call_operand.hbm [shape: f32[2,256,128], index: 0, kind: input, shape index: {}]
  %s1 = inlined_call_operand.hbm [shape: f32[2,256,128], index: 1, kind: input, shape index: {}]
  %s2 = inlined_call_operand.hbm [shape: f32[8,128], index: 2, kind: input, shape index: {}]
  %s3 = inlined_call_operand.hbm [shape: f32[128,128], index: 3, kind: input, shape index: {}]
  %s4 = inlined_call_operand.hbm [shape: bf16[128,128], index: 4, kind: input, shape index: {}]
  %s5 = inlined_call_operand.hbm [shape: bf16[128,128], index: 5, kind: input, shape index: {}]
  %s6 = inlined_call_operand.hbm [shape: bf16[128,128], index: 6, kind: input, shape index: {}]
  %s7 = inlined_call_operand.hbm [shape: bf16[128,128], index: 7, kind: input, shape index: {}]
  %s8 = inlined_call_operand.hbm [shape: f32[2,256,128], index: 8, kind: output, shape index: {}]
  %s9 = sld [smem:[#allocation0]]
  $region142: #{tpu_custom_call.1} parent=0
    _
  %s11 = ssub.s32 1, %s9
  %s12 = scalar_select 0, %s11, %s9
  $region1: #{tpu_custom_call.1} parent=0
    #allocation11 [shape = 'u8[131072]{0}', space=vmem, size = 0x20000, scoped, tag = 'input window, operand 1']
    #allocation12 [shape = 's32[2]{0}', space=sflag, size = 0x8, scoped, tag = 'scoped memory for tpu_custom_call.1']
    #allocation13 [shape = 's32[2]{0}', space=sflag, size = 0x8, scoped, tag = 'scoped memory for tpu_custom_call.1']
    #allocation14 [shape = 'u8[4096]{0}', space=vmem, size = 0x1000, scoped, tag = 'input window, operand 2, single buffered']
    #allocation15 [shape = 's32[1]{0}', space=sflag, size = 0x4, scoped, tag = 'scoped memory for tpu_custom_call.1']
    #allocation16 [shape = 'u8[65536]{0}', space=vmem, size = 0x10000, scoped, tag = 'input window, operand 3, single buffered']
    #allocation17 [shape = 'u8[32768]{0}', space=vmem, size = 0x8000, scoped, tag = 'input window, operand 4, single buffered']
    #allocation18 [shape = 's32[1]{0}', space=sflag, size = 0x4, scoped, tag = 'scoped memory for tpu_custom_call.1']
    #allocation19 [shape = 'u8[32768]{0}', space=vmem, size = 0x8000, scoped, tag = 'input window, operand 5, single buffered']
    #allocation20 [shape = 'u8[32768]{0}', space=vmem, size = 0x8000, scoped, tag = 'input window, operand 6, single buffered']
    #allocation21 [shape = 's32[1]{0}', space=sflag, size = 0x4, scoped, tag = 'scoped memory for tpu_custom_call.1']
    #allocation22 [shape = 'u8[32768]{0}', space=vmem, size = 0x8000, scoped, tag = 'input window, operand 7, single buffered']
    #allocation23 [shape = 'u8[131072]{0}', space=vmem, size = 0x20000, scoped, tag = 'output window, operand 0']
    %13 = vsyncpa [#allocation12], 0
    %s14 = scalar_lea.sflag [#allocation12], 1
    %15 = vsyncpa %s14, 0
    %16 = vsyncpa [#allocation15], 0
    %17 = vsyncpa [#allocation18], 0
    %18 = vsyncpa [#allocation21], 0
    %19 = vsyncpa [#allocation13], 0
    %s20 = scalar_lea.sflag [#allocation13], 1
    %21 = vsyncpa %s20, 0
    loop: start=0, step=1, limit=6
    $region2: #{tpu_custom_call.1} parent=1 // loop_pre_header
      _
    $region3: #{tpu_custom_call.1} parent=1 // loop_header
      %s23 = sphi 0, %s27
      %p24 = scmp.ge.s32.totalorder %s23, 6
      %s30 = sphi 0, %s42
      %s31 = sphi 0, %s38
      %s32 = sphi 0, %s30
      %s33 = sphi 0, %s31
      %s34 = sphi 0, %s32
      %s35 = sphi 0, %s33
      %s47 = sphi 0, %s49
      %s50 = sphi 0, %s47
      %s51 = sphi 0, %s50
      %s67 = sphi 0, %s51
      %s71 = sphi 0, %s71
      %s73 = sphi 0, %s71
      %s74 = sphi 0, %s73
      %s88 = sphi 0, %s74
      %s92 = sphi 0, %s92
      %s94 = sphi 0, %s92
      %s95 = sphi 0, %s94
      %s109 = sphi 0, %s95
      %s113 = sphi 0, %s113
      %s115 = sphi 0, %s113
      %s116 = sphi 0, %s115
      %s130 = sphi 0, %s116
      %s134 = sphi 0, %s134
      %s136 = sphi 0, %s134
      %s137 = sphi 0, %s136
      %s151 = sphi 0, %s137
      %s155 = sphi 0, %s155
      %s157 = sphi 0, %s155
      %s158 = sphi 0, %s157
      %s172 = sphi 0, %s158
      %s176 = sphi 0, %s176
      %s178 = sphi 0, %s176
      %s179 = sphi 0, %s178
      %s193 = sphi 0, %s179
      %s201 = sphi 0, %s203
      %s204 = sphi 0, %s201
      %s205 = sphi 0, %s204
      %s221 = sphi 0, %s205
    $region4: #{tpu_custom_call.1} parent=1 // loop_header_branch
      %26 = sbr.rel (%p24) target = $region8
    $region5: #{tpu_custom_call.1} parent=1 // loop_body
      %s28 = ssub.s32 %s23, 1
      %s29 = ssub.s32 %s23, 2
      %s36 = sadd.s32 1, %s31
      %p37 = scmp.ge.s32.totalorder %s36, 2
      %s38 = scalar_select %p37, 0, %s36
      %s39 = sadd.s32 1, %s30
      %s40 = scalar_select %p37, %s39, %s30
      %p41 = scmp.ge.s32.totalorder %s40, 2
      %s42 = scalar_select %p41, 0, %s40
      %s43 = ssub.s32 %s30, %s42
      %s44 = ssub.s32 %s31, %s38
      %s45 = sor.u32 %s43, %s44
      %p46 = scmp.eq.s32.totalorder %s45, 0
      %s48 = sadd.s32 %s47, 1
      %s49 = scalar_select %p46, %s47, %s48
      %p52 = pneg %p46
      %p53 = scmp.eq.s32.totalorder %s23, 3
      %p54 = por %p52, %p53
      %p55 = scmp.ne.s32.totalorder %s47, %s50
      %p56 = scmp.eq.s32.totalorder %s23, 0
      %p57 = por %p55, %p56
      %p58 = scmp.ne.s32.totalorder %s47, %s50
      %p59 = scmp.eq.s32.totalorder %s28, 3
      %p60 = por %p58, %p59
      %p61 = scmp.ne.s32.totalorder %s50, %s51
      %p62 = scmp.eq.s32.totalorder %s28, 0
      %p63 = por %p61, %p62
      %p64 = scmp.ne.s32.totalorder %s50, %s51
      %p65 = scmp.eq.s32.totalorder %s29, 3
      %p66 = por %p64, %p65
      %p68 = scmp.ne.s32.totalorder %s51, %s67
      %p69 = scmp.eq.s32.totalorder %s29, 0
      %p70 = por %p68, %p69
      %s72 = sadd.s32 %s71, 1
      %p75 = scmp.eq.s32.totalorder %s23, 3
      %p76 = scmp.ne.s32.totalorder %s71, %s73
      %p77 = scmp.eq.s32.totalorder %s23, 0
      %p78 = por %p76, %p77
      %p79 = scmp.ne.s32.totalorder %s71, %s73
      %p80 = scmp.eq.s32.totalorder %s28, 3
      %p81 = por %p79, %p80
      %p82 = scmp.ne.s32.totalorder %s73, %s74
      %p83 = scmp.eq.s32.totalorder %s28, 0
      %p84 = por %p82, %p83
      %p85 = scmp.ne.s32.totalorder %s73, %s74
      %p86 = scmp.eq.s32.totalorder %s29, 3
      %p87 = por %p85, %p86
      %p89 = scmp.ne.s32.totalorder %s74, %s88
      %p90 = scmp.eq.s32.totalorder %s29, 0
      %p91 = por %p89, %p90
      %s93 = sadd.s32 %s92, 1
      %p96 = scmp.eq.s32.totalorder %s23, 3
      %p97 = scmp.ne.s32.totalorder %s92, %s94
      %p98 = scmp.eq.s32.totalorder %s23, 0
      %p99 = por %p97, %p98
      %p100 = scmp.ne.s32.totalorder %s92, %s94
      %p101 = scmp.eq.s32.totalorder %s28, 3
      %p102 = por %p100, %p101
      %p103 = scmp.ne.s32.totalorder %s94, %s95
      %p104 = scmp.eq.s32.totalorder %s28, 0
      %p105 = por %p103, %p104
      %p106 = scmp.ne.s32.totalorder %s94, %s95
      %p107 = scmp.eq.s32.totalorder %s29, 3
      %p108 = por %p106, %p107
      %p110 = scmp.ne.s32.totalorder %s95, %s109
      %p111 = scmp.eq.s32.totalorder %s29, 0
      %p112 = por %p110, %p111
      %s114 = sadd.s32 %s113, 1
      %p117 = scmp.eq.s32.totalorder %s23, 3
      %p118 = scmp.ne.s32.totalorder %s113, %s115
      %p119 = scmp.eq.s32.totalorder %s23, 0
      %p120 = por %p118, %p119
      %p121 = scmp.ne.s32.totalorder %s113, %s115
      %p122 = scmp.eq.s32.totalorder %s28, 3
      %p123 = por %p121, %p122
      %p124 = scmp.ne.s32.totalorder %s115, %s116
      %p125 = scmp.eq.s32.totalorder %s28, 0
      %p126 = por %p124, %p125
      %p127 = scmp.ne.s32.totalorder %s115, %s116
      %p128 = scmp.eq.s32.totalorder %s29, 3
      %p129 = por %p127, %p128
      %p131 = scmp.ne.s32.totalorder %s116, %s130
      %p132 = scmp.eq.s32.totalorder %s29, 0
      %p133 = por %p131, %p132
      %s135 = sadd.s32 %s134, 1
      %p138 = scmp.eq.s32.totalorder %s23, 3
      %p139 = scmp.ne.s32.totalorder %s134, %s136
      %p140 = scmp.eq.s32.totalorder %s23, 0
      %p141 = por %p139, %p140
      %p142 = scmp.ne.s32.totalorder %s134, %s136
      %p143 = scmp.eq.s32.totalorder %s28, 3
      %p144 = por %p142, %p143
      %p145 = scmp.ne.s32.totalorder %s136, %s137
      %p146 = scmp.eq.s32.totalorder %s28, 0
      %p147 = por %p145, %p146
      %p148 = scmp.ne.s32.totalorder %s136, %s137
      %p149 = scmp.eq.s32.totalorder %s29, 3
      %p150 = por %p148, %p149
      %p152 = scmp.ne.s32.totalorder %s137, %s151
      %p153 = scmp.eq.s32.totalorder %s29, 0
      %p154 = por %p152, %p153
      %s156 = sadd.s32 %s155, 1
      %p159 = scmp.eq.s32.totalorder %s23, 3
      %p160 = scmp.ne.s32.totalorder %s155, %s157
      %p161 = scmp.eq.s32.totalorder %s23, 0
      %p162 = por %p160, %p161
      %p163 = scmp.ne.s32.totalorder %s155, %s157
      %p164 = scmp.eq.s32.totalorder %s28, 3
      %p165 = por %p163, %p164
      %p166 = scmp.ne.s32.totalorder %s157, %s158
      %p167 = scmp.eq.s32.totalorder %s28, 0
      %p168 = por %p166, %p167
      %p169 = scmp.ne.s32.totalorder %s157, %s158
      %p170 = scmp.eq.s32.totalorder %s29, 3
      %p171 = por %p169, %p170
      %p173 = scmp.ne.s32.totalorder %s158, %s172
      %p174 = scmp.eq.s32.totalorder %s29, 0
      %p175 = por %p173, %p174
      %s177 = sadd.s32 %s176, 1
      %p180 = scmp.eq.s32.totalorder %s23, 3
      %p181 = scmp.ne.s32.totalorder %s176, %s178
      %p182 = scmp.eq.s32.totalorder %s23, 0
      %p183 = por %p181, %p182
      %p184 = scmp.ne.s32.totalorder %s176, %s178
      %p185 = scmp.eq.s32.totalorder %s28, 3
      %p186 = por %p184, %p185
      %p187 = scmp.ne.s32.totalorder %s178, %s179
      %p188 = scmp.eq.s32.totalorder %s28, 0
      %p189 = por %p187, %p188
      %p190 = scmp.ne.s32.totalorder %s178, %s179
      %p191 = scmp.eq.s32.totalorder %s29, 3
      %p192 = por %p190, %p191
      %p194 = scmp.ne.s32.totalorder %s179, %s193
      %p195 = scmp.eq.s32.totalorder %s29, 0
      %p196 = por %p194, %p195
      %s197 = ssub.s32 %s30, %s42
      %s198 = ssub.s32 %s31, %s38
      %s199 = sor.u32 %s197, %s198
      %p200 = scmp.eq.s32.totalorder %s199, 0
      %s202 = sadd.s32 %s201, 1
      %s203 = scalar_select %p200, %s201, %s202
      %p206 = pneg %p200
      %p207 = scmp.eq.s32.totalorder %s23, 3
      %p208 = por %p206, %p207
      %p209 = scmp.ne.s32.totalorder %s201, %s204
      %p210 = scmp.eq.s32.totalorder %s23, 0
      %p211 = por %p209, %p210
      %p212 = scmp.ne.s32.totalorder %s201, %s204
      %p213 = scmp.eq.s32.totalorder %s28, 3
      %p214 = por %p212, %p213
      %p215 = scmp.ne.s32.totalorder %s204, %s205
      %p216 = scmp.eq.s32.totalorder %s28, 0
      %p217 = por %p215, %p216
      %p218 = scmp.ne.s32.totalorder %s204, %s205
      %p219 = scmp.eq.s32.totalorder %s29, 3
      %p220 = por %p218, %p219
      %p222 = scmp.ne.s32.totalorder %s205, %s221
      %p223 = scmp.eq.s32.totalorder %s29, 0
      %p224 = por %p222, %p223
      %p225 = scmp.le.s32.totalorder 1, %s23
      %p226 = scmp.lt.s32.totalorder %s23, 5
      %p227 = pnand %p225, %p226
      %p228 = pneg %p227
      // Predicated region
      $region9: #{tpu_custom_call.1} parent=5 // pred_check
        _
      $region10: #{tpu_custom_call.1} parent=5 // pred_check_branch
        %230 = sbr.rel (%p227) target = $region12
      $region11: #{tpu_custom_call.1} parent=5 // pred_region
        %s231 = ssub.s32 %s23, 1
        // Predicated region
        $region13: #{tpu_custom_call.1} parent=11 // pred_check
          %p232 = pneg %p84
        $region14: #{tpu_custom_call.1} parent=11 // pred_check_branch
          %234 = sbr.rel (%p232) target = $region16
        $region15: #{tpu_custom_call.1} parent=11 // pred_region
          %236 = vsyncadd [#allocation15], 0
          %s238 = sshll.u32 %s2, 4
          %s239 = int_to_ptr.hbm [resolvable:$true] %s238
          %s240 = sshll.u32 [#allocation14], 4
          %s241 = int_to_ptr.vmem [resolvable:$true] %s240
          %243 = dma.hbm_to_vmem [thread:$0]  %s239, 128, %s241, [#allocation15]
        $region16: #{tpu_custom_call.1} parent=11 // pred_fallthru
          _
        // Predicated region
        $region17: #{tpu_custom_call.1} parent=11 // pred_check
          %p244 = pneg %p105
        $region18: #{tpu_custom_call.1} parent=11 // pred_check_branch
          %246 = sbr.rel (%p244) target = $region20
        $region19: #{tpu_custom_call.1} parent=11 // pred_region
          %248 = vsyncadd [#allocation15], 0
          %s249 = sshll.u32 %s3, 4
          %s250 = int_to_ptr.hbm [resolvable:$true] %s249
          %s251 = sshll.u32 [#allocation16], 4
          %s252 = int_to_ptr.vmem [resolvable:$true] %s251
          %257 = dma.hbm_to_vmem [thread:$0]  %s250, 2048, %s252, [#allocation15], 128, 128, 8
        $region20: #{tpu_custom_call.1} parent=11 // pred_fallthru
          _
        // Predicated region
        $region21: #{tpu_custom_call.1} parent=11 // pred_check
          %p258 = pneg %p126
        $region22: #{tpu_custom_call.1} parent=11 // pred_check_branch
          %260 = sbr.rel (%p258) target = $region24
        $region23: #{tpu_custom_call.1} parent=11 // pred_region
          %262 = vsyncadd [#allocation18], 0
          %s263 = sshll.u32 %s4, 4
          %s264 = int_to_ptr.hbm [resolvable:$true] %s263
          %s265 = sshll.u32 [#allocation17], 4
          %s266 = int_to_ptr.vmem [resolvable:$true] %s265
          %271 = dma.hbm_to_vmem [thread:$0]  %s264, 1024, %s266, [#allocation18], 64, 64, 4
        $region24: #{tpu_custom_call.1} parent=11 // pred_fallthru
          _
        // Predicated region
        $region25: #{tpu_custom_call.1} parent=11 // pred_check
          %p272 = pneg %p147
        $region26: #{tpu_custom_call.1} parent=11 // pred_check_branch
          %274 = sbr.rel (%p272) target = $region28
        $region27: #{tpu_custom_call.1} parent=11 // pred_region
          %276 = vsyncadd [#allocation18], 0
          %s277 = sshll.u32 %s5, 4
          %s278 = int_to_ptr.hbm [resolvable:$true] %s277
          %s279 = sshll.u32 [#allocation19], 4
          %s280 = int_to_ptr.vmem [resolvable:$true] %s279
          %285 = dma.hbm_to_vmem [thread:$0]  %s278, 1024, %s280, [#allocation18], 64, 64, 4
        $region28: #{tpu_custom_call.1} parent=11 // pred_fallthru
          _
        // Predicated region
        $region29: #{tpu_custom_call.1} parent=11 // pred_check
          %p286 = pneg %p168
        $region30: #{tpu_custom_call.1} parent=11 // pred_check_branch
          %288 = sbr.rel (%p286) target = $region32
        $region31: #{tpu_custom_call.1} parent=11 // pred_region
          %290 = vsyncadd [#allocation21], 0
          %s291 = sshll.u32 %s6, 4
          %s292 = int_to_ptr.hbm [resolvable:$true] %s291
          %s293 = sshll.u32 [#allocation20], 4
          %s294 = int_to_ptr.vmem [resolvable:$true] %s293
          %299 = dma.hbm_to_vmem [thread:$0]  %s292, 1024, %s294, [#allocation21], 64, 64, 4
        $region32: #{tpu_custom_call.1} parent=11 // pred_fallthru
          _
        // Predicated region
        $region33: #{tpu_custom_call.1} parent=11 // pred_check
          %p300 = pneg %p189
        $region34: #{tpu_custom_call.1} parent=11 // pred_check_branch
          %302 = sbr.rel (%p300) target = $region36
        $region35: #{tpu_custom_call.1} parent=11 // pred_region
          %304 = vsyncadd [#allocation21], 0
          %s305 = sshll.u32 %s7, 4
          %s306 = int_to_ptr.hbm [resolvable:$true] %s305
          %s307 = sshll.u32 [#allocation22], 4
          %s308 = int_to_ptr.vmem [resolvable:$true] %s307
          %313 = dma.hbm_to_vmem [thread:$0]  %s306, 1024, %s308, [#allocation21], 64, 64, 4
        $region36: #{tpu_custom_call.1} parent=11 // pred_fallthru
          _
      $region12: #{tpu_custom_call.1} parent=5 // pred_fallthru
        _
      %p314 = scmp.lt.s32.totalorder %s23, 4
      // Predicated region
      $region37: #{tpu_custom_call.1} parent=5 // pred_check
        %p315 = pneg %p314
      $region38: #{tpu_custom_call.1} parent=5 // pred_check_branch
        %317 = sbr.rel (%p315) target = $region40
      $region39: #{tpu_custom_call.1} parent=5 // pred_region
        // Predicated region
        $region41: #{tpu_custom_call.1} parent=39 // pred_check
          %p318 = pneg %p57
        $region42: #{tpu_custom_call.1} parent=39 // pred_check_branch
          %320 = sbr.rel (%p318) target = $region44
        $region43: #{tpu_custom_call.1} parent=39 // pred_region
          %s321 = sand.u32 %s47, 1
          %s322 = scalar_lea.sflag [#allocation12], %s321
          %s323 = sand.u32 %s47, 1
          %s324 = smul.addr %s323, 128
          %s325 = scalar_lea.vmem [#allocation11], %s324
          %s326 = smul.u32 16, %s31
          %328 = vsyncadd %s322, 0
          %s329 = smul.addr %s30, 32
          %s330 = sadd.s32 %s326, %s329
          %s331 = smul.addr %s330, 8
          %s332 = scalar_lea.hbm %s1, %s331
          %s333 = sshll.u32 %s332, 4
          %s334 = int_to_ptr.hbm [resolvable:$true] %s333
          %s335 = sshll.u32 %s325, 4
          %s336 = int_to_ptr.vmem [resolvable:$true] %s335
          %341 = dma.hbm_to_vmem [thread:$0]  %s334, 2048, %s336, %s322, 128, 128, 8
        $region44: #{tpu_custom_call.1} parent=39 // pred_fallthru
          _
      $region40: #{tpu_custom_call.1} parent=5 // pred_fallthru
        _
      %p342 = scmp.le.s32.totalorder 1, %s23
      %p343 = scmp.lt.s32.totalorder %s23, 5
      %p344 = pnand %p342, %p343
      %p345 = pneg %p344
      // Predicated region
      $region45: #{tpu_custom_call.1} parent=5 // pred_check
        _
      $region46: #{tpu_custom_call.1} parent=5 // pred_check_branch
        %347 = sbr.rel (%p344) target = $region48
      $region47: #{tpu_custom_call.1} parent=5 // pred_region
        %s348 = ssub.s32 %s23, 1
        %s349 = sand.u32 %s50, 1
        %s350 = scalar_lea.sflag [#allocation12], %s349
        %s351 = sand.u32 %s50, 1
        %s352 = smul.addr %s351, 128
        %s353 = scalar_lea.vmem [#allocation11], %s352
        // Predicated region
        $region49: #{tpu_custom_call.1} parent=47 // pred_check
          %p354 = pneg %p63
        $region50: #{tpu_custom_call.1} parent=47 // pred_check_branch
          %356 = sbr.rel (%p354) target = $region52
        $region51: #{tpu_custom_call.1} parent=47 // pred_region
          %358 = dma.done %s350, 2048
        $region52: #{tpu_custom_call.1} parent=47 // pred_fallthru
          _
        // Predicated region
        $region53: #{tpu_custom_call.1} parent=47 // pred_check
          %p359 = pneg %p84
        $region54: #{tpu_custom_call.1} parent=47 // pred_check_branch
          %361 = sbr.rel (%p359) target = $region56
        $region55: #{tpu_custom_call.1} parent=47 // pred_region
          %363 = dma.done [#allocation15], 128
        $region56: #{tpu_custom_call.1} parent=47 // pred_fallthru
          _
        // Predicated region
        $region57: #{tpu_custom_call.1} parent=47 // pred_check
          %p364 = pneg %p105
        $region58: #{tpu_custom_call.1} parent=47 // pred_check_branch
          %366 = sbr.rel (%p364) target = $region60
        $region59: #{tpu_custom_call.1} parent=47 // pred_region
          %368 = dma.done [#allocation15], 2048
        $region60: #{tpu_custom_call.1} parent=47 // pred_fallthru
          _
        // Predicated region
        $region61: #{tpu_custom_call.1} parent=47 // pred_check
          %p369 = pneg %p126
        $region62: #{tpu_custom_call.1} parent=47 // pred_check_branch
          %371 = sbr.rel (%p369) target = $region64
        $region63: #{tpu_custom_call.1} parent=47 // pred_region
          %373 = dma.done [#allocation18], 1024
        $region64: #{tpu_custom_call.1} parent=47 // pred_fallthru
          _
        // Predicated region
        $region65: #{tpu_custom_call.1} parent=47 // pred_check
          %p374 = pneg %p147
        $region66: #{tpu_custom_call.1} parent=47 // pred_check_branch
          %376 = sbr.rel (%p374) target = $region68
        $region67: #{tpu_custom_call.1} parent=47 // pred_region
          %378 = dma.done [#allocation18], 1024
        $region68: #{tpu_custom_call.1} parent=47 // pred_fallthru
          _
        // Predicated region
        $region69: #{tpu_custom_call.1} parent=47 // pred_check
          %p379 = pneg %p168
        $region70: #{tpu_custom_call.1} parent=47 // pred_check_branch
          %381 = sbr.rel (%p379) target = $region72
        $region71: #{tpu_custom_call.1} parent=47 // pred_region
          %383 = dma.done [#allocation21], 1024
        $region72: #{tpu_custom_call.1} parent=47 // pred_fallthru
          _
        // Predicated region
        $region73: #{tpu_custom_call.1} parent=47 // pred_check
          %p384 = pneg %p189
        $region74: #{tpu_custom_call.1} parent=47 // pred_check_branch
          %386 = sbr.rel (%p384) target = $region76
        $region75: #{tpu_custom_call.1} parent=47 // pred_region
          %388 = dma.done [#allocation21], 1024
        $region76: #{tpu_custom_call.1} parent=47 // pred_fallthru
          _
        %s389 = sand.u32 %s50, 1
        %s390 = scalar_lea.sflag [#allocation12], %s389
        %s391 = sand.u32 %s50, 1
        %s392 = smul.addr %s391, 128
        %s393 = scalar_lea.vmem [#allocation11], %s392
        %p394 = pneg %p63
        %p395 = pneg %p60
        %p396 = pneg %p84
        %p397 = pneg %p81
        %p398 = pneg %p105
        %p399 = pneg %p102
        %p400 = pneg %p126
        %p401 = pneg %p123
        %p402 = pneg %p147
        %p403 = pneg %p144
        %p404 = pneg %p168
        %p405 = pneg %p165
        %p406 = pneg %p189
        %p407 = pneg %p186
        %p408 = pneg %p217
        %p409 = pneg %p214
        %s410 = sand.u32 %s204, 1
        %s411 = scalar_lea.sflag [#allocation13], %s410
        %s412 = sand.u32 %s204, 1
        %s413 = smul.addr %s412, 128
        %s414 = scalar_lea.vmem [#allocation23], %s413
        %s415 = smul.u32 16, %s33
        %s416 = smul.u32 16, %s33
        %p417 = scmp.eq.s32.totalorder %s33, 0
        // Predicated region
        $region77: #{tpu_custom_call.1} parent=47 // pred_check
          %p418 = pneg %p417
        $region78: #{tpu_custom_call.1} parent=47 // pred_check_branch
          %420 = sbr.rel (%p418) target = $region80
        $region79: #{tpu_custom_call.1} parent=47 // pred_region
          %v421 = vld [vmem:[#allocation14] sm:$0x1]
          %v422 = vld [vmem:[#allocation14 + $0x1] sm:$0x1]
          %v423 = vld [vmem:[#allocation14 + $0x3] sm:$0x1]
          %v424 = vld [vmem:[#allocation14 + $0x4] sm:$0x1]
          %s425 = smul.u32 %s32, 256
          %s426 = sadd.s32 0, %s425
          %s427 = scalar_lea.hbm %s0, %s426
          // Predicated region
          $region81: #{tpu_custom_call.1} parent=79 // pred_check
            _
          $region82: #{tpu_custom_call.1} parent=79 // pred_check_branch
            %429 = sbr.rel target = $region84
          $region83: #{tpu_custom_call.1} parent=79 // pred_region
            %430 = sst [smem:[#allocation26]] [#allocation25]
            %431 = sst [smem:[#allocation27]] [#allocation24]
          $region84: #{tpu_custom_call.1} parent=79 // pred_fallthru
            _
          %433 = shalt.err (0)
          %s435 = sshll.u32 %s427, 4
          %s436 = int_to_ptr.hbm [resolvable:$true] %s435
          %s437 = sshll.u32 [#allocation6], 4
          %s438 = int_to_ptr.vmem [resolvable:$true] %s437
          %440 = dma.hbm_to_vmem [thread:$0]  %s436, 2048, %s438, [#allocation7]
          loop: start=0, step=1, limit=2
          $region85: #{tpu_custom_call.1} parent=79 // loop_pre_header
            _
          $region86: #{tpu_custom_call.1} parent=79 // loop_header
            %s442 = sphi 0, %s446
            %p443 = scmp.ge.s32.totalorder %s442, 2
            %v447 = vphi 0.0, %v540
            %v448 = vphi 0.0, %v578
          $region87: #{tpu_custom_call.1} parent=79 // loop_header_branch
            %445 = sbr.rel (%p443) target = $region91
          $region88: #{tpu_custom_call.1} parent=79 // loop_body
            %s449 = sand.u32 %s442, 1
            %s450 = smul.u32 %s442, 128
            %s451 = smul.u32 %s449, 128
            %s452 = scalar_lea.vmem [#allocation6], %s451
            %s453 = scalar_lea.sflag [#allocation7], %s449
            %s454 = smul.u32 128, 1
            %s455 = sshll.u32 %s454, 4
            %456 = dma.done %s453, %s455
            %s457 = sadd.s32 %s442, 1
            %p458 = scmp.lt.s32.totalorder %s457, 2
            // Predicated region
            $region92: #{tpu_custom_call.1} parent=88 // pred_check
              %p459 = pneg %p458
            $region93: #{tpu_custom_call.1} parent=88 // pred_check_branch
              %461 = sbr.rel (%p459) target = $region95
            $region94: #{tpu_custom_call.1} parent=88 // pred_region
              %s462 = ssub.s32 1, %s449
              %s463 = smul.u32 %s457, 128
              %s464 = sadd.s32 %s463, %s425
              %s465 = scalar_lea.hbm %s0, %s464
              %s466 = smul.u32 %s462, 128
              %s467 = scalar_lea.vmem [#allocation6], %s466
              %s468 = scalar_lea.sflag [#allocation7], %s462
              // Predicated region
              $region96: #{tpu_custom_call.1} parent=94 // pred_check
                _
              $region97: #{tpu_custom_call.1} parent=94 // pred_check_branch
                %470 = sbr.rel target = $region99
              $region98: #{tpu_custom_call.1} parent=94 // pred_region
                %471 = sst [smem:[#allocation26]] [#allocation29]
                %472 = sst [smem:[#allocation27]] [#allocation28]
              $region99: #{tpu_custom_call.1} parent=94 // pred_fallthru
                _
              %474 = shalt.err (0)
              %s476 = sshll.u32 %s465, 4
              %s477 = int_to_ptr.hbm [resolvable:$true] %s476
              %s478 = sshll.u32 %s467, 4
              %s479 = int_to_ptr.vmem [resolvable:$true] %s478
              %481 = dma.hbm_to_vmem [thread:$0]  %s477, 2048, %s479, %s468
            $region95: #{tpu_custom_call.1} parent=88 // pred_fallthru
              _
            %p482 = scmp.eq.s32.totalorder %s457, 2
            // Predicated region
            $region100: #{tpu_custom_call.1} parent=88 // pred_check
              %p483 = pneg %p482
            $region101: #{tpu_custom_call.1} parent=88 // pred_check_branch
              %485 = sbr.rel (%p483) target = $region103
            $region102: #{tpu_custom_call.1} parent=88 // pred_region
              %s486 = ssub.s32 1, %s449
              %s487 = smul.u32 %s486, 128
              %s488 = scalar_lea.vmem [#allocation6], %s487
              %s489 = scalar_lea.sflag [#allocation7], %s486
              // Predicated region
              $region104: #{tpu_custom_call.1} parent=102 // pred_check
                _
              $region105: #{tpu_custom_call.1} parent=102 // pred_check_branch
                %491 = sbr.rel target = $region107
              $region106: #{tpu_custom_call.1} parent=102 // pred_region
                %492 = sst [smem:[#allocation26]] [#allocation31]
                %493 = sst [smem:[#allocation27]] [#allocation30]
              $region107: #{tpu_custom_call.1} parent=102 // pred_fallthru
                _
              %495 = shalt.err (0)
              %s497 = sshll.u32 %s427, 4
              %s498 = int_to_ptr.hbm [resolvable:$true] %s497
              %s499 = sshll.u32 %s488, 4
              %s500 = int_to_ptr.vmem [resolvable:$true] %s499
              %502 = dma.hbm_to_vmem [thread:$0]  %s498, 2048, %s500, %s489
            $region103: #{tpu_custom_call.1} parent=88 // pred_fallthru
              _
            %v503 = vld [vmem:[%s452] sm:$0xff]
            %v504 = vld [vmem:[%s452 + $0x8] sm:$0xff]
            %v505 = vld [vmem:[%s452 + $0x10] sm:$0xff]
            %v506 = vld [vmem:[%s452 + $0x18] sm:$0xff]
            %v507 = vld [vmem:[%s452 + $0x20] sm:$0xff]
            %v508 = vld [vmem:[%s452 + $0x28] sm:$0xff]
            %v509 = vld [vmem:[%s452 + $0x30] sm:$0xff]
            %v510 = vld [vmem:[%s452 + $0x38] sm:$0xff]
            %v511 = vld [vmem:[%s452 + $0x40] sm:$0xff]
            %v512 = vld [vmem:[%s452 + $0x48] sm:$0xff]
            %v513 = vld [vmem:[%s452 + $0x50] sm:$0xff]
            %v514 = vld [vmem:[%s452 + $0x58] sm:$0xff]
            %v515 = vld [vmem:[%s452 + $0x60] sm:$0xff]
            %v516 = vld [vmem:[%s452 + $0x68] sm:$0xff]
            %v517 = vld [vmem:[%s452 + $0x70] sm:$0xff]
            %v518 = vld [vmem:[%s452 + $0x78] sm:$0xff]
            %v519 = vadd.f32 %v503, %v504
            %v520 = vadd.f32 %v519, %v505
            %v521 = vadd.f32 %v520, %v506
            %v522 = vadd.f32 %v521, %v507
            %v523 = vadd.f32 %v522, %v508
            %v524 = vadd.f32 %v523, %v509
            %v525 = vadd.f32 %v524, %v510
            %v526 = vadd.f32 %v525, %v511
            %v527 = vadd.f32 %v526, %v512
            %v528 = vadd.f32 %v527, %v513
            %v529 = vadd.f32 %v528, %v514
            %v530 = vadd.f32 %v529, %v515
            %v531 = vadd.f32 %v530, %v516
            %v532 = vadd.f32 %v531, %v517
            %v533 = vadd.f32 %v532, %v518
            %v534 = vrot.slane %v533, 4
            %v535 = vadd.f32 %v533, %v534
            %v536 = vrot.slane %v535, 2
            %v537 = vadd.f32 %v535, %v536
            %v538 = vrot.slane %v537, 1
            %v539 = vadd.f32 %v537, %v538
            %v540 = vadd.f32 %v447, %v539
            %v541 = vmul.f32 %v503, %v503
            %v542 = vmul.f32 %v504, %v504
            %v543 = vmul.f32 %v505, %v505
            %v544 = vmul.f32 %v506, %v506
            %v545 = vmul.f32 %v507, %v507
            %v546 = vmul.f32 %v508, %v508
            %v547 = vmul.f32 %v509, %v509
            %v548 = vmul.f32 %v510, %v510
            %v549 = vmul.f32 %v511, %v511
            %v550 = vmul.f32 %v512, %v512
            %v551 = vmul.f32 %v513, %v513
            %v552 = vmul.f32 %v514, %v514
            %v553 = vmul.f32 %v515, %v515
            %v554 = vmul.f32 %v516, %v516
            %v555 = vmul.f32 %v517, %v517
            %v556 = vmul.f32 %v518, %v518
            %v557 = vadd.f32 %v541, %v542
            %v558 = vadd.f32 %v557, %v543
            %v559 = vadd.f32 %v558, %v544
            %v560 = vadd.f32 %v559, %v545
            %v561 = vadd.f32 %v560, %v546
            %v562 = vadd.f32 %v561, %v547
            %v563 = vadd.f32 %v562, %v548
            %v564 = vadd.f32 %v563, %v549
            %v565 = vadd.f32 %v564, %v550
            %v566 = vadd.f32 %v565, %v551
            %v567 = vadd.f32 %v566, %v552
            %v568 = vadd.f32 %v567, %v553
            %v569 = vadd.f32 %v568, %v554
            %v570 = vadd.f32 %v569, %v555
            %v571 = vadd.f32 %v570, %v556
            %v572 = vrot.slane %v571, 4
            %v573 = vadd.f32 %v571, %v572
            %v574 = vrot.slane %v573, 2
            %v575 = vadd.f32 %v573, %v574
            %v576 = vrot.slane %v575, 1
            %v577 = vadd.f32 %v575, %v576
            %v578 = vadd.f32 %v448, %v577
          $region89: #{tpu_custom_call.1} parent=79 // loop_footer
            %s446 = sadd.s32 1, %s442
          $region90: #{tpu_custom_call.1} parent=79 // loop_footer_branch
            %441 = sbr.rel target = $region86
          $region91: #{tpu_custom_call.1} parent=79 // loop_exit
            _
          %v579 = vld [vmem:[#allocation16] sm:$0xff]
          %v580 = vld [vmem:[#allocation16 + $0x8] sm:$0xff]
          %v581 = vld [vmem:[#allocation16 + $0x10] sm:$0xff]
          %v582 = vld [vmem:[#allocation16 + $0x18] sm:$0xff]
          %v583 = vld [vmem:[#allocation16 + $0x20] sm:$0xff]
          %v584 = vld [vmem:[#allocation16 + $0x28] sm:$0xff]
          %v585 = vld [vmem:[#allocation16 + $0x30] sm:$0xff]
          %v586 = vld [vmem:[#allocation16 + $0x38] sm:$0xff]
          %v587 = vld [vmem:[#allocation16 + $0x40] sm:$0xff]
          %v588 = vld [vmem:[#allocation16 + $0x48] sm:$0xff]
          %v589 = vld [vmem:[#allocation16 + $0x50] sm:$0xff]
          %v590 = vld [vmem:[#allocation16 + $0x58] sm:$0xff]
          %v591 = vld [vmem:[#allocation16 + $0x60] sm:$0xff]
          %v592 = vld [vmem:[#allocation16 + $0x68] sm:$0xff]
          %v593 = vld [vmem:[#allocation16 + $0x70] sm:$0xff]
          %v594 = vld [vmem:[#allocation16 + $0x78] sm:$0xff]
          %595 = vmatpush.msra.mxu0 %v594
          %596 = vmatpush.msra.mxu0 %v593
          %597 = vmatpush.msra.mxu0 %v592
          %598 = vmatpush.msra.mxu0 %v591
          %599 = vmatpush.msra.mxu0 %v590
          %600 = vmatpush.msra.mxu0 %v589
          %601 = vmatpush.msra.mxu0 %v588
          %602 = vmatpush.msra.mxu0 %v587
          %603 = vmatpush.msra.mxu0 %v586
          %604 = vmatpush.msra.mxu0 %v585
          %605 = vmatpush.msra.mxu0 %v584
          %606 = vmatpush.msra.mxu0 %v583
          %607 = vmatpush.msra.mxu0 %v582
          %608 = vmatpush.msra.mxu0 %v581
          %609 = vmatpush.msra.mxu0 %v580
          %610 = vmatpush.msra.mxu0 %v579
          %611 = vmatmul.f32.gmra.mxu0 %v447
          %v612 = vpop.f32.mrf.mxu0
          %v613 = vadd.f32 0.0, %v612
          %614 = vdwg.mxu0
          %v615 = vmul.f32 %v613, 0.0009765625
          %616 = vmatpush.msra.mxu0 %v594
          %617 = vmatpush.msra.mxu0 %v593
          %618 = vmatpush.msra.mxu0 %v592
          %619 = vmatpush.msra.mxu0 %v591
          %620 = vmatpush.msra.mxu0 %v590
          %621 = vmatpush.msra.mxu0 %v589
          %622 = vmatpush.msra.mxu0 %v588
          %623 = vmatpush.msra.mxu0 %v587
          %624 = vmatpush.msra.mxu0 %v586
          %625 = vmatpush.msra.mxu0 %v585
          %626 = vmatpush.msra.mxu0 %v584
          %627 = vmatpush.msra.mxu0 %v583
          %628 = vmatpush.msra.mxu0 %v582
          %629 = vmatpush.msra.mxu0 %v581
          %630 = vmatpush.msra.mxu0 %v580
          %631 = vmatpush.msra.mxu0 %v579
          %632 = vmatmul.f32.gmra.mxu0 %v448
          %v633 = vpop.f32.mrf.mxu0
          %v634 = vadd.f32 0.0, %v633
          %635 = vdwg.mxu0
          %v636 = vmul.f32 %v634, 0.0009765625
          %v637 = vmul.f32 %v615, %v615
          %v638 = vsub.f32 %v636, %v637
          %v639 = vadd.f32 %v638, 1e-06
          %v640 = vrsqrt.pop %v639
          %v641 = vmul.f32 %v640, %v639
          %v642 = vmul.f32 %v641, %v640
          %v643 = vmul.f32 0.5, %v642
          %v644 = vsub.f32 1.5, %v643
          %v645 = vmul.f32 %v640, %v644
          %vm646 = vweird.f32 %v639
          %vm647 = vweird.f32 %v640
          %vm648 = vmor %vm646, %vm647
          %v649 = vsel %vm648, %v640, %v645
          %v650 = vmul.f32 %v649, %v421
          %v651 = vmul.f32 %v615, %v650
          %v652 = vsub.f32 %v422, %v651
          %653 = vst [vmem:[#allocation4] sm:$0x1] %v650
          %654 = vst [vmem:[#allocation5] sm:$0x1] %v652
          loop: start=0, step=1, limit=2
          $region108: #{tpu_custom_call.1} parent=79 // loop_pre_header
            _
          $region109: #{tpu_custom_call.1} parent=79 // loop_header
            %s656 = sphi 0, %s660
            %p657 = scmp.ge.s32.totalorder %s656, 2
          $region110: #{tpu_custom_call.1} parent=79 // loop_header_branch
            %659 = sbr.rel (%p657) target = $region114
          $region111: #{tpu_custom_call.1} parent=79 // loop_body
            %s661 = sadd.s32 %s656, 2
            %s662 = sand.u32 %s661, 1
            %s663 = smul.u32 %s656, 128
            %s664 = smul.u32 %s662, 128
            %s665 = scalar_lea.vmem [#allocation6], %s664
            %s666 = scalar_lea.sflag [#allocation7], %s662
            %s667 = smul.u32 128, 1
            %s668 = sshll.u32 %s667, 4
            %669 = dma.done %s666, %s668
            %s670 = sadd.s32 %s656, 1
            %p671 = scmp.lt.s32.totalorder %s670, 2
            // Predicated region
            $region115: #{tpu_custom_call.1} parent=111 // pred_check
              %p672 = pneg %p671
            $region116: #{tpu_custom_call.1} parent=111 // pred_check_branch
              %674 = sbr.rel (%p672) target = $region118
            $region117: #{tpu_custom_call.1} parent=111 // pred_region
              %s675 = ssub.s32 1, %s662
              %s676 = smul.u32 %s670, 128
              %s677 = sadd.s32 %s676, %s425
              %s678 = scalar_lea.hbm %s0, %s677
              %s679 = smul.u32 %s675, 128
              %s680 = scalar_lea.vmem [#allocation6], %s679
              %s681 = scalar_lea.sflag [#allocation7], %s675
              // Predicated region
              $region119: #{tpu_custom_call.1} parent=117 // pred_check
                _
              $region120: #{tpu_custom_call.1} parent=117 // pred_check_branch
                %683 = sbr.rel target = $region122
              $region121: #{tpu_custom_call.1} parent=117 // pred_region
                %684 = sst [smem:[#allocation26]] [#allocation33]
                %685 = sst [smem:[#allocation27]] [#allocation32]
              $region122: #{tpu_custom_call.1} parent=117 // pred_fallthru
                _
              %687 = shalt.err (0)
              %s689 = sshll.u32 %s678, 4
              %s690 = int_to_ptr.hbm [resolvable:$true] %s689
              %s691 = sshll.u32 %s680, 4
              %s692 = int_to_ptr.vmem [resolvable:$true] %s691
              %694 = dma.hbm_to_vmem [thread:$0]  %s690, 2048, %s692, %s681
            $region118: #{tpu_custom_call.1} parent=111 // pred_fallthru
              _
            %v695 = vld [vmem:[%s665] sm:$0xff]
            %v696 = vld [vmem:[%s665 + $0x8] sm:$0xff]
            %v697 = vld [vmem:[%s665 + $0x10] sm:$0xff]
            %v698 = vld [vmem:[%s665 + $0x18] sm:$0xff]
            %v699 = vld [vmem:[%s665 + $0x20] sm:$0xff]
            %v700 = vld [vmem:[%s665 + $0x28] sm:$0xff]
            %v701 = vld [vmem:[%s665 + $0x30] sm:$0xff]
            %v702 = vld [vmem:[%s665 + $0x38] sm:$0xff]
            %v703 = vld [vmem:[%s665 + $0x40] sm:$0xff]
            %v704 = vld [vmem:[%s665 + $0x48] sm:$0xff]
            %v705 = vld [vmem:[%s665 + $0x50] sm:$0xff]
            %v706 = vld [vmem:[%s665 + $0x58] sm:$0xff]
            %v707 = vld [vmem:[%s665 + $0x60] sm:$0xff]
            %v708 = vld [vmem:[%s665 + $0x68] sm:$0xff]
            %v709 = vld [vmem:[%s665 + $0x70] sm:$0xff]
            %v710 = vld [vmem:[%s665 + $0x78] sm:$0xff]
            %v711 = vperm.slane %v650, 0
            %v712 = vmul.f32 %v695, %v711
            %v713 = vmul.f32 %v696, %v711
            %v714 = vmul.f32 %v697, %v711
            %v715 = vmul.f32 %v698, %v711
            %v716 = vmul.f32 %v699, %v711
            %v717 = vmul.f32 %v700, %v711
            %v718 = vmul.f32 %v701, %v711
            %v719 = vmul.f32 %v702, %v711
            %v720 = vmul.f32 %v703, %v711
            %v721 = vmul.f32 %v704, %v711
            %v722 = vmul.f32 %v705, %v711
            %v723 = vmul.f32 %v706, %v711
            %v724 = vmul.f32 %v707, %v711
            %v725 = vmul.f32 %v708, %v711
            %v726 = vmul.f32 %v709, %v711
            %v727 = vmul.f32 %v710, %v711
            %v728 = vperm.slane %v652, 0
            %v729 = vadd.f32 %v712, %v728
            %v730 = vadd.f32 %v713, %v728
            %v731 = vadd.f32 %v714, %v728
            %v732 = vadd.f32 %v715, %v728
            %v733 = vadd.f32 %v716, %v728
            %v734 = vadd.f32 %v717, %v728
            %v735 = vadd.f32 %v718, %v728
            %v736 = vadd.f32 %v719, %v728
            %v737 = vadd.f32 %v720, %v728
            %v738 = vadd.f32 %v721, %v728
            %v739 = vadd.f32 %v722, %v728
            %v740 = vadd.f32 %v723, %v728
            %v741 = vadd.f32 %v724, %v728
            %v742 = vadd.f32 %v725, %v728
            %v743 = vadd.f32 %v726, %v728
            %v744 = vadd.f32 %v727, %v728
            %v745 = vpack.c.bf16 %v730, %v729
            %v746 = vpack.c.bf16 %v732, %v731
            %v747 = vpack.c.bf16 %v734, %v733
            %v748 = vpack.c.bf16 %v736, %v735
            %v749 = vpack.c.bf16 %v738, %v737
            %v750 = vpack.c.bf16 %v740, %v739
            %v751 = vpack.c.bf16 %v742, %v741
            %v752 = vpack.c.bf16 %v744, %v743
            %v753 = vld [vmem:[#allocation19] sm:$0xf]
            %v754 = vld [vmem:[#allocation19 + $0x4] sm:$0xf]
            %v755 = vld [vmem:[#allocation19 + $0x8] sm:$0xf]
            %v756 = vld [vmem:[#allocation19 + $0xc] sm:$0xf]
            %v757 = vld [vmem:[#allocation19 + $0x10] sm:$0xf]
            %v758 = vld [vmem:[#allocation19 + $0x14] sm:$0xf]
            %v759 = vld [vmem:[#allocation19 + $0x18] sm:$0xf]
            %v760 = vld [vmem:[#allocation19 + $0x1c] sm:$0xf]
            %v761 = vld [vmem:[#allocation19 + $0x20] sm:$0xf]
            %v762 = vld [vmem:[#allocation19 + $0x24] sm:$0xf]
            %v763 = vld [vmem:[#allocation19 + $0x28] sm:$0xf]
            %v764 = vld [vmem:[#allocation19 + $0x2c] sm:$0xf]
            %v765 = vld [vmem:[#allocation19 + $0x30] sm:$0xf]
            %v766 = vld [vmem:[#allocation19 + $0x34] sm:$0xf]
            %v767 = vld [vmem:[#allocation19 + $0x38] sm:$0xf]
            %v768 = vld [vmem:[#allocation19 + $0x3c] sm:$0xf]
            %v769 = vperm.slane %v423, 0
            %v786 = vunpack.c.l.b16 %v753
            %v787 = vunpack.c.l.b16 %v754
            %v788 = vunpack.c.l.b16 %v755
            %v789 = vunpack.c.l.b16 %v756
            %v790 = vunpack.c.l.b16 %v757
            %v791 = vunpack.c.l.b16 %v758
            %v792 = vunpack.c.l.b16 %v759
            %v793 = vunpack.c.l.b16 %v760
            %v794 = vunpack.c.l.b16 %v761
            %v795 = vunpack.c.l.b16 %v762
            %v796 = vunpack.c.l.b16 %v763
            %v797 = vunpack.c.l.b16 %v764
            %v798 = vunpack.c.l.b16 %v765
            %v799 = vunpack.c.l.b16 %v766
            %v800 = vunpack.c.l.b16 %v767
            %v801 = vunpack.c.l.b16 %v768
            %v802 = vpack.c.b16 %v787, %v786
            %v803 = vpack.c.b16 %v789, %v788
            %v804 = vpack.c.b16 %v791, %v790
            %v805 = vpack.c.b16 %v793, %v792
            %v806 = vpack.c.b16 %v795, %v794
            %v807 = vpack.c.b16 %v797, %v796
            %v808 = vpack.c.b16 %v799, %v798
            %v809 = vpack.c.b16 %v801, %v800
            %818 = vmatpush.bf16.msra.mxu0 %v809
            %819 = vmatpush.bf16.msra.mxu0 %v808
            %820 = vmatpush.bf16.msra.mxu0 %v807
            %821 = vmatpush.bf16.msra.mxu0 %v806
            %822 = vmatpush.bf16.msra.mxu0 %v805
            %823 = vmatpush.bf16.msra.mxu0 %v804
            %824 = vmatpush.bf16.msra.mxu0 %v803
            %825 = vmatpush.bf16.msra.mxu0 %v802
            %826 = vmatmul.bf16.gmra.mxu0 %v745
            %v827 = vpop.f32.mrf.mxu0
            %v828 = vadd.f32 %v769, %v827
            %v829 = vpop.f32.mrf.mxu0
            %v830 = vadd.f32 %v769, %v829
            %831 = vmatmul.bf16.gmra.mxu0 %v746
            %v832 = vpop.f32.mrf.mxu0
            %v833 = vadd.f32 %v769, %v832
            %v834 = vpop.f32.mrf.mxu0
            %v835 = vadd.f32 %v769, %v834
            %836 = vmatmul.bf16.gmra.mxu0 %v747
            %v837 = vpop.f32.mrf.mxu0
            %v838 = vadd.f32 %v769, %v837
            %v839 = vpop.f32.mrf.mxu0
            %v840 = vadd.f32 %v769, %v839
            %841 = vmatmul.bf16.gmra.mxu0 %v748
            %v842 = vpop.f32.mrf.mxu0
            %v843 = vadd.f32 %v769, %v842
            %v844 = vpop.f32.mrf.mxu0
            %v845 = vadd.f32 %v769, %v844
            %846 = vmatmul.bf16.gmra.mxu0 %v749
            %v847 = vpop.f32.mrf.mxu0
            %v848 = vadd.f32 %v769, %v847
            %v849 = vpop.f32.mrf.mxu0
            %v850 = vadd.f32 %v769, %v849
            %851 = vmatmul.bf16.gmra.mxu0 %v750
            %v852 = vpop.f32.mrf.mxu0
            %v853 = vadd.f32 %v769, %v852
            %v854 = vpop.f32.mrf.mxu0
            %v855 = vadd.f32 %v769, %v854
            %856 = vmatmul.bf16.gmra.mxu0 %v751
            %v857 = vpop.f32.mrf.mxu0
            %v858 = vadd.f32 %v769, %v857
            %v859 = vpop.f32.mrf.mxu0
            %v860 = vadd.f32 %v769, %v859
            %861 = vmatmul.bf16.gmra.mxu0 %v752
            %v862 = vpop.f32.mrf.mxu0
            %v863 = vadd.f32 %v769, %v862
            %v864 = vpop.f32.mrf.mxu0
            %v865 = vadd.f32 %v769, %v864
            %866 = vdwg.mxu0
            %v867 = vld [vmem:[#allocation20] sm:$0xf]
            %v868 = vld [vmem:[#allocation20 + $0x4] sm:$0xf]
            %v869 = vld [vmem:[#allocation20 + $0x8] sm:$0xf]
            %v870 = vld [vmem:[#allocation20 + $0xc] sm:$0xf]
            %v871 = vld [vmem:[#allocation20 + $0x10] sm:$0xf]
            %v872 = vld [vmem:[#allocation20 + $0x14] sm:$0xf]
            %v873 = vld [vmem:[#allocation20 + $0x18] sm:$0xf]
            %v874 = vld [vmem:[#allocation20 + $0x1c] sm:$0xf]
            %v875 = vld [vmem:[#allocation20 + $0x20] sm:$0xf]
            %v876 = vld [vmem:[#allocation20 + $0x24] sm:$0xf]
            %v877 = vld [vmem:[#allocation20 + $0x28] sm:$0xf]
            %v878 = vld [vmem:[#allocation20 + $0x2c] sm:$0xf]
            %v879 = vld [vmem:[#allocation20 + $0x30] sm:$0xf]
            %v880 = vld [vmem:[#allocation20 + $0x34] sm:$0xf]
            %v881 = vld [vmem:[#allocation20 + $0x38] sm:$0xf]
            %v882 = vld [vmem:[#allocation20 + $0x3c] sm:$0xf]
            %v883 = vperm.slane %v424, 0
            %v900 = vunpack.c.l.b16 %v867
            %v901 = vunpack.c.l.b16 %v868
            %v902 = vunpack.c.l.b16 %v869
            %v903 = vunpack.c.l.b16 %v870
            %v904 = vunpack.c.l.b16 %v871
            %v905 = vunpack.c.l.b16 %v872
            %v906 = vunpack.c.l.b16 %v873
            %v907 = vunpack.c.l.b16 %v874
            %v908 = vunpack.c.l.b16 %v875
            %v909 = vunpack.c.l.b16 %v876
            %v910 = vunpack.c.l.b16 %v877
            %v911 = vunpack.c.l.b16 %v878
            %v912 = vunpack.c.l.b16 %v879
            %v913 = vunpack.c.l.b16 %v880
            %v914 = vunpack.c.l.b16 %v881
            %v915 = vunpack.c.l.b16 %v882
            %v916 = vpack.c.b16 %v901, %v900
            %v917 = vpack.c.b16 %v903, %v902
            %v918 = vpack.c.b16 %v905, %v904
            %v919 = vpack.c.b16 %v907, %v906
            %v920 = vpack.c.b16 %v909, %v908
            %v921 = vpack.c.b16 %v911, %v910
            %v922 = vpack.c.b16 %v913, %v912
            %v923 = vpack.c.b16 %v915, %v914
            %932 = vmatpush.bf16.msra.mxu0 %v923
            %933 = vmatpush.bf16.msra.mxu0 %v922
            %934 = vmatpush.bf16.msra.mxu0 %v921
            %935 = vmatpush.bf16.msra.mxu0 %v920
            %936 = vmatpush.bf16.msra.mxu0 %v919
            %937 = vmatpush.bf16.msra.mxu0 %v918
            %938 = vmatpush.bf16.msra.mxu0 %v917
            %939 = vmatpush.bf16.msra.mxu0 %v916
            %940 = vmatmul.bf16.gmra.mxu0 %v745
            %v941 = vpop.f32.mrf.mxu0
            %v942 = vadd.f32 %v883, %v941
            %v943 = vpop.f32.mrf.mxu0
            %v944 = vadd.f32 %v883, %v943
            %945 = vmatmul.bf16.gmra.mxu0 %v746
            %v946 = vpop.f32.mrf.mxu0
            %v947 = vadd.f32 %v883, %v946
            %v948 = vpop.f32.mrf.mxu0
            %v949 = vadd.f32 %v883, %v948
            %950 = vmatmul.bf16.gmra.mxu0 %v747
            %v951 = vpop.f32.mrf.mxu0
            %v952 = vadd.f32 %v883, %v951
            %v953 = vpop.f32.mrf.mxu0
            %v954 = vadd.f32 %v883, %v953
            %955 = vmatmul.bf16.gmra.mxu0 %v748
            %v956 = vpop.f32.mrf.mxu0
            %v957 = vadd.f32 %v883, %v956
            %v958 = vpop.f32.mrf.mxu0
            %v959 = vadd.f32 %v883, %v958
            %960 = vmatmul.bf16.gmra.mxu0 %v749
            %v961 = vpop.f32.mrf.mxu0
            %v962 = vadd.f32 %v883, %v961
            %v963 = vpop.f32.mrf.mxu0
            %v964 = vadd.f32 %v883, %v963
            %965 = vmatmul.bf16.gmra.mxu0 %v750
            %v966 = vpop.f32.mrf.mxu0
            %v967 = vadd.f32 %v883, %v966
            %v968 = vpop.f32.mrf.mxu0
            %v969 = vadd.f32 %v883, %v968
            %970 = vmatmul.bf16.gmra.mxu0 %v751
            %v971 = vpop.f32.mrf.mxu0
            %v972 = vadd.f32 %v883, %v971
            %v973 = vpop.f32.mrf.mxu0
            %v974 = vadd.f32 %v883, %v973
            %975 = vmatmul.bf16.gmra.mxu0 %v752
            %v976 = vpop.f32.mrf.mxu0
            %v977 = vadd.f32 %v883, %v976
            %v978 = vpop.f32.mrf.mxu0
            %v979 = vadd.f32 %v883, %v978
            %980 = vdwg.mxu0
            %981 = vxpose.xlu0.b32.start [1/16] %v828, 128
            %982 = vxpose.xlu0.b32.cont [2/16] %v830, 128
            %983 = vxpose.xlu0.b32.cont [3/16] %v833, 128
            %984 = vxpose.xlu0.b32.cont [4/16] %v835, 128
            %985 = vxpose.xlu0.b32.cont [5/16] %v838, 128
            %986 = vxpose.xlu0.b32.cont [6/16] %v840, 128
            %987 = vxpose.xlu0.b32.cont [7/16] %v843, 128
            %988 = vxpose.xlu0.b32.cont [8/16] %v845, 128
            %989 = vxpose.xlu0.b32.cont [9/16] %v848, 128
            %990 = vxpose.xlu0.b32.cont [10/16] %v850, 128
            %991 = vxpose.xlu0.b32.cont [11/16] %v853, 128
            %992 = vxpose.xlu0.b32.cont [12/16] %v855, 128
            %993 = vxpose.xlu0.b32.cont [13/16] %v858, 128
            %994 = vxpose.xlu0.b32.cont [14/16] %v860, 128
            %995 = vxpose.xlu0.b32.cont [15/16] %v863, 128
            %996 = vxpose.xlu0.b32.end [16/16] %v865, 128
            %v997 = vpop.trf.xlu0
            %v998 = vpop.trf.xlu0
            %v999 = vpop.trf.xlu0
            %v1000 = vpop.trf.xlu0
            %v1001 = vpop.trf.xlu0
            %v1002 = vpop.trf.xlu0
            %v1003 = vpop.trf.xlu0
            %v1004 = vpop.trf.xlu0
            %v1005 = vpop.trf.xlu0
            %v1006 = vpop.trf.xlu0
            %v1007 = vpop.trf.xlu0
            %v1008 = vpop.trf.xlu0
            %v1009 = vpop.trf.xlu0
            %v1010 = vpop.trf.xlu0
            %v1011 = vpop.trf.xlu0
            %v1012 = vpop.trf.xlu0
            %v1013 = vpack.c.bf16 %v997, %v997
            %v1014 = vpack.c.bf16 %v998, %v998
            %v1015 = vpack.c.bf16 %v999, %v999
            %v1016 = vpack.c.bf16 %v1000, %v1000
            %v1017 = vpack.c.bf16 %v1001, %v1001
            %v1018 = vpack.c.bf16 %v1002, %v1002
            %v1019 = vpack.c.bf16 %v1003, %v1003
            %v1020 = vpack.c.bf16 %v1004, %v1004
            %v1021 = vpack.c.bf16 %v1005, %v1005
            %v1022 = vpack.c.bf16 %v1006, %v1006
            %v1023 = vpack.c.bf16 %v1007, %v1007
            %v1024 = vpack.c.bf16 %v1008, %v1008
            %v1025 = vpack.c.bf16 %v1009, %v1009
            %v1026 = vpack.c.bf16 %v1010, %v1010
            %v1027 = vpack.c.bf16 %v1011, %v1011
            %v1028 = vpack.c.bf16 %v1012, %v1012
            %s1029 = sshra.s32 %s663, 7
            %s1030 = sand.u32 %s663, 127
            %s1031 = smul.addr %s1029, 4
            %s1032 = scalar_lea.vmem [#allocation2], %s1031
            %1033 = vst [vmem:[%s1032] sm:$0xf] %v1013
            %1034 = vst [vmem:[%s1032 + $0x8] sm:$0xf] %v1014
            %1035 = vst [vmem:[%s1032 + $0x10] sm:$0xf] %v1015
            %1036 = vst [vmem:[%s1032 + $0x18] sm:$0xf] %v1016
            %1037 = vst [vmem:[%s1032 + $0x20] sm:$0xf] %v1017
            %1038 = vst [vmem:[%s1032 + $0x28] sm:$0xf] %v1018
            %1039 = vst [vmem:[%s1032 + $0x30] sm:$0xf] %v1019
            %1040 = vst [vmem:[%s1032 + $0x38] sm:$0xf] %v1020
            %1041 = vst [vmem:[%s1032 + $0x40] sm:$0xf] %v1021
            %1042 = vst [vmem:[%s1032 + $0x48] sm:$0xf] %v1022
            %1043 = vst [vmem:[%s1032 + $0x50] sm:$0xf] %v1023
            %1044 = vst [vmem:[%s1032 + $0x58] sm:$0xf] %v1024
            %1045 = vst [vmem:[%s1032 + $0x60] sm:$0xf] %v1025
            %1046 = vst [vmem:[%s1032 + $0x68] sm:$0xf] %v1026
            %1047 = vst [vmem:[%s1032 + $0x70] sm:$0xf] %v1027
            %1048 = vst [vmem:[%s1032 + $0x78] sm:$0xf] %v1028
            %v1049 = vpack.c.bf16 %v942, %v942
            %v1050 = vpack.c.bf16 %v944, %v944
            %v1051 = vpack.c.bf16 %v947, %v947
            %v1052 = vpack.c.bf16 %v949, %v949
            %v1053 = vpack.c.bf16 %v952, %v952
            %v1054 = vpack.c.bf16 %v954, %v954
            %v1055 = vpack.c.bf16 %v957, %v957
            %v1056 = vpack.c.bf16 %v959, %v959
            %v1057 = vpack.c.bf16 %v962, %v962
            %v1058 = vpack.c.bf16 %v964, %v964
            %v1059 = vpack.c.bf16 %v967, %v967
            %v1060 = vpack.c.bf16 %v969, %v969
            %v1061 = vpack.c.bf16 %v972, %v972
            %v1062 = vpack.c.bf16 %v974, %v974
            %v1063 = vpack.c.bf16 %v977, %v977
            %v1064 = vpack.c.bf16 %v979, %v979
            %s1065 = sshra.s32 %s663, 3
            %s1066 = sand.u32 %s663, 7
            %s1067 = smul.addr %s1065, 4
            %s1068 = scalar_lea.vmem [#allocation3], %s1067
            %1069 = vst [vmem:[%s1068] sm:$0xf] %v1049
            %1070 = vst [vmem:[%s1068 + $0x4] sm:$0xf] %v1050
            %1071 = vst [vmem:[%s1068 + $0x8] sm:$0xf] %v1051
            %1072 = vst [vmem:[%s1068 + $0xc] sm:$0xf] %v1052
            %1073 = vst [vmem:[%s1068 + $0x10] sm:$0xf] %v1053
            %1074 = vst [vmem:[%s1068 + $0x14] sm:$0xf] %v1054
            %1075 = vst [vmem:[%s1068 + $0x18] sm:$0xf] %v1055
            %1076 = vst [vmem:[%s1068 + $0x1c] sm:$0xf] %v1056
            %1077 = vst [vmem:[%s1068 + $0x20] sm:$0xf] %v1057
            %1078 = vst [vmem:[%s1068 + $0x24] sm:$0xf] %v1058
            %1079 = vst [vmem:[%s1068 + $0x28] sm:$0xf] %v1059
            %1080 = vst [vmem:[%s1068 + $0x2c] sm:$0xf] %v1060
            %1081 = vst [vmem:[%s1068 + $0x30] sm:$0xf] %v1061
            %1082 = vst [vmem:[%s1068 + $0x34] sm:$0xf] %v1062
            %1083 = vst [vmem:[%s1068 + $0x38] sm:$0xf] %v1063
            %1084 = vst [vmem:[%s1068 + $0x3c] sm:$0xf] %v1064
          $region112: #{tpu_custom_call.1} parent=79 // loop_footer
            %s660 = sadd.s32 1, %s656
          $region113: #{tpu_custom_call.1} parent=79 // loop_footer_branch
            %655 = sbr.rel target = $region109
          $region114: #{tpu_custom_call.1} parent=79 // loop_exit
            _
        $region80: #{tpu_custom_call.1} parent=47 // pred_fallthru
          _
        %v1085 = vld [vmem:[#allocation4] sm:$0x1]
        %v1086 = vld [vmem:[#allocation5] sm:$0x1]
        %v1087 = vld [vmem:[%s353] sm:$0xff]
        %v1088 = vld [vmem:[%s353 + $0x8] sm:$0xff]
        %v1089 = vld [vmem:[%s353 + $0x10] sm:$0xff]
        %v1090 = vld [vmem:[%s353 + $0x18] sm:$0xff]
        %v1091 = vld [vmem:[%s353 + $0x20] sm:$0xff]
        %v1092 = vld [vmem:[%s353 + $0x28] sm:$0xff]
        %v1093 = vld [vmem:[%s353 + $0x30] sm:$0xff]
        %v1094 = vld [vmem:[%s353 + $0x38] sm:$0xff]
        %v1095 = vld [vmem:[%s353 + $0x40] sm:$0xff]
        %v1096 = vld [vmem:[%s353 + $0x48] sm:$0xff]
        %v1097 = vld [vmem:[%s353 + $0x50] sm:$0xff]
        %v1098 = vld [vmem:[%s353 + $0x58] sm:$0xff]
        %v1099 = vld [vmem:[%s353 + $0x60] sm:$0xff]
        %v1100 = vld [vmem:[%s353 + $0x68] sm:$0xff]
        %v1101 = vld [vmem:[%s353 + $0x70] sm:$0xff]
        %v1102 = vld [vmem:[%s353 + $0x78] sm:$0xff]
        %v1104 = vperm.slane %v1085, 0
        %v1106 = vmul.f32 %v1087, %v1104
        %v1107 = vmul.f32 %v1088, %v1104
        %v1108 = vmul.f32 %v1089, %v1104
        %v1109 = vmul.f32 %v1090, %v1104
        %v1110 = vmul.f32 %v1091, %v1104
        %v1111 = vmul.f32 %v1092, %v1104
        %v1112 = vmul.f32 %v1093, %v1104
        %v1113 = vmul.f32 %v1094, %v1104
        %v1114 = vmul.f32 %v1095, %v1104
        %v1115 = vmul.f32 %v1096, %v1104
        %v1116 = vmul.f32 %v1097, %v1104
        %v1117 = vmul.f32 %v1098, %v1104
        %v1118 = vmul.f32 %v1099, %v1104
        %v1119 = vmul.f32 %v1100, %v1104
        %v1120 = vmul.f32 %v1101, %v1104
        %v1121 = vmul.f32 %v1102, %v1104
        %v1123 = vperm.slane %v1086, 0
        %v1125 = vadd.f32 %v1106, %v1123
        %v1126 = vadd.f32 %v1107, %v1123
        %v1127 = vadd.f32 %v1108, %v1123
        %v1128 = vadd.f32 %v1109, %v1123
        %v1129 = vadd.f32 %v1110, %v1123
        %v1130 = vadd.f32 %v1111, %v1123
        %v1131 = vadd.f32 %v1112, %v1123
        %v1132 = vadd.f32 %v1113, %v1123
        %v1133 = vadd.f32 %v1114, %v1123
        %v1134 = vadd.f32 %v1115, %v1123
        %v1135 = vadd.f32 %v1116, %v1123
        %v1136 = vadd.f32 %v1117, %v1123
        %v1137 = vadd.f32 %v1118, %v1123
        %v1138 = vadd.f32 %v1119, %v1123
        %v1139 = vadd.f32 %v1120, %v1123
        %v1140 = vadd.f32 %v1121, %v1123
        %v1141 = vpack.c.bf16 %v1126, %v1125
        %v1142 = vpack.c.bf16 %v1128, %v1127
        %v1143 = vpack.c.bf16 %v1130, %v1129
        %v1144 = vpack.c.bf16 %v1132, %v1131
        %v1145 = vpack.c.bf16 %v1134, %v1133
        %v1146 = vpack.c.bf16 %v1136, %v1135
        %v1147 = vpack.c.bf16 %v1138, %v1137
        %v1148 = vpack.c.bf16 %v1140, %v1139
        %v1149 = vld [vmem:[#allocation14 + $0x2] sm:$0x1]
        %v1150 = vld [vmem:[#allocation17] sm:$0xf]
        %v1151 = vld [vmem:[#allocation17 + $0x4] sm:$0xf]
        %v1152 = vld [vmem:[#allocation17 + $0x8] sm:$0xf]
        %v1153 = vld [vmem:[#allocation17 + $0xc] sm:$0xf]
        %v1154 = vld [vmem:[#allocation17 + $0x10] sm:$0xf]
        %v1155 = vld [vmem:[#allocation17 + $0x14] sm:$0xf]
        %v1156 = vld [vmem:[#allocation17 + $0x18] sm:$0xf]
        %v1157 = vld [vmem:[#allocation17 + $0x1c] sm:$0xf]
        %v1158 = vld [vmem:[#allocation17 + $0x20] sm:$0xf]
        %v1159 = vld [vmem:[#allocation17 + $0x24] sm:$0xf]
        %v1160 = vld [vmem:[#allocation17 + $0x28] sm:$0xf]
        %v1161 = vld [vmem:[#allocation17 + $0x2c] sm:$0xf]
        %v1162 = vld [vmem:[#allocation17 + $0x30] sm:$0xf]
        %v1163 = vld [vmem:[#allocation17 + $0x34] sm:$0xf]
        %v1164 = vld [vmem:[#allocation17 + $0x38] sm:$0xf]
        %v1165 = vld [vmem:[#allocation17 + $0x3c] sm:$0xf]
        %v1166 = vperm.slane %v1149, 0
        %v1183 = vunpack.c.l.b16 %v1150
        %v1184 = vunpack.c.l.b16 %v1151
        %v1185 = vunpack.c.l.b16 %v1152
        %v1186 = vunpack.c.l.b16 %v1153
        %v1187 = vunpack.c.l.b16 %v1154
        %v1188 = vunpack.c.l.b16 %v1155
        %v1189 = vunpack.c.l.b16 %v1156
        %v1190 = vunpack.c.l.b16 %v1157
        %v1191 = vunpack.c.l.b16 %v1158
        %v1192 = vunpack.c.l.b16 %v1159
        %v1193 = vunpack.c.l.b16 %v1160
        %v1194 = vunpack.c.l.b16 %v1161
        %v1195 = vunpack.c.l.b16 %v1162
        %v1196 = vunpack.c.l.b16 %v1163
        %v1197 = vunpack.c.l.b16 %v1164
        %v1198 = vunpack.c.l.b16 %v1165
        %v1199 = vpack.c.b16 %v1184, %v1183
        %v1200 = vpack.c.b16 %v1186, %v1185
        %v1201 = vpack.c.b16 %v1188, %v1187
        %v1202 = vpack.c.b16 %v1190, %v1189
        %v1203 = vpack.c.b16 %v1192, %v1191
        %v1204 = vpack.c.b16 %v1194, %v1193
        %v1205 = vpack.c.b16 %v1196, %v1195
        %v1206 = vpack.c.b16 %v1198, %v1197
        %1215 = vmatpush.bf16.msra.mxu0 %v1206
        %1216 = vmatpush.bf16.msra.mxu0 %v1205
        %1217 = vmatpush.bf16.msra.mxu0 %v1204
        %1218 = vmatpush.bf16.msra.mxu0 %v1203
        %1219 = vmatpush.bf16.msra.mxu0 %v1202
        %1220 = vmatpush.bf16.msra.mxu0 %v1201
        %1221 = vmatpush.bf16.msra.mxu0 %v1200
        %1222 = vmatpush.bf16.msra.mxu0 %v1199
        %1223 = vmatmul.bf16.gmra.mxu0 %v1141
        %v1224 = vpop.f32.mrf.mxu0
        %v1225 = vadd.f32 %v1166, %v1224
        %v1226 = vpop.f32.mrf.mxu0
        %v1227 = vadd.f32 %v1166, %v1226
        %1228 = vmatmul.bf16.gmra.mxu0 %v1142
        %v1229 = vpop.f32.mrf.mxu0
        %v1230 = vadd.f32 %v1166, %v1229
        %v1231 = vpop.f32.mrf.mxu0
        %v1232 = vadd.f32 %v1166, %v1231
        %1233 = vmatmul.bf16.gmra.mxu0 %v1143
        %v1234 = vpop.f32.mrf.mxu0
        %v1235 = vadd.f32 %v1166, %v1234
        %v1236 = vpop.f32.mrf.mxu0
        %v1237 = vadd.f32 %v1166, %v1236
        %1238 = vmatmul.bf16.gmra.mxu0 %v1144
        %v1239 = vpop.f32.mrf.mxu0
        %v1240 = vadd.f32 %v1166, %v1239
        %v1241 = vpop.f32.mrf.mxu0
        %v1242 = vadd.f32 %v1166, %v1241
        %1243 = vmatmul.bf16.gmra.mxu0 %v1145
        %v1244 = vpop.f32.mrf.mxu0
        %v1245 = vadd.f32 %v1166, %v1244
        %v1246 = vpop.f32.mrf.mxu0
        %v1247 = vadd.f32 %v1166, %v1246
        %1248 = vmatmul.bf16.gmra.mxu0 %v1146
        %v1249 = vpop.f32.mrf.mxu0
        %v1250 = vadd.f32 %v1166, %v1249
        %v1251 = vpop.f32.mrf.mxu0
        %v1252 = vadd.f32 %v1166, %v1251
        %1253 = vmatmul.bf16.gmra.mxu0 %v1147
        %v1254 = vpop.f32.mrf.mxu0
        %v1255 = vadd.f32 %v1166, %v1254
        %v1256 = vpop.f32.mrf.mxu0
        %v1257 = vadd.f32 %v1166, %v1256
        %1258 = vmatmul.bf16.gmra.mxu0 %v1148
        %v1259 = vpop.f32.mrf.mxu0
        %v1260 = vadd.f32 %v1166, %v1259
        %v1261 = vpop.f32.mrf.mxu0
        %v1262 = vadd.f32 %v1166, %v1261
        %1263 = vdwg.mxu0
        %v1264 = vpack.c.bf16 %v1227, %v1225
        %v1265 = vpack.c.bf16 %v1232, %v1230
        %v1266 = vpack.c.bf16 %v1237, %v1235
        %v1267 = vpack.c.bf16 %v1242, %v1240
        %v1268 = vpack.c.bf16 %v1247, %v1245
        %v1269 = vpack.c.bf16 %v1252, %v1250
        %v1270 = vpack.c.bf16 %v1257, %v1255
        %v1271 = vpack.c.bf16 %v1262, %v1260
        %vm1272 = vcmask 7168
        %1273 = vst.msk [vmem:[#allocation8] sm:$0xff] %vm1272, -inf
        %1274 = vst.msk [vmem:[#allocation8 + $0x8] sm:$0xff] %vm1272, -inf
        %1275 = vst.msk [vmem:[#allocation8 + $0x10] sm:$0xff] %vm1272, -inf
        %1276 = vst.msk [vmem:[#allocation8 + $0x18] sm:$0xff] %vm1272, -inf
        %1277 = vst.msk [vmem:[#allocation8 + $0x20] sm:$0xff] %vm1272, -inf
        %1278 = vst.msk [vmem:[#allocation8 + $0x28] sm:$0xff] %vm1272, -inf
        %1279 = vst.msk [vmem:[#allocation8 + $0x30] sm:$0xff] %vm1272, -inf
        %1280 = vst.msk [vmem:[#allocation8 + $0x38] sm:$0xff] %vm1272, -inf
        %1281 = vst.msk [vmem:[#allocation8 + $0x40] sm:$0xff] %vm1272, -inf
        %1282 = vst.msk [vmem:[#allocation8 + $0x48] sm:$0xff] %vm1272, -inf
        %1283 = vst.msk [vmem:[#allocation8 + $0x50] sm:$0xff] %vm1272, -inf
        %1284 = vst.msk [vmem:[#allocation8 + $0x58] sm:$0xff] %vm1272, -inf
        %1285 = vst.msk [vmem:[#allocation8 + $0x60] sm:$0xff] %vm1272, -inf
        %1286 = vst.msk [vmem:[#allocation8 + $0x68] sm:$0xff] %vm1272, -inf
        %1287 = vst.msk [vmem:[#allocation8 + $0x70] sm:$0xff] %vm1272, -inf
        %1288 = vst.msk [vmem:[#allocation8 + $0x78] sm:$0xff] %vm1272, -inf
        %1289 = vst.msk [vmem:[#allocation9] sm:$0xff] %vm1272, 0.0
        %1290 = vst.msk [vmem:[#allocation9 + $0x8] sm:$0xff] %vm1272, 0.0
        %1291 = vst.msk [vmem:[#allocation9 + $0x10] sm:$0xff] %vm1272, 0.0
        %1292 = vst.msk [vmem:[#allocation9 + $0x18] sm:$0xff] %vm1272, 0.0
        %1293 = vst.msk [vmem:[#allocation9 + $0x20] sm:$0xff] %vm1272, 0.0
        %1294 = vst.msk [vmem:[#allocation9 + $0x28] sm:$0xff] %vm1272, 0.0
        %1295 = vst.msk [vmem:[#allocation9 + $0x30] sm:$0xff] %vm1272, 0.0
        %1296 = vst.msk [vmem:[#allocation9 + $0x38] sm:$0xff] %vm1272, 0.0
        %1297 = vst.msk [vmem:[#allocation9 + $0x40] sm:$0xff] %vm1272, 0.0
        %1298 = vst.msk [vmem:[#allocation9 + $0x48] sm:$0xff] %vm1272, 0.0
        %1299 = vst.msk [vmem:[#allocation9 + $0x50] sm:$0xff] %vm1272, 0.0
        %1300 = vst.msk [vmem:[#allocation9 + $0x58] sm:$0xff] %vm1272, 0.0
        %1301 = vst.msk [vmem:[#allocation9 + $0x60] sm:$0xff] %vm1272, 0.0
        %1302 = vst.msk [vmem:[#allocation9 + $0x68] sm:$0xff] %vm1272, 0.0
        %1303 = vst.msk [vmem:[#allocation9 + $0x70] sm:$0xff] %vm1272, 0.0
        %1304 = vst.msk [vmem:[#allocation9 + $0x78] sm:$0xff] %vm1272, 0.0
        %1305 = vst [vmem:[#allocation10] sm:$0xff] 0.0
        %1306 = vst [vmem:[#allocation10 + $0x8] sm:$0xff] 0.0
        %1307 = vst [vmem:[#allocation10 + $0x10] sm:$0xff] 0.0
        %1308 = vst [vmem:[#allocation10 + $0x18] sm:$0xff] 0.0
        %1309 = vst [vmem:[#allocation10 + $0x20] sm:$0xff] 0.0
        %1310 = vst [vmem:[#allocation10 + $0x28] sm:$0xff] 0.0
        %1311 = vst [vmem:[#allocation10 + $0x30] sm:$0xff] 0.0
        %1312 = vst [vmem:[#allocation10 + $0x38] sm:$0xff] 0.0
        %1313 = vst [vmem:[#allocation10 + $0x40] sm:$0xff] 0.0
        %1314 = vst [vmem:[#allocation10 + $0x48] sm:$0xff] 0.0
        %1315 = vst [vmem:[#allocation10 + $0x50] sm:$0xff] 0.0
        %1316 = vst [vmem:[#allocation10 + $0x58] sm:$0xff] 0.0
        %1317 = vst [vmem:[#allocation10 + $0x60] sm:$0xff] 0.0
        %1318 = vst [vmem:[#allocation10 + $0x68] sm:$0xff] 0.0
        %1319 = vst [vmem:[#allocation10 + $0x70] sm:$0xff] 0.0
        %1320 = vst [vmem:[#allocation10 + $0x78] sm:$0xff] 0.0
        loop: start=0, step=1, limit=2
        $region123: #{tpu_custom_call.1} parent=47 // loop_pre_header
          _
        $region124: #{tpu_custom_call.1} parent=47 // loop_header
          %s1322 = sphi 0, %s1326
          %p1323 = scmp.ge.s32.totalorder %s1322, 2
        $region125: #{tpu_custom_call.1} parent=47 // loop_header_branch
          %1325 = sbr.rel (%p1323) target = $region129
        $region126: #{tpu_custom_call.1} parent=47 // loop_body
          %s1327 = smul.u32 %s1322, 128
          %s1328 = sshra.s32 %s1327, 7
          %s1329 = sand.u32 %s1327, 127
          %s1330 = smul.addr %s1328, 4
          %s1331 = scalar_lea.vmem [#allocation2], %s1330
          %v1332 = vld [vmem:[%s1331] sm:$0xf]
          %v1333 = vld [vmem:[%s1331 + $0x8] sm:$0xf]
          %v1334 = vld [vmem:[%s1331 + $0x10] sm:$0xf]
          %v1335 = vld [vmem:[%s1331 + $0x18] sm:$0xf]
          %v1336 = vld [vmem:[%s1331 + $0x20] sm:$0xf]
          %v1337 = vld [vmem:[%s1331 + $0x28] sm:$0xf]
          %v1338 = vld [vmem:[%s1331 + $0x30] sm:$0xf]
          %v1339 = vld [vmem:[%s1331 + $0x38] sm:$0xf]
          %v1340 = vld [vmem:[%s1331 + $0x40] sm:$0xf]
          %v1341 = vld [vmem:[%s1331 + $0x48] sm:$0xf]
          %v1342 = vld [vmem:[%s1331 + $0x50] sm:$0xf]
          %v1343 = vld [vmem:[%s1331 + $0x58] sm:$0xf]
          %v1344 = vld [vmem:[%s1331 + $0x60] sm:$0xf]
          %v1345 = vld [vmem:[%s1331 + $0x68] sm:$0xf]
          %v1346 = vld [vmem:[%s1331 + $0x70] sm:$0xf]
          %v1347 = vld [vmem:[%s1331 + $0x78] sm:$0xf]
          %s1348 = sshra.s32 %s1327, 3
          %s1349 = sand.u32 %s1327, 7
          %s1350 = smul.addr %s1348, 4
          %s1351 = scalar_lea.vmem [#allocation3], %s1350
          %v1352 = vld [vmem:[%s1351] sm:$0xf]
          %v1353 = vld [vmem:[%s1351 + $0x4] sm:$0xf]
          %v1354 = vld [vmem:[%s1351 + $0x8] sm:$0xf]
          %v1355 = vld [vmem:[%s1351 + $0xc] sm:$0xf]
          %v1356 = vld [vmem:[%s1351 + $0x10] sm:$0xf]
          %v1357 = vld [vmem:[%s1351 + $0x14] sm:$0xf]
          %v1358 = vld [vmem:[%s1351 + $0x18] sm:$0xf]
          %v1359 = vld [vmem:[%s1351 + $0x1c] sm:$0xf]
          %v1360 = vld [vmem:[%s1351 + $0x20] sm:$0xf]
          %v1361 = vld [vmem:[%s1351 + $0x24] sm:$0xf]
          %v1362 = vld [vmem:[%s1351 + $0x28] sm:$0xf]
          %v1363 = vld [vmem:[%s1351 + $0x2c] sm:$0xf]
          %v1364 = vld [vmem:[%s1351 + $0x30] sm:$0xf]
          %v1365 = vld [vmem:[%s1351 + $0x34] sm:$0xf]
          %v1366 = vld [vmem:[%s1351 + $0x38] sm:$0xf]
          %v1367 = vld [vmem:[%s1351 + $0x3c] sm:$0xf]
          %v1384 = vunpack.c.l.b16 %v1332
          %v1385 = vunpack.c.l.b16 %v1333
          %v1386 = vunpack.c.l.b16 %v1334
          %v1387 = vunpack.c.l.b16 %v1335
          %v1388 = vunpack.c.l.b16 %v1336
          %v1389 = vunpack.c.l.b16 %v1337
          %v1390 = vunpack.c.l.b16 %v1338
          %v1391 = vunpack.c.l.b16 %v1339
          %v1392 = vunpack.c.l.b16 %v1340
          %v1393 = vunpack.c.l.b16 %v1341
          %v1394 = vunpack.c.l.b16 %v1342
          %v1395 = vunpack.c.l.b16 %v1343
          %v1396 = vunpack.c.l.b16 %v1344
          %v1397 = vunpack.c.l.b16 %v1345
          %v1398 = vunpack.c.l.b16 %v1346
          %v1399 = vunpack.c.l.b16 %v1347
          %v1400 = vpack.c.b16 %v1385, %v1384
          %v1401 = vpack.c.b16 %v1387, %v1386
          %v1402 = vpack.c.b16 %v1389, %v1388
          %v1403 = vpack.c.b16 %v1391, %v1390
          %v1404 = vpack.c.b16 %v1393, %v1392
          %v1405 = vpack.c.b16 %v1395, %v1394
          %v1406 = vpack.c.b16 %v1397, %v1396
          %v1407 = vpack.c.b16 %v1399, %v1398
          %1416 = vmatpush.bf16.msra.mxu0 %v1407
          %1417 = vmatpush.bf16.msra.mxu0 %v1406
          %1418 = vmatpush.bf16.msra.mxu0 %v1405
          %1419 = vmatpush.bf16.msra.mxu0 %v1404
          %1420 = vmatpush.bf16.msra.mxu0 %v1403
          %1421 = vmatpush.bf16.msra.mxu0 %v1402
          %1422 = vmatpush.bf16.msra.mxu0 %v1401
          %1423 = vmatpush.bf16.msra.mxu0 %v1400
          %1424 = vmatmul.bf16.gmra.mxu0 %v1264
          %v1425 = vpop.f32.mrf.mxu0
          %v1426 = vadd.f32 0.0, %v1425
          %v1427 = vpop.f32.mrf.mxu0
          %v1428 = vadd.f32 0.0, %v1427
          %1429 = vmatmul.bf16.gmra.mxu0 %v1265
          %v1430 = vpop.f32.mrf.mxu0
          %v1431 = vadd.f32 0.0, %v1430
          %v1432 = vpop.f32.mrf.mxu0
          %v1433 = vadd.f32 0.0, %v1432
          %1434 = vmatmul.bf16.gmra.mxu0 %v1266
          %v1435 = vpop.f32.mrf.mxu0
          %v1436 = vadd.f32 0.0, %v1435
          %v1437 = vpop.f32.mrf.mxu0
          %v1438 = vadd.f32 0.0, %v1437
          %1439 = vmatmul.bf16.gmra.mxu0 %v1267
          %v1440 = vpop.f32.mrf.mxu0
          %v1441 = vadd.f32 0.0, %v1440
          %v1442 = vpop.f32.mrf.mxu0
          %v1443 = vadd.f32 0.0, %v1442
          %1444 = vmatmul.bf16.gmra.mxu0 %v1268
          %v1445 = vpop.f32.mrf.mxu0
          %v1446 = vadd.f32 0.0, %v1445
          %v1447 = vpop.f32.mrf.mxu0
          %v1448 = vadd.f32 0.0, %v1447
          %1449 = vmatmul.bf16.gmra.mxu0 %v1269
          %v1450 = vpop.f32.mrf.mxu0
          %v1451 = vadd.f32 0.0, %v1450
          %v1452 = vpop.f32.mrf.mxu0
          %v1453 = vadd.f32 0.0, %v1452
          %1454 = vmatmul.bf16.gmra.mxu0 %v1270
          %v1455 = vpop.f32.mrf.mxu0
          %v1456 = vadd.f32 0.0, %v1455
          %v1457 = vpop.f32.mrf.mxu0
          %v1458 = vadd.f32 0.0, %v1457
          %1459 = vmatmul.bf16.gmra.mxu0 %v1271
          %v1460 = vpop.f32.mrf.mxu0
          %v1461 = vadd.f32 0.0, %v1460
          %v1462 = vpop.f32.mrf.mxu0
          %v1463 = vadd.f32 0.0, %v1462
          %1464 = vdwg.mxu0
          %v1465 = vld [vmem:[#allocation8] sm:$0xff]
          %v1466 = vld [vmem:[#allocation8 + $0x8] sm:$0xff]
          %v1467 = vld [vmem:[#allocation8 + $0x10] sm:$0xff]
          %v1468 = vld [vmem:[#allocation8 + $0x18] sm:$0xff]
          %v1469 = vld [vmem:[#allocation8 + $0x20] sm:$0xff]
          %v1470 = vld [vmem:[#allocation8 + $0x28] sm:$0xff]
          %v1471 = vld [vmem:[#allocation8 + $0x30] sm:$0xff]
          %v1472 = vld [vmem:[#allocation8 + $0x38] sm:$0xff]
          %v1473 = vld [vmem:[#allocation8 + $0x40] sm:$0xff]
          %v1474 = vld [vmem:[#allocation8 + $0x48] sm:$0xff]
          %v1475 = vld [vmem:[#allocation8 + $0x50] sm:$0xff]
          %v1476 = vld [vmem:[#allocation8 + $0x58] sm:$0xff]
          %v1477 = vld [vmem:[#allocation8 + $0x60] sm:$0xff]
          %v1478 = vld [vmem:[#allocation8 + $0x68] sm:$0xff]
          %v1479 = vld [vmem:[#allocation8 + $0x70] sm:$0xff]
          %v1480 = vld [vmem:[#allocation8 + $0x78] sm:$0xff]
          %1481 = vmax.xlane.f32.xlu0 %v1426
          %v1482 = vpop.xlane.xlu0 %1481
          %1483 = vmax.xlane.f32.xlu0 %v1428
          %v1484 = vpop.xlane.xlu0 %1483
          %1485 = vmax.xlane.f32.xlu0 %v1431
          %v1486 = vpop.xlane.xlu0 %1485
          %1487 = vmax.xlane.f32.xlu0 %v1433
          %v1488 = vpop.xlane.xlu0 %1487
          %1489 = vmax.xlane.f32.xlu0 %v1436
          %v1490 = vpop.xlane.xlu0 %1489
          %1491 = vmax.xlane.f32.xlu0 %v1438
          %v1492 = vpop.xlane.xlu0 %1491
          %1493 = vmax.xlane.f32.xlu0 %v1441
          %v1494 = vpop.xlane.xlu0 %1493
          %1495 = vmax.xlane.f32.xlu0 %v1443
          %v1496 = vpop.xlane.xlu0 %1495
          %1497 = vmax.xlane.f32.xlu0 %v1446
          %v1498 = vpop.xlane.xlu0 %1497
          %1499 = vmax.xlane.f32.xlu0 %v1448
          %v1500 = vpop.xlane.xlu0 %1499
          %1501 = vmax.xlane.f32.xlu0 %v1451
          %v1502 = vpop.xlane.xlu0 %1501
          %1503 = vmax.xlane.f32.xlu0 %v1453
          %v1504 = vpop.xlane.xlu0 %1503
          %1505 = vmax.xlane.f32.xlu0 %v1456
          %v1506 = vpop.xlane.xlu0 %1505
          %1507 = vmax.xlane.f32.xlu0 %v1458
          %v1508 = vpop.xlane.xlu0 %1507
          %1509 = vmax.xlane.f32.xlu0 %v1461
          %v1510 = vpop.xlane.xlu0 %1509
          %1511 = vmax.xlane.f32.xlu0 %v1463
          %v1512 = vpop.xlane.xlu0 %1511
          %v1513 = vmax.f32 %v1465, %v1482
          %v1514 = vmax.f32 %v1466, %v1484
          %v1515 = vmax.f32 %v1467, %v1486
          %v1516 = vmax.f32 %v1468, %v1488
          %v1517 = vmax.f32 %v1469, %v1490
          %v1518 = vmax.f32 %v1470, %v1492
          %v1519 = vmax.f32 %v1471, %v1494
          %v1520 = vmax.f32 %v1472, %v1496
          %v1521 = vmax.f32 %v1473, %v1498
          %v1522 = vmax.f32 %v1474, %v1500
          %v1523 = vmax.f32 %v1475, %v1502
          %v1524 = vmax.f32 %v1476, %v1504
          %v1525 = vmax.f32 %v1477, %v1506
          %v1526 = vmax.f32 %v1478, %v1508
          %v1527 = vmax.f32 %v1479, %v1510
          %v1528 = vmax.f32 %v1480, %v1512
          %v1529 = vsub.f32 %v1465, %v1513
          %v1530 = vsub.f32 %v1466, %v1514
          %v1531 = vsub.f32 %v1467, %v1515
          %v1532 = vsub.f32 %v1468, %v1516
          %v1533 = vsub.f32 %v1469, %v1517
          %v1534 = vsub.f32 %v1470, %v1518
          %v1535 = vsub.f32 %v1471, %v1519
          %v1536 = vsub.f32 %v1472, %v1520
          %v1537 = vsub.f32 %v1473, %v1521
          %v1538 = vsub.f32 %v1474, %v1522
          %v1539 = vsub.f32 %v1475, %v1523
          %v1540 = vsub.f32 %v1476, %v1524
          %v1541 = vsub.f32 %v1477, %v1525
          %v1542 = vsub.f32 %v1478, %v1526
          %v1543 = vsub.f32 %v1479, %v1527
          %v1544 = vsub.f32 %v1480, %v1528
          %v1545 = vmul.f32 %v1529, 1.442695
          %v1546 = vpow.pop %v1545
          %v1547 = vmul.f32 %v1530, 1.442695
          %v1548 = vpow.pop %v1547
          %v1549 = vmul.f32 %v1531, 1.442695
          %v1550 = vpow.pop %v1549
          %v1551 = vmul.f32 %v1532, 1.442695
          %v1552 = vpow.pop %v1551
          %v1553 = vmul.f32 %v1533, 1.442695
          %v1554 = vpow.pop %v1553
          %v1555 = vmul.f32 %v1534, 1.442695
          %v1556 = vpow.pop %v1555
          %v1557 = vmul.f32 %v1535, 1.442695
          %v1558 = vpow.pop %v1557
          %v1559 = vmul.f32 %v1536, 1.442695
          %v1560 = vpow.pop %v1559
          %v1561 = vmul.f32 %v1537, 1.442695
          %v1562 = vpow.pop %v1561
          %v1563 = vmul.f32 %v1538, 1.442695
          %v1564 = vpow.pop %v1563
          %v1565 = vmul.f32 %v1539, 1.442695
          %v1566 = vpow.pop %v1565
          %v1567 = vmul.f32 %v1540, 1.442695
          %v1568 = vpow.pop %v1567
          %v1569 = vmul.f32 %v1541, 1.442695
          %v1570 = vpow.pop %v1569
          %v1571 = vmul.f32 %v1542, 1.442695
          %v1572 = vpow.pop %v1571
          %v1573 = vmul.f32 %v1543, 1.442695
          %v1574 = vpow.pop %v1573
          %v1575 = vmul.f32 %v1544, 1.442695
          %v1576 = vpow.pop %v1575
          %1578 = vset.pattern.permute.xlu0 0
          %1579 = vperm.xlu0 %1578, %v1513
          %v1580 = vpop.permute.xlu0 %1579
          %1583 = vset.pattern.permute.xlu0 0
          %1584 = vperm.xlu0 %1583, %v1514
          %v1585 = vpop.permute.xlu0 %1584
          %1588 = vset.pattern.permute.xlu0 0
          %1589 = vperm.xlu0 %1588, %v1515
          %v1590 = vpop.permute.xlu0 %1589
          %1593 = vset.pattern.permute.xlu0 0
          %1594 = vperm.xlu0 %1593, %v1516
          %v1595 = vpop.permute.xlu0 %1594
          %1598 = vset.pattern.permute.xlu0 0
          %1599 = vperm.xlu0 %1598, %v1517
          %v1600 = vpop.permute.xlu0 %1599
          %1603 = vset.pattern.permute.xlu0 0
          %1604 = vperm.xlu0 %1603, %v1518
          %v1605 = vpop.permute.xlu0 %1604
          %1608 = vset.pattern.permute.xlu0 0
          %1609 = vperm.xlu0 %1608, %v1519
          %v1610 = vpop.permute.xlu0 %1609
          %1613 = vset.pattern.permute.xlu0 0
          %1614 = vperm.xlu0 %1613, %v1520
          %v1615 = vpop.permute.xlu0 %1614
          %1618 = vset.pattern.permute.xlu0 0
          %1619 = vperm.xlu0 %1618, %v1521
          %v1620 = vpop.permute.xlu0 %1619
          %1623 = vset.pattern.permute.xlu0 0
          %1624 = vperm.xlu0 %1623, %v1522
          %v1625 = vpop.permute.xlu0 %1624
          %1628 = vset.pattern.permute.xlu0 0
          %1629 = vperm.xlu0 %1628, %v1523
          %v1630 = vpop.permute.xlu0 %1629
          %1633 = vset.pattern.permute.xlu0 0
          %1634 = vperm.xlu0 %1633, %v1524
          %v1635 = vpop.permute.xlu0 %1634
          %1638 = vset.pattern.permute.xlu0 0
          %1639 = vperm.xlu0 %1638, %v1525
          %v1640 = vpop.permute.xlu0 %1639
          %1643 = vset.pattern.permute.xlu0 0
          %1644 = vperm.xlu0 %1643, %v1526
          %v1645 = vpop.permute.xlu0 %1644
          %1648 = vset.pattern.permute.xlu0 0
          %1649 = vperm.xlu0 %1648, %v1527
          %v1650 = vpop.permute.xlu0 %1649
          %1653 = vset.pattern.permute.xlu0 0
          %1654 = vperm.xlu0 %1653, %v1528
          %v1655 = vpop.permute.xlu0 %1654
          %v1657 = vsub.f32 %v1426, %v1580
          %v1658 = vsub.f32 %v1428, %v1585
          %v1659 = vsub.f32 %v1431, %v1590
          %v1660 = vsub.f32 %v1433, %v1595
          %v1661 = vsub.f32 %v1436, %v1600
          %v1662 = vsub.f32 %v1438, %v1605
          %v1663 = vsub.f32 %v1441, %v1610
          %v1664 = vsub.f32 %v1443, %v1615
          %v1665 = vsub.f32 %v1446, %v1620
          %v1666 = vsub.f32 %v1448, %v1625
          %v1667 = vsub.f32 %v1451, %v1630
          %v1668 = vsub.f32 %v1453, %v1635
          %v1669 = vsub.f32 %v1456, %v1640
          %v1670 = vsub.f32 %v1458, %v1645
          %v1671 = vsub.f32 %v1461, %v1650
          %v1672 = vsub.f32 %v1463, %v1655
          %v1673 = vmul.f32 %v1657, 1.442695
          %v1674 = vpow.pop %v1673
          %v1675 = vmul.f32 %v1658, 1.442695
          %v1676 = vpow.pop %v1675
          %v1677 = vmul.f32 %v1659, 1.442695
          %v1678 = vpow.pop %v1677
          %v1679 = vmul.f32 %v1660, 1.442695
          %v1680 = vpow.pop %v1679
          %v1681 = vmul.f32 %v1661, 1.442695
          %v1682 = vpow.pop %v1681
          %v1683 = vmul.f32 %v1662, 1.442695
          %v1684 = vpow.pop %v1683
          %v1685 = vmul.f32 %v1663, 1.442695
          %v1686 = vpow.pop %v1685
          %v1687 = vmul.f32 %v1664, 1.442695
          %v1688 = vpow.pop %v1687
          %v1689 = vmul.f32 %v1665, 1.442695
          %v1690 = vpow.pop %v1689
          %v1691 = vmul.f32 %v1666, 1.442695
          %v1692 = vpow.pop %v1691
          %v1693 = vmul.f32 %v1667, 1.442695
          %v1694 = vpow.pop %v1693
          %v1695 = vmul.f32 %v1668, 1.442695
          %v1696 = vpow.pop %v1695
          %v1697 = vmul.f32 %v1669, 1.442695
          %v1698 = vpow.pop %v1697
          %v1699 = vmul.f32 %v1670, 1.442695
          %v1700 = vpow.pop %v1699
          %v1701 = vmul.f32 %v1671, 1.442695
          %v1702 = vpow.pop %v1701
          %v1703 = vmul.f32 %v1672, 1.442695
          %v1704 = vpow.pop %v1703
          %v1705 = vld [vmem:[#allocation9] sm:$0xff]
          %v1706 = vld [vmem:[#allocation9 + $0x8] sm:$0xff]
          %v1707 = vld [vmem:[#allocation9 + $0x10] sm:$0xff]
          %v1708 = vld [vmem:[#allocation9 + $0x18] sm:$0xff]
          %v1709 = vld [vmem:[#allocation9 + $0x20] sm:$0xff]
          %v1710 = vld [vmem:[#allocation9 + $0x28] sm:$0xff]
          %v1711 = vld [vmem:[#allocation9 + $0x30] sm:$0xff]
          %v1712 = vld [vmem:[#allocation9 + $0x38] sm:$0xff]
          %v1713 = vld [vmem:[#allocation9 + $0x40] sm:$0xff]
          %v1714 = vld [vmem:[#allocation9 + $0x48] sm:$0xff]
          %v1715 = vld [vmem:[#allocation9 + $0x50] sm:$0xff]
          %v1716 = vld [vmem:[#allocation9 + $0x58] sm:$0xff]
          %v1717 = vld [vmem:[#allocation9 + $0x60] sm:$0xff]
          %v1718 = vld [vmem:[#allocation9 + $0x68] sm:$0xff]
          %v1719 = vld [vmem:[#allocation9 + $0x70] sm:$0xff]
          %v1720 = vld [vmem:[#allocation9 + $0x78] sm:$0xff]
          %v1721 = vmul.f32 %v1546, %v1705
          %v1722 = vmul.f32 %v1548, %v1706
          %v1723 = vmul.f32 %v1550, %v1707
          %v1724 = vmul.f32 %v1552, %v1708
          %v1725 = vmul.f32 %v1554, %v1709
          %v1726 = vmul.f32 %v1556, %v1710
          %v1727 = vmul.f32 %v1558, %v1711
          %v1728 = vmul.f32 %v1560, %v1712
          %v1729 = vmul.f32 %v1562, %v1713
          %v1730 = vmul.f32 %v1564, %v1714
          %v1731 = vmul.f32 %v1566, %v1715
          %v1732 = vmul.f32 %v1568, %v1716
          %v1733 = vmul.f32 %v1570, %v1717
          %v1734 = vmul.f32 %v1572, %v1718
          %v1735 = vmul.f32 %v1574, %v1719
          %v1736 = vmul.f32 %v1576, %v1720
          %1737 = vadd.xlane.f32.xlu0 %v1674
          %v1738 = vpop.xlane.xlu0 %1737
          %1739 = vadd.xlane.f32.xlu0 %v1676
          %v1740 = vpop.xlane.xlu0 %1739
          %1741 = vadd.xlane.f32.xlu0 %v1678
          %v1742 = vpop.xlane.xlu0 %1741
          %1743 = vadd.xlane.f32.xlu0 %v1680
          %v1744 = vpop.xlane.xlu0 %1743
          %1745 = vadd.xlane.f32.xlu0 %v1682
          %v1746 = vpop.xlane.xlu0 %1745
          %1747 = vadd.xlane.f32.xlu0 %v1684
          %v1748 = vpop.xlane.xlu0 %1747
          %1749 = vadd.xlane.f32.xlu0 %v1686
          %v1750 = vpop.xlane.xlu0 %1749
          %1751 = vadd.xlane.f32.xlu0 %v1688
          %v1752 = vpop.xlane.xlu0 %1751
          %1753 = vadd.xlane.f32.xlu0 %v1690
          %v1754 = vpop.xlane.xlu0 %1753
          %1755 = vadd.xlane.f32.xlu0 %v1692
          %v1756 = vpop.xlane.xlu0 %1755
          %1757 = vadd.xlane.f32.xlu0 %v1694
          %v1758 = vpop.xlane.xlu0 %1757
          %1759 = vadd.xlane.f32.xlu0 %v1696
          %v1760 = vpop.xlane.xlu0 %1759
          %1761 = vadd.xlane.f32.xlu0 %v1698
          %v1762 = vpop.xlane.xlu0 %1761
          %1763 = vadd.xlane.f32.xlu0 %v1700
          %v1764 = vpop.xlane.xlu0 %1763
          %1765 = vadd.xlane.f32.xlu0 %v1702
          %v1766 = vpop.xlane.xlu0 %1765
          %1767 = vadd.xlane.f32.xlu0 %v1704
          %v1768 = vpop.xlane.xlu0 %1767
          %v1769 = vadd.f32 %v1721, %v1738
          %v1770 = vadd.f32 %v1722, %v1740
          %v1771 = vadd.f32 %v1723, %v1742
          %v1772 = vadd.f32 %v1724, %v1744
          %v1773 = vadd.f32 %v1725, %v1746
          %v1774 = vadd.f32 %v1726, %v1748
          %v1775 = vadd.f32 %v1727, %v1750
          %v1776 = vadd.f32 %v1728, %v1752
          %v1777 = vadd.f32 %v1729, %v1754
          %v1778 = vadd.f32 %v1730, %v1756
          %v1779 = vadd.f32 %v1731, %v1758
          %v1780 = vadd.f32 %v1732, %v1760
          %v1781 = vadd.f32 %v1733, %v1762
          %v1782 = vadd.f32 %v1734, %v1764
          %v1783 = vadd.f32 %v1735, %v1766
          %v1784 = vadd.f32 %v1736, %v1768
          %1785 = vst.msk [vmem:[#allocation9] sm:$0xff] %vm1272, %v1769
          %1786 = vst.msk [vmem:[#allocation9 + $0x8] sm:$0xff] %vm1272, %v1770
          %1787 = vst.msk [vmem:[#allocation9 + $0x10] sm:$0xff] %vm1272, %v1771
          %1788 = vst.msk [vmem:[#allocation9 + $0x18] sm:$0xff] %vm1272, %v1772
          %1789 = vst.msk [vmem:[#allocation9 + $0x20] sm:$0xff] %vm1272, %v1773
          %1790 = vst.msk [vmem:[#allocation9 + $0x28] sm:$0xff] %vm1272, %v1774
          %1791 = vst.msk [vmem:[#allocation9 + $0x30] sm:$0xff] %vm1272, %v1775
          %1792 = vst.msk [vmem:[#allocation9 + $0x38] sm:$0xff] %vm1272, %v1776
          %1793 = vst.msk [vmem:[#allocation9 + $0x40] sm:$0xff] %vm1272, %v1777
          %1794 = vst.msk [vmem:[#allocation9 + $0x48] sm:$0xff] %vm1272, %v1778
          %1795 = vst.msk [vmem:[#allocation9 + $0x50] sm:$0xff] %vm1272, %v1779
          %1796 = vst.msk [vmem:[#allocation9 + $0x58] sm:$0xff] %vm1272, %v1780
          %1797 = vst.msk [vmem:[#allocation9 + $0x60] sm:$0xff] %vm1272, %v1781
          %1798 = vst.msk [vmem:[#allocation9 + $0x68] sm:$0xff] %vm1272, %v1782
          %1799 = vst.msk [vmem:[#allocation9 + $0x70] sm:$0xff] %vm1272, %v1783
          %1800 = vst.msk [vmem:[#allocation9 + $0x78] sm:$0xff] %vm1272, %v1784
          %v1801 = vld [vmem:[#allocation10] sm:$0xff]
          %v1802 = vld [vmem:[#allocation10 + $0x8] sm:$0xff]
          %v1803 = vld [vmem:[#allocation10 + $0x10] sm:$0xff]
          %v1804 = vld [vmem:[#allocation10 + $0x18] sm:$0xff]
          %v1805 = vld [vmem:[#allocation10 + $0x20] sm:$0xff]
          %v1806 = vld [vmem:[#allocation10 + $0x28] sm:$0xff]
          %v1807 = vld [vmem:[#allocation10 + $0x30] sm:$0xff]
          %v1808 = vld [vmem:[#allocation10 + $0x38] sm:$0xff]
          %v1809 = vld [vmem:[#allocation10 + $0x40] sm:$0xff]
          %v1810 = vld [vmem:[#allocation10 + $0x48] sm:$0xff]
          %v1811 = vld [vmem:[#allocation10 + $0x50] sm:$0xff]
          %v1812 = vld [vmem:[#allocation10 + $0x58] sm:$0xff]
          %v1813 = vld [vmem:[#allocation10 + $0x60] sm:$0xff]
          %v1814 = vld [vmem:[#allocation10 + $0x68] sm:$0xff]
          %v1815 = vld [vmem:[#allocation10 + $0x70] sm:$0xff]
          %v1816 = vld [vmem:[#allocation10 + $0x78] sm:$0xff]
          %1818 = vset.pattern.permute.xlu0 0
          %1819 = vperm.xlu0 %1818, %v1546
          %v1820 = vpop.permute.xlu0 %1819
          %1823 = vset.pattern.permute.xlu0 0
          %1824 = vperm.xlu0 %1823, %v1548
          %v1825 = vpop.permute.xlu0 %1824
          %1828 = vset.pattern.permute.xlu0 0
          %1829 = vperm.xlu0 %1828, %v1550
          %v1830 = vpop.permute.xlu0 %1829
          %1833 = vset.pattern.permute.xlu0 0
          %1834 = vperm.xlu0 %1833, %v1552
          %v1835 = vpop.permute.xlu0 %1834
          %1838 = vset.pattern.permute.xlu0 0
          %1839 = vperm.xlu0 %1838, %v1554
          %v1840 = vpop.permute.xlu0 %1839
          %1843 = vset.pattern.permute.xlu0 0
          %1844 = vperm.xlu0 %1843, %v1556
          %v1845 = vpop.permute.xlu0 %1844
          %1848 = vset.pattern.permute.xlu0 0
          %1849 = vperm.xlu0 %1848, %v1558
          %v1850 = vpop.permute.xlu0 %1849
          %1853 = vset.pattern.permute.xlu0 0
          %1854 = vperm.xlu0 %1853, %v1560
          %v1855 = vpop.permute.xlu0 %1854
          %1858 = vset.pattern.permute.xlu0 0
          %1859 = vperm.xlu0 %1858, %v1562
          %v1860 = vpop.permute.xlu0 %1859
          %1863 = vset.pattern.permute.xlu0 0
          %1864 = vperm.xlu0 %1863, %v1564
          %v1865 = vpop.permute.xlu0 %1864
          %1868 = vset.pattern.permute.xlu0 0
          %1869 = vperm.xlu0 %1868, %v1566
          %v1870 = vpop.permute.xlu0 %1869
          %1873 = vset.pattern.permute.xlu0 0
          %1874 = vperm.xlu0 %1873, %v1568
          %v1875 = vpop.permute.xlu0 %1874
          %1878 = vset.pattern.permute.xlu0 0
          %1879 = vperm.xlu0 %1878, %v1570
          %v1880 = vpop.permute.xlu0 %1879
          %1883 = vset.pattern.permute.xlu0 0
          %1884 = vperm.xlu0 %1883, %v1572
          %v1885 = vpop.permute.xlu0 %1884
          %1888 = vset.pattern.permute.xlu0 0
          %1889 = vperm.xlu0 %1888, %v1574
          %v1890 = vpop.permute.xlu0 %1889
          %1893 = vset.pattern.permute.xlu0 0
          %1894 = vperm.xlu0 %1893, %v1576
          %v1895 = vpop.permute.xlu0 %1894
          %v1897 = vmul.f32 %v1820, %v1801
          %v1898 = vmul.f32 %v1825, %v1802
          %v1899 = vmul.f32 %v1830, %v1803
          %v1900 = vmul.f32 %v1835, %v1804
          %v1901 = vmul.f32 %v1840, %v1805
          %v1902 = vmul.f32 %v1845, %v1806
          %v1903 = vmul.f32 %v1850, %v1807
          %v1904 = vmul.f32 %v1855, %v1808
          %v1905 = vmul.f32 %v1860, %v1809
          %v1906 = vmul.f32 %v1865, %v1810
          %v1907 = vmul.f32 %v1870, %v1811
          %v1908 = vmul.f32 %v1875, %v1812
          %v1909 = vmul.f32 %v1880, %v1813
          %v1910 = vmul.f32 %v1885, %v1814
          %v1911 = vmul.f32 %v1890, %v1815
          %v1912 = vmul.f32 %v1895, %v1816
          %v1913 = vpack.c.bf16 %v1676, %v1674
          %v1914 = vpack.c.bf16 %v1680, %v1678
          %v1915 = vpack.c.bf16 %v1684, %v1682
          %v1916 = vpack.c.bf16 %v1688, %v1686
          %v1917 = vpack.c.bf16 %v1692, %v1690
          %v1918 = vpack.c.bf16 %v1696, %v1694
          %v1919 = vpack.c.bf16 %v1700, %v1698
          %v1920 = vpack.c.bf16 %v1704, %v1702
          %v1937 = vunpack.c.l.b16 %v1352
          %v1938 = vunpack.c.l.b16 %v1353
          %v1939 = vunpack.c.l.b16 %v1354
          %v1940 = vunpack.c.l.b16 %v1355
          %v1941 = vunpack.c.l.b16 %v1356
          %v1942 = vunpack.c.l.b16 %v1357
          %v1943 = vunpack.c.l.b16 %v1358
          %v1944 = vunpack.c.l.b16 %v1359
          %v1945 = vunpack.c.l.b16 %v1360
          %v1946 = vunpack.c.l.b16 %v1361
          %v1947 = vunpack.c.l.b16 %v1362
          %v1948 = vunpack.c.l.b16 %v1363
          %v1949 = vunpack.c.l.b16 %v1364
          %v1950 = vunpack.c.l.b16 %v1365
          %v1951 = vunpack.c.l.b16 %v1366
          %v1952 = vunpack.c.l.b16 %v1367
          %v1953 = vpack.c.b16 %v1938, %v1937
          %v1954 = vpack.c.b16 %v1940, %v1939
          %v1955 = vpack.c.b16 %v1942, %v1941
          %v1956 = vpack.c.b16 %v1944, %v1943
          %v1957 = vpack.c.b16 %v1946, %v1945
          %v1958 = vpack.c.b16 %v1948, %v1947
          %v1959 = vpack.c.b16 %v1950, %v1949
          %v1960 = vpack.c.b16 %v1952, %v1951
          %1969 = vmatpush.bf16.msra.mxu0 %v1960
          %1970 = vmatpush.bf16.msra.mxu0 %v1959
          %1971 = vmatpush.bf16.msra.mxu0 %v1958
          %1972 = vmatpush.bf16.msra.mxu0 %v1957
          %1973 = vmatpush.bf16.msra.mxu0 %v1956
          %1974 = vmatpush.bf16.msra.mxu0 %v1955
          %1975 = vmatpush.bf16.msra.mxu0 %v1954
          %1976 = vmatpush.bf16.msra.mxu0 %v1953
          %1977 = vmatmul.bf16.gmra.mxu0 %v1913
          %v1978 = vpop.f32.mrf.mxu0
          %v1979 = vadd.f32 0.0, %v1978
          %v1980 = vpop.f32.mrf.mxu0
          %v1981 = vadd.f32 0.0, %v1980
          %1982 = vmatmul.bf16.gmra.mxu0 %v1914
          %v1983 = vpop.f32.mrf.mxu0
          %v1984 = vadd.f32 0.0, %v1983
          %v1985 = vpop.f32.mrf.mxu0
          %v1986 = vadd.f32 0.0, %v1985
          %1987 = vmatmul.bf16.gmra.mxu0 %v1915
          %v1988 = vpop.f32.mrf.mxu0
          %v1989 = vadd.f32 0.0, %v1988
          %v1990 = vpop.f32.mrf.mxu0
          %v1991 = vadd.f32 0.0, %v1990
          %1992 = vmatmul.bf16.gmra.mxu0 %v1916
          %v1993 = vpop.f32.mrf.mxu0
          %v1994 = vadd.f32 0.0, %v1993
          %v1995 = vpop.f32.mrf.mxu0
          %v1996 = vadd.f32 0.0, %v1995
          %1997 = vmatmul.bf16.gmra.mxu0 %v1917
          %v1998 = vpop.f32.mrf.mxu0
          %v1999 = vadd.f32 0.0, %v1998
          %v2000 = vpop.f32.mrf.mxu0
          %v2001 = vadd.f32 0.0, %v2000
          %2002 = vmatmul.bf16.gmra.mxu0 %v1918
          %v2003 = vpop.f32.mrf.mxu0
          %v2004 = vadd.f32 0.0, %v2003
          %v2005 = vpop.f32.mrf.mxu0
          %v2006 = vadd.f32 0.0, %v2005
          %2007 = vmatmul.bf16.gmra.mxu0 %v1919
          %v2008 = vpop.f32.mrf.mxu0
          %v2009 = vadd.f32 0.0, %v2008
          %v2010 = vpop.f32.mrf.mxu0
          %v2011 = vadd.f32 0.0, %v2010
          %2012 = vmatmul.bf16.gmra.mxu0 %v1920
          %v2013 = vpop.f32.mrf.mxu0
          %v2014 = vadd.f32 0.0, %v2013
          %v2015 = vpop.f32.mrf.mxu0
          %v2016 = vadd.f32 0.0, %v2015
          %2017 = vdwg.mxu0
          %v2018 = vadd.f32 %v1897, %v1979
          %v2019 = vadd.f32 %v1898, %v1981
          %v2020 = vadd.f32 %v1899, %v1984
          %v2021 = vadd.f32 %v1900, %v1986
          %v2022 = vadd.f32 %v1901, %v1989
          %v2023 = vadd.f32 %v1902, %v1991
          %v2024 = vadd.f32 %v1903, %v1994
          %v2025 = vadd.f32 %v1904, %v1996
          %v2026 = vadd.f32 %v1905, %v1999
          %v2027 = vadd.f32 %v1906, %v2001
          %v2028 = vadd.f32 %v1907, %v2004
          %v2029 = vadd.f32 %v1908, %v2006
          %v2030 = vadd.f32 %v1909, %v2009
          %v2031 = vadd.f32 %v1910, %v2011
          %v2032 = vadd.f32 %v1911, %v2014
          %v2033 = vadd.f32 %v1912, %v2016
          %2034 = vst [vmem:[#allocation10] sm:$0xff] %v2018
          %2035 = vst [vmem:[#allocation10 + $0x8] sm:$0xff] %v2019
          %2036 = vst [vmem:[#allocation10 + $0x10] sm:$0xff] %v2020
          %2037 = vst [vmem:[#allocation10 + $0x18] sm:$0xff] %v2021
          %2038 = vst [vmem:[#allocation10 + $0x20] sm:$0xff] %v2022
          %2039 = vst [vmem:[#allocation10 + $0x28] sm:$0xff] %v2023
          %2040 = vst [vmem:[#allocation10 + $0x30] sm:$0xff] %v2024
          %2041 = vst [vmem:[#allocation10 + $0x38] sm:$0xff] %v2025
          %2042 = vst [vmem:[#allocation10 + $0x40] sm:$0xff] %v2026
          %2043 = vst [vmem:[#allocation10 + $0x48] sm:$0xff] %v2027
          %2044 = vst [vmem:[#allocation10 + $0x50] sm:$0xff] %v2028
          %2045 = vst [vmem:[#allocation10 + $0x58] sm:$0xff] %v2029
          %2046 = vst [vmem:[#allocation10 + $0x60] sm:$0xff] %v2030
          %2047 = vst [vmem:[#allocation10 + $0x68] sm:$0xff] %v2031
          %2048 = vst [vmem:[#allocation10 + $0x70] sm:$0xff] %v2032
          %2049 = vst [vmem:[#allocation10 + $0x78] sm:$0xff] %v2033
          %2050 = vst.msk [vmem:[#allocation8] sm:$0xff] %vm1272, %v1513
          %2051 = vst.msk [vmem:[#allocation8 + $0x8] sm:$0xff] %vm1272, %v1514
          %2052 = vst.msk [vmem:[#allocation8 + $0x10] sm:$0xff] %vm1272, %v1515
          %2053 = vst.msk [vmem:[#allocation8 + $0x18] sm:$0xff] %vm1272, %v1516
          %2054 = vst.msk [vmem:[#allocation8 + $0x20] sm:$0xff] %vm1272, %v1517
          %2055 = vst.msk [vmem:[#allocation8 + $0x28] sm:$0xff] %vm1272, %v1518
          %2056 = vst.msk [vmem:[#allocation8 + $0x30] sm:$0xff] %vm1272, %v1519
          %2057 = vst.msk [vmem:[#allocation8 + $0x38] sm:$0xff] %vm1272, %v1520
          %2058 = vst.msk [vmem:[#allocation8 + $0x40] sm:$0xff] %vm1272, %v1521
          %2059 = vst.msk [vmem:[#allocation8 + $0x48] sm:$0xff] %vm1272, %v1522
          %2060 = vst.msk [vmem:[#allocation8 + $0x50] sm:$0xff] %vm1272, %v1523
          %2061 = vst.msk [vmem:[#allocation8 + $0x58] sm:$0xff] %vm1272, %v1524
          %2062 = vst.msk [vmem:[#allocation8 + $0x60] sm:$0xff] %vm1272, %v1525
          %2063 = vst.msk [vmem:[#allocation8 + $0x68] sm:$0xff] %vm1272, %v1526
          %2064 = vst.msk [vmem:[#allocation8 + $0x70] sm:$0xff] %vm1272, %v1527
          %2065 = vst.msk [vmem:[#allocation8 + $0x78] sm:$0xff] %vm1272, %v1528
        $region127: #{tpu_custom_call.1} parent=47 // loop_footer
          %s1326 = sadd.s32 1, %s1322
        $region128: #{tpu_custom_call.1} parent=47 // loop_footer_branch
          %1321 = sbr.rel target = $region124
        $region129: #{tpu_custom_call.1} parent=47 // loop_exit
          _
        %v2066 = vld [vmem:[#allocation10] sm:$0xff]
        %v2067 = vld [vmem:[#allocation10 + $0x8] sm:$0xff]
        %v2068 = vld [vmem:[#allocation10 + $0x10] sm:$0xff]
        %v2069 = vld [vmem:[#allocation10 + $0x18] sm:$0xff]
        %v2070 = vld [vmem:[#allocation10 + $0x20] sm:$0xff]
        %v2071 = vld [vmem:[#allocation10 + $0x28] sm:$0xff]
        %v2072 = vld [vmem:[#allocation10 + $0x30] sm:$0xff]
        %v2073 = vld [vmem:[#allocation10 + $0x38] sm:$0xff]
        %v2074 = vld [vmem:[#allocation10 + $0x40] sm:$0xff]
        %v2075 = vld [vmem:[#allocation10 + $0x48] sm:$0xff]
        %v2076 = vld [vmem:[#allocation10 + $0x50] sm:$0xff]
        %v2077 = vld [vmem:[#allocation10 + $0x58] sm:$0xff]
        %v2078 = vld [vmem:[#allocation10 + $0x60] sm:$0xff]
        %v2079 = vld [vmem:[#allocation10 + $0x68] sm:$0xff]
        %v2080 = vld [vmem:[#allocation10 + $0x70] sm:$0xff]
        %v2081 = vld [vmem:[#allocation10 + $0x78] sm:$0xff]
        %v2082 = vld [vmem:[#allocation9] sm:$0xff]
        %v2083 = vld [vmem:[#allocation9 + $0x8] sm:$0xff]
        %v2084 = vld [vmem:[#allocation9 + $0x10] sm:$0xff]
        %v2085 = vld [vmem:[#allocation9 + $0x18] sm:$0xff]
        %v2086 = vld [vmem:[#allocation9 + $0x20] sm:$0xff]
        %v2087 = vld [vmem:[#allocation9 + $0x28] sm:$0xff]
        %v2088 = vld [vmem:[#allocation9 + $0x30] sm:$0xff]
        %v2089 = vld [vmem:[#allocation9 + $0x38] sm:$0xff]
        %v2090 = vld [vmem:[#allocation9 + $0x40] sm:$0xff]
        %v2091 = vld [vmem:[#allocation9 + $0x48] sm:$0xff]
        %v2092 = vld [vmem:[#allocation9 + $0x50] sm:$0xff]
        %v2093 = vld [vmem:[#allocation9 + $0x58] sm:$0xff]
        %v2094 = vld [vmem:[#allocation9 + $0x60] sm:$0xff]
        %v2095 = vld [vmem:[#allocation9 + $0x68] sm:$0xff]
        %v2096 = vld [vmem:[#allocation9 + $0x70] sm:$0xff]
        %v2097 = vld [vmem:[#allocation9 + $0x78] sm:$0xff]
        %v2098 = vrcp.pop %v2082
        %v2099 = vrcp.pop %v2083
        %v2100 = vrcp.pop %v2084
        %v2101 = vrcp.pop %v2085
        %v2102 = vrcp.pop %v2086
        %v2103 = vrcp.pop %v2087
        %v2104 = vrcp.pop %v2088
        %v2105 = vrcp.pop %v2089
        %v2106 = vrcp.pop %v2090
        %v2107 = vrcp.pop %v2091
        %v2108 = vrcp.pop %v2092
        %v2109 = vrcp.pop %v2093
        %v2110 = vrcp.pop %v2094
        %v2111 = vrcp.pop %v2095
        %v2112 = vrcp.pop %v2096
        %v2113 = vrcp.pop %v2097
        %2115 = vset.pattern.permute.xlu0 0
        %2116 = vperm.xlu0 %2115, %v2098
        %v2117 = vpop.permute.xlu0 %2116
        %2120 = vset.pattern.permute.xlu0 0
        %2121 = vperm.xlu0 %2120, %v2099
        %v2122 = vpop.permute.xlu0 %2121
        %2125 = vset.pattern.permute.xlu0 0
        %2126 = vperm.xlu0 %2125, %v2100
        %v2127 = vpop.permute.xlu0 %2126
        %2130 = vset.pattern.permute.xlu0 0
        %2131 = vperm.xlu0 %2130, %v2101
        %v2132 = vpop.permute.xlu0 %2131
        %2135 = vset.pattern.permute.xlu0 0
        %2136 = vperm.xlu0 %2135, %v2102
        %v2137 = vpop.permute.xlu0 %2136
        %2140 = vset.pattern.permute.xlu0 0
        %2141 = vperm.xlu0 %2140, %v2103
        %v2142 = vpop.permute.xlu0 %2141
        %2145 = vset.pattern.permute.xlu0 0
        %2146 = vperm.xlu0 %2145, %v2104
        %v2147 = vpop.permute.xlu0 %2146
        %2150 = vset.pattern.permute.xlu0 0
        %2151 = vperm.xlu0 %2150, %v2105
        %v2152 = vpop.permute.xlu0 %2151
        %2155 = vset.pattern.permute.xlu0 0
        %2156 = vperm.xlu0 %2155, %v2106
        %v2157 = vpop.permute.xlu0 %2156
        %2160 = vset.pattern.permute.xlu0 0
        %2161 = vperm.xlu0 %2160, %v2107
        %v2162 = vpop.permute.xlu0 %2161
        %2165 = vset.pattern.permute.xlu0 0
        %2166 = vperm.xlu0 %2165, %v2108
        %v2167 = vpop.permute.xlu0 %2166
        %2170 = vset.pattern.permute.xlu0 0
        %2171 = vperm.xlu0 %2170, %v2109
        %v2172 = vpop.permute.xlu0 %2171
        %2175 = vset.pattern.permute.xlu0 0
        %2176 = vperm.xlu0 %2175, %v2110
        %v2177 = vpop.permute.xlu0 %2176
        %2180 = vset.pattern.permute.xlu0 0
        %2181 = vperm.xlu0 %2180, %v2111
        %v2182 = vpop.permute.xlu0 %2181
        %2185 = vset.pattern.permute.xlu0 0
        %2186 = vperm.xlu0 %2185, %v2112
        %v2187 = vpop.permute.xlu0 %2186
        %2190 = vset.pattern.permute.xlu0 0
        %2191 = vperm.xlu0 %2190, %v2113
        %v2192 = vpop.permute.xlu0 %2191
        %v2194 = vmul.f32 %v2066, %v2117
        %v2195 = vmul.f32 %v2067, %v2122
        %v2196 = vmul.f32 %v2068, %v2127
        %v2197 = vmul.f32 %v2069, %v2132
        %v2198 = vmul.f32 %v2070, %v2137
        %v2199 = vmul.f32 %v2071, %v2142
        %v2200 = vmul.f32 %v2072, %v2147
        %v2201 = vmul.f32 %v2073, %v2152
        %v2202 = vmul.f32 %v2074, %v2157
        %v2203 = vmul.f32 %v2075, %v2162
        %v2204 = vmul.f32 %v2076, %v2167
        %v2205 = vmul.f32 %v2077, %v2172
        %v2206 = vmul.f32 %v2078, %v2177
        %v2207 = vmul.f32 %v2079, %v2182
        %v2208 = vmul.f32 %v2080, %v2187
        %v2209 = vmul.f32 %v2081, %v2192
        %v2210 = vld [vmem:[#allocation14 + $0x5] sm:$0x1]
        %v2211 = vpack.c.bf16 %v2195, %v2194
        %v2212 = vpack.c.bf16 %v2197, %v2196
        %v2213 = vpack.c.bf16 %v2199, %v2198
        %v2214 = vpack.c.bf16 %v2201, %v2200
        %v2215 = vpack.c.bf16 %v2203, %v2202
        %v2216 = vpack.c.bf16 %v2205, %v2204
        %v2217 = vpack.c.bf16 %v2207, %v2206
        %v2218 = vpack.c.bf16 %v2209, %v2208
        %v2219 = vld [vmem:[#allocation22] sm:$0xf]
        %v2220 = vld [vmem:[#allocation22 + $0x4] sm:$0xf]
        %v2221 = vld [vmem:[#allocation22 + $0x8] sm:$0xf]
        %v2222 = vld [vmem:[#allocation22 + $0xc] sm:$0xf]
        %v2223 = vld [vmem:[#allocation22 + $0x10] sm:$0xf]
        %v2224 = vld [vmem:[#allocation22 + $0x14] sm:$0xf]
        %v2225 = vld [vmem:[#allocation22 + $0x18] sm:$0xf]
        %v2226 = vld [vmem:[#allocation22 + $0x1c] sm:$0xf]
        %v2227 = vld [vmem:[#allocation22 + $0x20] sm:$0xf]
        %v2228 = vld [vmem:[#allocation22 + $0x24] sm:$0xf]
        %v2229 = vld [vmem:[#allocation22 + $0x28] sm:$0xf]
        %v2230 = vld [vmem:[#allocation22 + $0x2c] sm:$0xf]
        %v2231 = vld [vmem:[#allocation22 + $0x30] sm:$0xf]
        %v2232 = vld [vmem:[#allocation22 + $0x34] sm:$0xf]
        %v2233 = vld [vmem:[#allocation22 + $0x38] sm:$0xf]
        %v2234 = vld [vmem:[#allocation22 + $0x3c] sm:$0xf]
        %v2235 = vperm.slane %v2210, 0
        %v2252 = vunpack.c.l.b16 %v2219
        %v2253 = vunpack.c.l.b16 %v2220
        %v2254 = vunpack.c.l.b16 %v2221
        %v2255 = vunpack.c.l.b16 %v2222
        %v2256 = vunpack.c.l.b16 %v2223
        %v2257 = vunpack.c.l.b16 %v2224
        %v2258 = vunpack.c.l.b16 %v2225
        %v2259 = vunpack.c.l.b16 %v2226
        %v2260 = vunpack.c.l.b16 %v2227
        %v2261 = vunpack.c.l.b16 %v2228
        %v2262 = vunpack.c.l.b16 %v2229
        %v2263 = vunpack.c.l.b16 %v2230
        %v2264 = vunpack.c.l.b16 %v2231
        %v2265 = vunpack.c.l.b16 %v2232
        %v2266 = vunpack.c.l.b16 %v2233
        %v2267 = vunpack.c.l.b16 %v2234
        %v2268 = vpack.c.b16 %v2253, %v2252
        %v2269 = vpack.c.b16 %v2255, %v2254
        %v2270 = vpack.c.b16 %v2257, %v2256
        %v2271 = vpack.c.b16 %v2259, %v2258
        %v2272 = vpack.c.b16 %v2261, %v2260
        %v2273 = vpack.c.b16 %v2263, %v2262
        %v2274 = vpack.c.b16 %v2265, %v2264
        %v2275 = vpack.c.b16 %v2267, %v2266
        %2284 = vmatpush.bf16.msra.mxu0 %v2275
        %2285 = vmatpush.bf16.msra.mxu0 %v2274
        %2286 = vmatpush.bf16.msra.mxu0 %v2273
        %2287 = vmatpush.bf16.msra.mxu0 %v2272
        %2288 = vmatpush.bf16.msra.mxu0 %v2271
        %2289 = vmatpush.bf16.msra.mxu0 %v2270
        %2290 = vmatpush.bf16.msra.mxu0 %v2269
        %2291 = vmatpush.bf16.msra.mxu0 %v2268
        %2292 = vmatmul.bf16.gmra.mxu0 %v2211
        %v2293 = vpop.f32.mrf.mxu0
        %v2294 = vadd.f32 %v2235, %v2293
        %v2295 = vpop.f32.mrf.mxu0
        %v2296 = vadd.f32 %v2235, %v2295
        %2297 = vmatmul.bf16.gmra.mxu0 %v2212
        %v2298 = vpop.f32.mrf.mxu0
        %v2299 = vadd.f32 %v2235, %v2298
        %v2300 = vpop.f32.mrf.mxu0
        %v2301 = vadd.f32 %v2235, %v2300
        %2302 = vmatmul.bf16.gmra.mxu0 %v2213
        %v2303 = vpop.f32.mrf.mxu0
        %v2304 = vadd.f32 %v2235, %v2303
        %v2305 = vpop.f32.mrf.mxu0
        %v2306 = vadd.f32 %v2235, %v2305
        %2307 = vmatmul.bf16.gmra.mxu0 %v2214
        %v2308 = vpop.f32.mrf.mxu0
        %v2309 = vadd.f32 %v2235, %v2308
        %v2310 = vpop.f32.mrf.mxu0
        %v2311 = vadd.f32 %v2235, %v2310
        %2312 = vmatmul.bf16.gmra.mxu0 %v2215
        %v2313 = vpop.f32.mrf.mxu0
        %v2314 = vadd.f32 %v2235, %v2313
        %v2315 = vpop.f32.mrf.mxu0
        %v2316 = vadd.f32 %v2235, %v2315
        %2317 = vmatmul.bf16.gmra.mxu0 %v2216
        %v2318 = vpop.f32.mrf.mxu0
        %v2319 = vadd.f32 %v2235, %v2318
        %v2320 = vpop.f32.mrf.mxu0
        %v2321 = vadd.f32 %v2235, %v2320
        %2322 = vmatmul.bf16.gmra.mxu0 %v2217
        %v2323 = vpop.f32.mrf.mxu0
        %v2324 = vadd.f32 %v2235, %v2323
        %v2325 = vpop.f32.mrf.mxu0
        %v2326 = vadd.f32 %v2235, %v2325
        %2327 = vmatmul.bf16.gmra.mxu0 %v2218
        %v2328 = vpop.f32.mrf.mxu0
        %v2329 = vadd.f32 %v2235, %v2328
        %v2330 = vpop.f32.mrf.mxu0
        %v2331 = vadd.f32 %v2235, %v2330
        %2332 = vdwg.mxu0
        %v2333 = vld [vmem:[%s353] sm:$0xff]
        %v2334 = vld [vmem:[%s353 + $0x8] sm:$0xff]
        %v2335 = vld [vmem:[%s353 + $0x10] sm:$0xff]
        %v2336 = vld [vmem:[%s353 + $0x18] sm:$0xff]
        %v2337 = vld [vmem:[%s353 + $0x20] sm:$0xff]
        %v2338 = vld [vmem:[%s353 + $0x28] sm:$0xff]
        %v2339 = vld [vmem:[%s353 + $0x30] sm:$0xff]
        %v2340 = vld [vmem:[%s353 + $0x38] sm:$0xff]
        %v2341 = vld [vmem:[%s353 + $0x40] sm:$0xff]
        %v2342 = vld [vmem:[%s353 + $0x48] sm:$0xff]
        %v2343 = vld [vmem:[%s353 + $0x50] sm:$0xff]
        %v2344 = vld [vmem:[%s353 + $0x58] sm:$0xff]
        %v2345 = vld [vmem:[%s353 + $0x60] sm:$0xff]
        %v2346 = vld [vmem:[%s353 + $0x68] sm:$0xff]
        %v2347 = vld [vmem:[%s353 + $0x70] sm:$0xff]
        %v2348 = vld [vmem:[%s353 + $0x78] sm:$0xff]
        %v2349 = vadd.f32 %v2333, %v2294
        %v2350 = vadd.f32 %v2334, %v2296
        %v2351 = vadd.f32 %v2335, %v2299
        %v2352 = vadd.f32 %v2336, %v2301
        %v2353 = vadd.f32 %v2337, %v2304
        %v2354 = vadd.f32 %v2338, %v2306
        %v2355 = vadd.f32 %v2339, %v2309
        %v2356 = vadd.f32 %v2340, %v2311
        %v2357 = vadd.f32 %v2341, %v2314
        %v2358 = vadd.f32 %v2342, %v2316
        %v2359 = vadd.f32 %v2343, %v2319
        %v2360 = vadd.f32 %v2344, %v2321
        %v2361 = vadd.f32 %v2345, %v2324
        %v2362 = vadd.f32 %v2346, %v2326
        %v2363 = vadd.f32 %v2347, %v2329
        %v2364 = vadd.f32 %v2348, %v2331
        %2365 = vst [vmem:[%s414] sm:$0xff] %v2349
        %2366 = vst [vmem:[%s414 + $0x8] sm:$0xff] %v2350
        %2367 = vst [vmem:[%s414 + $0x10] sm:$0xff] %v2351
        %2368 = vst [vmem:[%s414 + $0x18] sm:$0xff] %v2352
        %2369 = vst [vmem:[%s414 + $0x20] sm:$0xff] %v2353
        %2370 = vst [vmem:[%s414 + $0x28] sm:$0xff] %v2354
        %2371 = vst [vmem:[%s414 + $0x30] sm:$0xff] %v2355
        %2372 = vst [vmem:[%s414 + $0x38] sm:$0xff] %v2356
        %2373 = vst [vmem:[%s414 + $0x40] sm:$0xff] %v2357
        %2374 = vst [vmem:[%s414 + $0x48] sm:$0xff] %v2358
        %2375 = vst [vmem:[%s414 + $0x50] sm:$0xff] %v2359
        %2376 = vst [vmem:[%s414 + $0x58] sm:$0xff] %v2360
        %2377 = vst [vmem:[%s414 + $0x60] sm:$0xff] %v2361
        %2378 = vst [vmem:[%s414 + $0x68] sm:$0xff] %v2362
        %2379 = vst [vmem:[%s414 + $0x70] sm:$0xff] %v2363
        %2380 = vst [vmem:[%s414 + $0x78] sm:$0xff] %v2364
        %s2381 = sand.u32 %s204, 1
        %s2382 = scalar_lea.sflag [#allocation13], %s2381
        %s2383 = sand.u32 %s204, 1
        %s2384 = smul.addr %s2383, 128
        %s2385 = scalar_lea.vmem [#allocation23], %s2384
        // Predicated region
        $region130: #{tpu_custom_call.1} parent=47 // pred_check
          %p2386 = pneg %p214
        $region131: #{tpu_custom_call.1} parent=47 // pred_check_branch
          %2388 = sbr.rel (%p2386) target = $region133
        $region132: #{tpu_custom_call.1} parent=47 // pred_region
          %s2389 = smul.u32 16, %s33
          %2391 = vsyncadd %s2382, 0
          %s2392 = smul.addr %s32, 32
          %s2393 = sadd.s32 %s2389, %s2392
          %s2394 = smul.addr %s2393, 8
          %s2395 = scalar_lea.hbm %s8, %s2394
          %s2396 = sshll.u32 %s2385, 4
          %s2397 = int_to_ptr.vmem [resolvable:$true] %s2396
          %s2398 = sshll.u32 %s2395, 4
          %s2399 = int_to_ptr.hbm [resolvable:$true] %s2398
          %2404 = dma.vmem_to_hbm [thread:$0]  %s2397, 2048, %s2399, %s2382, 128, 128, 8
        $region133: #{tpu_custom_call.1} parent=47 // pred_fallthru
          _
      $region48: #{tpu_custom_call.1} parent=5 // pred_fallthru
        _
      %p2405 = scmp.le.s32.totalorder 2, %s23
      // Predicated region
      $region134: #{tpu_custom_call.1} parent=5 // pred_check
        %p2406 = pneg %p2405
      $region135: #{tpu_custom_call.1} parent=5 // pred_check_branch
        %2408 = sbr.rel (%p2406) target = $region137
      $region136: #{tpu_custom_call.1} parent=5 // pred_region
        %s2409 = ssub.s32 %s23, 2
        // Predicated region
        $region138: #{tpu_custom_call.1} parent=136 // pred_check
          %p2410 = pneg %p220
        $region139: #{tpu_custom_call.1} parent=136 // pred_check_branch
          %2412 = sbr.rel (%p2410) target = $region141
        $region140: #{tpu_custom_call.1} parent=136 // pred_region
          %s2413 = sand.u32 %s205, 1
          %s2414 = scalar_lea.sflag [#allocation13], %s2413
          %s2415 = sand.u32 %s205, 1
          %s2416 = smul.addr %s2415, 128
          %s2417 = scalar_lea.vmem [#allocation23], %s2416
          %2419 = dma.done %s2414, 2048
        $region141: #{tpu_custom_call.1} parent=136 // pred_fallthru
          _
      $region137: #{tpu_custom_call.1} parent=5 // pred_fallthru
        _
    $region6: #{tpu_custom_call.1} parent=1 // loop_footer
      %s27 = sadd.s32 1, %s23
    $region7: #{tpu_custom_call.1} parent=1 // loop_footer_branch
      %22 = sbr.rel target = $region3
    $region8: #{tpu_custom_call.1} parent=1 // loop_exit
      _
    %2420 = vsyncpa [#allocation12], 1
    %s2421 = scalar_lea.sflag [#allocation12], 1
    %2422 = vsyncpa %s2421, 1
    %2423 = vsyncpa [#allocation15], 1
    %2424 = vsyncpa [#allocation18], 1
    %2425 = vsyncpa [#allocation21], 1
    %2426 = vsyncpa [#allocation13], 1
    %s2427 = scalar_lea.sflag [#allocation13], 1
    %2428 = vsyncpa %s2427, 1
  %2429 = vsyncmov [#allocation7]
  %s2430 = vpop.sfrf %2429
  %p2431 = scmp.eq.s32.totalorder %s2430, 0
  %p2432 = pneg %p2431
  %2434 = shalt.err (%p2432)
  %s2435 = scalar_lea.sflag [#allocation7], 1
  %2436 = vsyncmov %s2435
  %s2437 = vpop.sfrf %2436
  %p2438 = scmp.eq.s32.totalorder %s2437, 0
  %p2439 = pneg %p2438
  %2441 = shalt.err (%p2439)

</llo_original>
